<compile_context>
chip_gen: v7x
topology: tpu7x:2x2x1
jax: 0.10.0
libtpu: 0.0.40
codegen_flags: <defaults>
</compile_context>

<pallas_src>
import math
from functools import partial, lru_cache

import jax
import jax.numpy as jnp
from jax.experimental import pallas as pl
from jax.experimental.pallas import tpu as pltpu


# --------------------------- per-generation budgets -------------------------

@lru_cache(maxsize=1)
def _budgets():
    kind = jax.devices()[0].device_kind.lower()
    if "7" in kind:      # v7x: 64 MiB VMEM / TC -> stay well under ~48 MiB
        return dict(vmem=48 * 1024 * 1024, tm=256, tn=512, tk=512)
    # v5e / v6e: 128 MiB VMEM -> larger tiles, raise scoped limit past 32 MiB
    return dict(vmem=64 * 1024 * 1024, tm=512, tn=512, tk=512)


def _k_tile(K, target):
    """Largest multiple of 128 <= target that exactly divides K, else K.

    K must divide exactly (padding garbage must not enter the accumulator);
    M/N tiles may be partial (out-of-bounds output is masked on writeback).
    """
    if K <= target:
        return K
    t = (target // 128) * 128
    while t >= 128:
        if K % t == 0:
            return t
        t -= 128
    return K


# ----------------------- Kernel 1: tiled matmul (backbones) -----------------

def _matmul_kernel(x_ref, w_ref, o_ref, acc_ref):
    @pl.when(pl.program_id(2) == 0)
    def _():
        acc_ref[...] = jnp.zeros_like(acc_ref)

    acc_ref[...] += jnp.dot(x_ref[...], w_ref[...],
                            preferred_element_type=jnp.float32)

    @pl.when(pl.program_id(2) == pl.num_programs(2) - 1)
    def _():
        o_ref[...] = acc_ref[...].astype(o_ref.dtype)


def matmul_tiled(x, w, *, out_dtype=jnp.bfloat16):
    """y = x @ w with (M, N, K) tiling, bf16 operands / f32 accumulate / bf16
    out.  Scales to real CLIP / Timesformer shapes without blowing VMEM."""
    M, K = x.shape
    K2, N = w.shape
    assert K == K2
    bud = _budgets()
    tm = M if M <= bud["tm"] else bud["tm"]          # partial M blocks OK
    tn = N if N <= bud["tn"] else bud["tn"]          # partial N blocks OK
    tk = _k_tile(K, bud["tk"])                       # must divide K
    grid = (pl.cdiv(M, tm), pl.cdiv(N, tn), K // tk)
    return pl.pallas_call(
        _matmul_kernel,
        out_shape=jax.ShapeDtypeStruct((M, N), out_dtype),
        grid=grid,
        in_specs=[
            pl.BlockSpec((tm, tk), lambda i, j, k: (i, k)),
            pl.BlockSpec((tk, tn), lambda i, j, k: (k, j)),
        ],
        out_specs=pl.BlockSpec((tm, tn), lambda i, j, k: (i, j)),
        scratch_shapes=[pltpu.VMEM((tm, tn), jnp.float32)],
        compiler_params=pltpu.CompilerParams(
            dimension_semantics=("parallel", "parallel", "arbitrary"),
            vmem_limit_bytes=bud["vmem"]),
    )(x, w)


# ----------------- Kernel 2: adaptive average pool to 16 tokens -------------

def _pool_kernel(pool_ref, x_ref, o_ref):
    # F.adaptive_avg_pool1d(x.transpose(1,2), 16).transpose(1,2) as one matmul
    o_ref[0] = jnp.dot(pool_ref[...], x_ref[0],
                       preferred_element_type=jnp.float32).astype(o_ref.dtype)


def adaptive_pool16(x):
    """x: (b, n_tok, hidden) bf16 -> (b, 16, hidden) bf16 per-frame mean."""
    b, n_tok, hidden = x.shape
    assert n_tok % 16 == 0, "adaptive pool weights assume token count % 16 == 0"
    g = n_tok // 16
    pool_mat = (jnp.repeat(jnp.eye(16, dtype=jnp.float32), g, axis=1)
                / g).astype(jnp.bfloat16)
    bud = _budgets()
    return pl.pallas_call(
        _pool_kernel,
        out_shape=jax.ShapeDtypeStruct((b, 16, hidden), jnp.bfloat16),
        grid=(b,),
        in_specs=[pl.BlockSpec((16, n_tok), lambda i: (0, 0)),
                  pl.BlockSpec((1, n_tok, hidden), lambda i: (i, 0, 0))],
        out_specs=pl.BlockSpec((1, 16, hidden), lambda i: (i, 0, 0)),
        compiler_params=pltpu.CompilerParams(
            dimension_semantics=("parallel",),
            vmem_limit_bytes=bud["vmem"]),
    )(pool_mat, x)


# --------------- Kernel 3: fused post-backbone head (batch-blocked) ---------

def _msq_head_kernel(
        pooled_ref, frame_ref, summ_ref,            # per-batch activations
        pe_ref, cls_ref,                            # constants
        w1a_ref, w1b_ref, w2a_ref, w2b_ref,         # linear1 / linear2 halves
        wq_ref, bq_ref, wkv_ref, bkv_ref,           # attn in-proj (pre-T, k|v merged)
        wo_ref, bo_ref,                             # attn out-proj (pre-T)
        gwwt_ref, wfust_ref, cbias_ref,             # fused linear_fusion+GroupWiseLinear
        out_ref, *, num_heads):
    f32, bf16 = jnp.float32, jnp.bfloat16
    bp, n_tok, hidden = pooled_ref.shape
    E = pe_ref.shape[1]
    nc = cls_ref.shape[0]
    dh = E // num_heads
    scale = 1.0 / math.sqrt(dh)

    pooled = pooled_ref[...].reshape(bp * n_tok, hidden)          # bf16

    # linear1(cat(pooled, summary)) == pooled @ W1a + summary @ W1b (no bias)
    xa = jnp.dot(pooled, w1a_ref[...], preferred_element_type=f32)
    sb = jnp.dot(summ_ref[...], w1b_ref[...], preferred_element_type=f32)
    x = xa.reshape(bp, n_tok, E) + sb[:, None, :] + pe_ref[...][None]   # + PE

    # mean CLIP frame feature over time: cheap cross-sublane reduce (no MXU)
    vmean = jnp.mean(frame_ref[...].astype(f32), axis=1)               # (bp, hidden)

    # linear2(cat(class_embed, video_feature)) == cls @ W2a + vmean @ W2b
    qe_cls = jnp.dot(cls_ref[...], w2a_ref[...], preferred_element_type=f32)
    qe_vid = jnp.dot(vmean.astype(bf16), w2b_ref[...], preferred_element_type=f32)
    qe = qe_cls[None, :, :] + qe_vid[:, None, :]                       # (bp, nc, E)

    # cross attention: query = x, key = value = query_embed
    q = (jnp.dot(x.reshape(bp * n_tok, E).astype(bf16), wq_ref[...],
                 preferred_element_type=f32)
         + bq_ref[...]).reshape(bp, n_tok, E)
    kv = (jnp.dot(qe.reshape(bp * nc, E).astype(bf16), wkv_ref[...],
                  preferred_element_type=f32)
          + bkv_ref[...]).reshape(bp, nc, 2 * E)
    k = kv[..., :E]
    v = kv[..., E:]

    # per-head attention, heads concatenated -> single out-projection matmul.
    # TODO(synk): dh is not lane-tile aligned for dh < 128; a padded head-major
    # layout would remove the per-head lane shuffles at real sizes.
    heads = []
    for h in range(num_heads):
        lo, hi = h * dh, (h + 1) * dh
        qh = q[..., lo:hi].astype(bf16)
        kh = k[..., lo:hi].astype(bf16)
        vh = v[..., lo:hi].astype(bf16)
        s = jnp.einsum('bqd,bkd->bqk', qh, kh,
                       preferred_element_type=f32) * scale              # (bp,16,nc)
        m = jnp.max(s, axis=-1, keepdims=True)
        p = jnp.exp(s - m)
        p = p * pl.reciprocal(jnp.sum(p, axis=-1, keepdims=True), approx=True)
        heads.append(jnp.einsum('bqk,bkd->bqd', p.astype(bf16), vh,
                                preferred_element_type=f32))
    o_cat = jnp.concatenate(heads, axis=-1)                             # (bp,16,E)

    attn = (jnp.dot(o_cat.reshape(bp * n_tok, E).astype(bf16), wo_ref[...],
                    preferred_element_type=f32) + bo_ref[...])          # (bp*16, E)

    # linear_fusion + GroupWiseLinear fused:
    #   out[b,n] = sum_t Wfus[n,t] * (attn[b,t,:] @ gwW[n,:]) + combined bias
    g = jnp.dot(attn.astype(bf16), gwwt_ref[...],
                preferred_element_type=f32).reshape(bp, n_tok, nc)      # (bp,16,nc)
    out_ref[...] = jnp.sum(wfust_ref[...][None] * g, axis=1) + cbias_ref[...]


def fused_head(pooled, frame_feat, summaries, consts, num_heads):
    b = pooled.shape[0]
    nc = consts[1].shape[0]
    bp = b if b <= 8 else 8            # batch block (amortizes grid overhead)
    bud = _budgets()

    def bspec(shape):
        nd = len(shape)
        return pl.BlockSpec((bp,) + tuple(shape[1:]),
                            lambda i, nd=nd: (i,) + (0,) * (nd - 1))

    def cspec(arr):
        nd = arr.ndim
        return pl.BlockSpec(arr.shape, lambda i, nd=nd: (0,) * nd)

    return pl.pallas_call(
        partial(_msq_head_kernel, num_heads=num_heads),
        out_shape=jax.ShapeDtypeStruct((b, nc), jnp.float32),
        grid=(pl.cdiv(b, bp),),
        in_specs=[bspec(pooled.shape), bspec(frame_feat.shape),
                  bspec(summaries.shape)]
                 + [cspec(a) for a in consts],
        out_specs=pl.BlockSpec((bp, nc), lambda i: (i, 0)),
        compiler_params=pltpu.CompilerParams(
            dimension_semantics=("parallel",),
            vmem_limit_bytes=bud["vmem"]),
    )(pooled, frame_feat, summaries, *consts)


# ------------------------------- parameters ---------------------------------

def init_params(key, *, num_classes, embed_dim, hidden, patch_dim, frame_dim):
    keys = jax.random.split(key, 12)

    def uni(k, shape, bound):
        return jax.random.uniform(k, shape, jnp.float32, -bound, bound)

    E = embed_dim
    cin = hidden + E
    p = {}
    ce = jax.random.normal(keys[0], (num_classes, E), jnp.float32) * 0.02
    p["class_embed"] = ce
    p["class_embed_bf16"] = ce.astype(jnp.bfloat16)

    # TODO(synk): stand-in Timesformer / CLIP embedding matrices (bf16 for MXU).
    p["backbone_w"] = uni(keys[1], (patch_dim, hidden),
                          1 / math.sqrt(patch_dim)).astype(jnp.bfloat16)
    p["image_w"] = uni(keys[2], (frame_dim, hidden),
                       1 / math.sqrt(frame_dim)).astype(jnp.bfloat16)

    # linear1 / linear2 (bias=False), stored (in,out), pre-split into halves.
    l1 = uni(keys[3], (cin, E), 1 / math.sqrt(cin))
    l2 = uni(keys[4], (cin, E), 1 / math.sqrt(cin))
    p["w1a"] = l1[:hidden].astype(jnp.bfloat16)      # pooled-backbone half
    p["w1b"] = l1[hidden:].astype(jnp.bfloat16)      # summary half
    p["w2a"] = l2[:E].astype(jnp.bfloat16)           # class-embed half
    p["w2b"] = l2[E:].astype(jnp.bfloat16)           # video-feature half

    # nn.MultiheadAttention(embed_dim, 8): pre-transposed, K/V merged once.
    in_w = uni(keys[5], (3 * E, E), 1 / math.sqrt(E))
    in_b = jnp.zeros((3 * E,), jnp.float32)
    out_w = uni(keys[6], (E, E), 1 / math.sqrt(E))
    p["wq_t"] = in_w[:E].T.astype(jnp.bfloat16)                           # (E, E)
    p["wkv_t"] = jnp.concatenate([in_w[E:2 * E].T, in_w[2 * E:].T],
                                 axis=1).astype(jnp.bfloat16)             # (E, 2E)
    p["bq"] = in_b[:E].reshape(1, E)
    p["bkv"] = in_b[E:].reshape(1, 2 * E)
    p["wo_t"] = out_w.T.astype(jnp.bfloat16)
    p["bo"] = jnp.zeros((1, E), jnp.float32)

    # linear_fusion (torch weight (nc, 16)) + GroupWiseLinear, fused at init:
    #   out[b,n] = sum_e gwW[n,e] * (sum_t wfus[n,t] attn[b,t,e] + bfus[n]) + gwb[n]
    #            = sum_t wfus[n,t] * (attn[b,t,:] @ gwW[n,:]) + bfus[n]*sum_e gwW[n,e] + gwb[n]
    wfus = uni(keys[7], (num_classes, 16), 1 / math.sqrt(16))
    bfus = uni(keys[8], (num_classes,), 1 / math.sqrt(16))
    stdv = 1.0 / math.sqrt(E)
    gw_W = uni(keys[9], (1, num_classes, E), stdv)
    gw_b = uni(keys[10], (1, num_classes), stdv)
    p["gwwt"] = gw_W[0].T.astype(jnp.bfloat16)                            # (E, nc)
    p["wfus_t"] = wfus.T                                                  # (16, nc)
    p["cbias"] = (bfus * jnp.sum(gw_W[0], axis=-1)
                  + gw_b[0]).reshape(1, num_classes)                      # (1, nc)

    # Positional encoding rows 0..15, precomputed once.
    pos = jnp.arange(16, dtype=jnp.float32)[:, None]
    div = jnp.exp(jnp.arange(0, E, 2, dtype=jnp.float32)
                  * (-math.log(10000.0) / E))
    pe = jnp.zeros((16, E), jnp.float32)
    pe = pe.at[:, 0::2].set(jnp.sin(pos * div))
    pe = pe.at[:, 1::2].set(jnp.cos(pos * div))
    p["pe16"] = pe
    return p


# --------------------------------- forward ----------------------------------

@partial(jax.jit, static_argnames=("patch", "num_heads"))
def msqnet_forward(params, images, summaries, *, patch=8, num_heads=8):
    b, t, c, h, w = images.shape
    assert t == 16                       # module hardcodes 16 tokens
    nc, E = params["class_embed"].shape
    hidden = params["backbone_w"].shape[1]

    # --- stand-in video backbone (Timesformer): per-frame patch embedding ---
    ph, pw = h // patch, w // patch
    patches = images.reshape(b, t, c, ph, patch, pw, patch)
    patches = patches.transpose(0, 1, 3, 5, 2, 4, 6).reshape(
        b * t * ph * pw, c * patch * patch).astype(jnp.bfloat16)
    patch_feat = matmul_tiled(patches, params["backbone_w"]).reshape(
        b, t * ph * pw, hidden)                                   # bf16

    # --- stand-in image model (CLIP): per-frame embedding ---
    frames = images.reshape(b * t, c * h * w).astype(jnp.bfloat16)
    frame_feat = matmul_tiled(frames, params["image_w"]).reshape(b, t, hidden)

    # --- adaptive_avg_pool1d -> (b, 16, hidden) before the head (own kernel) ---
    pooled = adaptive_pool16(patch_feat)

    consts = (params["pe16"], params["class_embed_bf16"],
              params["w1a"], params["w1b"], params["w2a"], params["w2b"],
              params["wq_t"], params["bq"], params["wkv_t"], params["bkv"],
              params["wo_t"], params["bo"],
              params["gwwt"], params["wfus_t"], params["cbias"])

    return fused_head(pooled, frame_feat, summaries.astype(jnp.bfloat16),
                      consts, num_heads)                          # (b, nc)


# ----------------------------------- main ------------------------------------

if __name__ == "__main__":
    b, t, c, h, w = 2, 16, 3, 16, 16        # t must be 16
    embed_dim, hidden, num_classes = 32, 64, 10
    patch = 8

    key = jax.random.PRNGKey(0)
    k_img, k_sum, k_par = jax.random.split(key, 3)
    images = jax.random.normal(k_img, (b, t, c, h, w), jnp.float32)
    summaries = jax.random.normal(k_sum, (b, embed_dim), jnp.float32)

    params = init_params(k_par, num_classes=num_classes, embed_dim=embed_dim,
                         hidden=hidden, patch_dim=c * patch * patch,
                         frame_dim=c * h * w)

    out = msqnet_forward(params, images, summaries, patch=patch, num_heads=8)
    jax.block_until_ready(out)
    assert out.shape == (b, num_classes)
    assert bool(jnp.all(jnp.isfinite(out)))
    print("KERNEL_OK")
</pallas_src>

<mosaic_0001>
module attributes {stable_mosaic.version = 11 : i64} {
  func.func @_matmul_kernel(%arg0: i32, %arg1: i32, %arg2: i32, %arg3: memref<128x192xbf16, #tpu.memory_space<vmem>>, %arg4: memref<192x64xbf16, #tpu.memory_space<vmem>>, %arg5: memref<128x64xbf16, #tpu.memory_space<vmem>>, %arg6: memref<128x64xf32, #tpu.memory_space<vmem>>) attributes {dimension_semantics = [#tpu.dimension_semantics<parallel>, #tpu.dimension_semantics<parallel>, #tpu.dimension_semantics<arbitrary>], iteration_bounds = array<i64: 1, 1, 1>, scalar_prefetch = 0 : i64, scratch_operands = 1 : i64, tpu.core_type = #tpu.core_type<tc>, window_params = [{transform_indices = @transform_0, window_bounds = array<i64: 128, 192>}, {transform_indices = @transform_1, window_bounds = array<i64: 192, 64>}, {transform_indices = @transform_2, window_bounds = array<i64: 128, 64>}]} {
    %c0_i32 = arith.constant 0 : i32
    %0 = arith.cmpi eq, %arg2, %c0_i32 : i32
    %1 = arith.extui %0 : i1 to i32
    %c0_i32_0 = arith.constant 0 : i32
    %2 = arith.cmpi ne, %1, %c0_i32_0 : i32
    scf.if %2 {
      %cst_10 = arith.constant 0.000000e+00 : f32
      %12 = vector.broadcast %cst_10 : f32 to vector<128x64xf32>
      %c0_11 = arith.constant 0 : index
      %c0_12 = arith.constant 0 : index
      %13 = vector.load %arg6[%c0_11, %c0_12] : memref<128x64xf32, #tpu.memory_space<vmem>>, vector<128x64xf32>
      tpu.vector_store %arg6[%c0_11, %c0_12], %12 {strides = array<i32>} : memref<128x64xf32, #tpu.memory_space<vmem>>, vector<128x64xf32>,
    } else {
    }
    %c0 = arith.constant 0 : index
    %c0_1 = arith.constant 0 : index
    %3 = vector.load %arg6[%c0, %c0_1] : memref<128x64xf32, #tpu.memory_space<vmem>>, vector<128x64xf32>
    %c0_2 = arith.constant 0 : index
    %c0_3 = arith.constant 0 : index
    %4 = vector.load %arg3[%c0_2, %c0_3] : memref<128x192xbf16, #tpu.memory_space<vmem>>, vector<128x192xbf16>
    %c0_4 = arith.constant 0 : index
    %c0_5 = arith.constant 0 : index
    %5 = vector.load %arg4[%c0_4, %c0_5] : memref<192x64xbf16, #tpu.memory_space<vmem>>, vector<192x64xbf16>
    %cst = arith.constant dense<0.000000e+00> : vector<128x64xf32>
    %6 = tpu.matmul %4, %5, %cst {dimension_numbers = #tpu.dot_dimension_numbers<[1], [0], [0], [1], [0, 0, 1, 1], [], []>} : vector<128x192xbf16>, vector<192x64xbf16>, vector<128x64xf32> -> vector<128x64xf32>
    %7 = arith.addf %3, %6 : vector<128x64xf32>
    %c0_6 = arith.constant 0 : index
    %c0_7 = arith.constant 0 : index
    %8 = vector.load %arg6[%c0_6, %c0_7] : memref<128x64xf32, #tpu.memory_space<vmem>>, vector<128x64xf32>
    tpu.vector_store %arg6[%c0_6, %c0_7], %7 {strides = array<i32>} : memref<128x64xf32, #tpu.memory_space<vmem>>, vector<128x64xf32>,
    %c0_i32_8 = arith.constant 0 : i32
    %9 = arith.cmpi eq, %arg2, %c0_i32_8 : i32
    %10 = arith.extui %9 : i1 to i32
    %c0_i32_9 = arith.constant 0 : i32
    %11 = arith.cmpi ne, %10, %c0_i32_9 : i32
    scf.if %11 {
      %c0_10 = arith.constant 0 : index
      %c0_11 = arith.constant 0 : index
      %12 = vector.load %arg6[%c0_10, %c0_11] : memref<128x64xf32, #tpu.memory_space<vmem>>, vector<128x64xf32>
      %13 = arith.truncf %12 : vector<128x64xf32> to vector<128x64xbf16>
      %c0_12 = arith.constant 0 : index
      %c0_13 = arith.constant 0 : index
      %14 = vector.load %arg5[%c0_12, %c0_13] : memref<128x64xbf16, #tpu.memory_space<vmem>>, vector<128x64xbf16>
      tpu.vector_store %arg5[%c0_12, %c0_13], %13 {strides = array<i32>} : memref<128x64xbf16, #tpu.memory_space<vmem>>, vector<128x64xbf16>,
    } else {
    }
    return
  }
  func.func @transform_0(%arg0: i32, %arg1: i32, %arg2: i32) -> (i32, i32) {
    %c0_i32 = arith.constant 0 : i32
    return %arg0, %arg2 : i32, i32
  }
  func.func @transform_1(%arg0: i32, %arg1: i32, %arg2: i32) -> (i32, i32) {
    %c0_i32 = arith.constant 0 : i32
    return %arg2, %arg1 : i32, i32
  }
  func.func @transform_2(%arg0: i32, %arg1: i32, %arg2: i32) -> (i32, i32) {
    %c0_i32 = arith.constant 0 : i32
    return %arg0, %arg1 : i32, i32
  }
}

module attributes {stable_mosaic.version = 11 : i64} {
  func.func @_pool_kernel(%arg0: i32, %arg1: memref<16x64xbf16, #tpu.memory_space<vmem>>, %arg2: memref<1x64x64xbf16, #tpu.memory_space<vmem>>, %arg3: memref<1x16x64xbf16, #tpu.memory_space<vmem>>) attributes {dimension_semantics = [#tpu.dimension_semantics<parallel>], iteration_bounds = array<i64: 2>, scalar_prefetch = 0 : i64, scratch_operands = 0 : i64, tpu.core_type = #tpu.core_type<tc>, window_params = [{pipeline_mode = #tpu.pipeline_mode<synchronous>, transform_indices = @transform_0, window_bounds = array<i64: 16, 64>}, {transform_indices = @transform_1, window_bounds = array<i64: 1, 64, 64>}, {transform_indices = @transform_2, window_bounds = array<i64: 1, 16, 64>}]} {
    %c0 = arith.constant 0 : index
    %c0_0 = arith.constant 0 : index
    %0 = vector.load %arg1[%c0, %c0_0] : memref<16x64xbf16, #tpu.memory_space<vmem>>, vector<16x64xbf16>
    %c0_1 = arith.constant 0 : index
    %c0_2 = arith.constant 0 : index
    %c0_3 = arith.constant 0 : index
    %1 = vector.load %arg2[%c0_1, %c0_2, %c0_3] : memref<1x64x64xbf16, #tpu.memory_space<vmem>>, vector<1x64x64xbf16>
    %2 = vector.shape_cast %1 : vector<1x64x64xbf16> to vector<64x64xbf16>
    %cst = arith.constant dense<0.000000e+00> : vector<16x64xf32>
    %3 = tpu.matmul %0, %2, %cst {dimension_numbers = #tpu.dot_dimension_numbers<[1], [0], [0], [1], [0, 0, 1, 1], [], []>} : vector<16x64xbf16>, vector<64x64xbf16>, vector<16x64xf32> -> vector<16x64xf32>
    %4 = arith.truncf %3 : vector<16x64xf32> to vector<16x64xbf16>
    %c0_4 = arith.constant 0 : index
    %c0_5 = arith.constant 0 : index
    %c0_6 = arith.constant 0 : index
    %5 = vector.load %arg3[%c0_4, %c0_5, %c0_6] : memref<1x16x64xbf16, #tpu.memory_space<vmem>>, vector<1x16x64xbf16>
    %6 = vector.shape_cast %5 : vector<1x16x64xbf16> to vector<16x64xbf16>
    %7 = vector.shape_cast %4 : vector<16x64xbf16> to vector<1x16x64xbf16>
    tpu.vector_store %arg3[%c0_4, %c0_5, %c0_6], %7 {strides = array<i32>} : memref<1x16x64xbf16, #tpu.memory_space<vmem>>, vector<1x16x64xbf16>,
    return
  }
  func.func @transform_0(%arg0: i32) -> (i32, i32) {
    %c0_i32 = arith.constant 0 : i32
    %c0_i32_0 = arith.constant 0 : i32
    %c0_i32_1 = arith.constant 0 : i32
    return %c0_i32, %c0_i32_0 : i32, i32
  }
  func.func @transform_1(%arg0: i32) -> (i32, i32, i32) {
    %c0_i32 = arith.constant 0 : i32
    %c0_i32_0 = arith.constant 0 : i32
    %c0_i32_1 = arith.constant 0 : i32
    return %arg0, %c0_i32, %c0_i32_0 : i32, i32, i32
  }
  func.func @transform_2(%arg0: i32) -> (i32, i32, i32) {
    %c0_i32 = arith.constant 0 : i32
    %c0_i32_0 = arith.constant 0 : i32
    %c0_i32_1 = arith.constant 0 : i32
    return %arg0, %c0_i32, %c0_i32_0 : i32, i32, i32
  }
}

module attributes {stable_mosaic.version = 11 : i64} {
  func.func @_matmul_kernel(%arg0: i32, %arg1: i32, %arg2: i32, %arg3: memref<32x384xbf16, #tpu.memory_space<vmem>>, %arg4: memref<384x64xbf16, #tpu.memory_space<vmem>>, %arg5: memref<32x64xbf16, #tpu.memory_space<vmem>>, %arg6: memref<32x64xf32, #tpu.memory_space<vmem>>) attributes {dimension_semantics = [#tpu.dimension_semantics<parallel>, #tpu.dimension_semantics<parallel>, #tpu.dimension_semantics<arbitrary>], iteration_bounds = array<i64: 1, 1, 2>, scalar_prefetch = 0 : i64, scratch_operands = 1 : i64, tpu.core_type = #tpu.core_type<tc>, window_params = [{transform_indices = @transform_0, window_bounds = array<i64: 32, 384>}, {transform_indices = @transform_1, window_bounds = array<i64: 384, 64>}, {transform_indices = @transform_2, window_bounds = array<i64: 32, 64>}]} {
    %c0_i32 = arith.constant 0 : i32
    %0 = arith.cmpi eq, %arg2, %c0_i32 : i32
    %1 = arith.extui %0 : i1 to i32
    %c0_i32_0 = arith.constant 0 : i32
    %2 = arith.cmpi ne, %1, %c0_i32_0 : i32
    scf.if %2 {
      %cst_9 = arith.constant 0.000000e+00 : f32
      %12 = vector.broadcast %cst_9 : f32 to vector<32x64xf32>
      %c0_10 = arith.constant 0 : index
      %c0_11 = arith.constant 0 : index
      %13 = vector.load %arg6[%c0_10, %c0_11] : memref<32x64xf32, #tpu.memory_space<vmem>>, vector<32x64xf32>
      tpu.vector_store %arg6[%c0_10, %c0_11], %12 {strides = array<i32>} : memref<32x64xf32, #tpu.memory_space<vmem>>, vector<32x64xf32>,
    } else {
    }
    %c0 = arith.constant 0 : index
    %c0_1 = arith.constant 0 : index
    %3 = vector.load %arg6[%c0, %c0_1] : memref<32x64xf32, #tpu.memory_space<vmem>>, vector<32x64xf32>
    %c0_2 = arith.constant 0 : index
    %c0_3 = arith.constant 0 : index
    %4 = vector.load %arg3[%c0_2, %c0_3] : memref<32x384xbf16, #tpu.memory_space<vmem>>, vector<32x384xbf16>
    %c0_4 = arith.constant 0 : index
    %c0_5 = arith.constant 0 : index
    %5 = vector.load %arg4[%c0_4, %c0_5] : memref<384x64xbf16, #tpu.memory_space<vmem>>, vector<384x64xbf16>
    %cst = arith.constant dense<0.000000e+00> : vector<32x64xf32>
    %6 = tpu.matmul %4, %5, %cst {dimension_numbers = #tpu.dot_dimension_numbers<[1], [0], [0], [1], [0, 0, 1, 1], [], []>} : vector<32x384xbf16>, vector<384x64xbf16>, vector<32x64xf32> -> vector<32x64xf32>
    %7 = arith.addf %3, %6 : vector<32x64xf32>
    %c0_6 = arith.constant 0 : index
    %c0_7 = arith.constant 0 : index
    %8 = vector.load %arg6[%c0_6, %c0_7] : memref<32x64xf32, #tpu.memory_space<vmem>>, vector<32x64xf32>
    tpu.vector_store %arg6[%c0_6, %c0_7], %7 {strides = array<i32>} : memref<32x64xf32, #tpu.memory_space<vmem>>, vector<32x64xf32>,
    %c1_i32 = arith.constant 1 : i32
    %9 = arith.cmpi eq, %arg2, %c1_i32 : i32
    %10 = arith.extui %9 : i1 to i32
    %c0_i32_8 = arith.constant 0 : i32
    %11 = arith.cmpi ne, %10, %c0_i32_8 : i32
    scf.if %11 {
      %c0_9 = arith.constant 0 : index
      %c0_10 = arith.constant 0 : index
      %12 = vector.load %arg6[%c0_9, %c0_10] : memref<32x64xf32, #tpu.memory_space<vmem>>, vector<32x64xf32>
      %13 = arith.truncf %12 : vector<32x64xf32> to vector<32x64xbf16>
      %c0_11 = arith.constant 0 : index
      %c0_12 = arith.constant 0 : index
      %14 = vector.load %arg5[%c0_11, %c0_12] : memref<32x64xbf16, #tpu.memory_space<vmem>>, vector<32x64xbf16>
      tpu.vector_store %arg5[%c0_11, %c0_12], %13 {strides = array<i32>} : memref<32x64xbf16, #tpu.memory_space<vmem>>, vector<32x64xbf16>,
    } else {
    }
    return
  }
  func.func @transform_0(%arg0: i32, %arg1: i32, %arg2: i32) -> (i32, i32) {
    %c0_i32 = arith.constant 0 : i32
    return %arg0, %arg2 : i32, i32
  }
  func.func @transform_1(%arg0: i32, %arg1: i32, %arg2: i32) -> (i32, i32) {
    %c0_i32 = arith.constant 0 : i32
    return %arg2, %arg1 : i32, i32
  }
  func.func @transform_2(%arg0: i32, %arg1: i32, %arg2: i32) -> (i32, i32) {
    %c0_i32 = arith.constant 0 : i32
    return %arg0, %arg1 : i32, i32
  }
}

module attributes {stable_mosaic.version = 11 : i64} {
  func.func @_msq_head_kernel(%arg0: i32, %arg1: memref<2x16x64xbf16, #tpu.memory_space<vmem>>, %arg2: memref<2x16x64xbf16, #tpu.memory_space<vmem>>, %arg3: memref<2x32xbf16, #tpu.memory_space<vmem>>, %arg4: memref<16x32xf32, #tpu.memory_space<vmem>>, %arg5: memref<10x32xbf16, #tpu.memory_space<vmem>>, %arg6: memref<64x32xbf16, #tpu.memory_space<vmem>>, %arg7: memref<32x32xbf16, #tpu.memory_space<vmem>>, %arg8: memref<32x32xbf16, #tpu.memory_space<vmem>>, %arg9: memref<64x32xbf16, #tpu.memory_space<vmem>>, %arg10: memref<32x32xbf16, #tpu.memory_space<vmem>>, %arg11: memref<1x32xf32, #tpu.memory_space<vmem>>, %arg12: memref<32x64xbf16, #tpu.memory_space<vmem>>, %arg13: memref<1x64xf32, #tpu.memory_space<vmem>>, %arg14: memref<32x32xbf16, #tpu.memory_space<vmem>>, %arg15: memref<1x32xf32, #tpu.memory_space<vmem>>, %arg16: memref<32x10xbf16, #tpu.memory_space<vmem>>, %arg17: memref<16x10xf32, #tpu.memory_space<vmem>>, %arg18: memref<1x10xf32, #tpu.memory_space<vmem>>, %arg19: memref<2x10xf32, #tpu.memory_space<vmem>>) attributes {dimension_semantics = [#tpu.dimension_semantics<parallel>], iteration_bounds = array<i64: 1>, scalar_prefetch = 0 : i64, scratch_operands = 0 : i64, tpu.core_type = #tpu.core_type<tc>, window_params = [{transform_indices = @transform_0, window_bounds = array<i64: 2, 16, 64>}, {transform_indices = @transform_1, window_bounds = array<i64: 2, 16, 64>}, {transform_indices = @transform_2, window_bounds = array<i64: 2, 32>}, {pipeline_mode = #tpu.pipeline_mode<synchronous>, transform_indices = @transform_3, window_bounds = array<i64: 16, 32>}, {pipeline_mode = #tpu.pipeline_mode<synchronous>, transform_indices = @transform_4, window_bounds = array<i64: 10, 32>}, {pipeline_mode = #tpu.pipeline_mode<synchronous>, transform_indices = @transform_5, window_bounds = array<i64: 64, 32>}, {pipeline_mode = #tpu.pipeline_mode<synchronous>, transform_indices = @transform_6, window_bounds = array<i64: 32, 32>}, {pipeline_mode = #tpu.pipeline_mode<synchronous>, transform_indices = @transform_7, window_bounds = array<i64: 32, 32>}, {pipeline_mode = #tpu.pipeline_mode<synchronous>, transform_indices = @transform_8, window_bounds = array<i64: 64, 32>}, {pipeline_mode = #tpu.pipeline_mode<synchronous>, transform_indices = @transform_9, window_bounds = array<i64: 32, 32>}, {pipeline_mode = #tpu.pipeline_mode<synchronous>, transform_indices = @transform_10, window_bounds = array<i64: 1, 32>}, {pipeline_mode = #tpu.pipeline_mode<synchronous>, transform_indices = @transform_11, window_bounds = array<i64: 32, 64>}, {pipeline_mode = #tpu.pipeline_mode<synchronous>, transform_indices = @transform_12, window_bounds = array<i64: 1, 64>}, {pipeline_mode = #tpu.pipeline_mode<synchronous>, transform_indices = @transform_13, window_bounds = array<i64: 32, 32>}, {pipeline_mode = #tpu.pipeline_mode<synchronous>, transform_indices = @transform_14, window_bounds = array<i64: 1, 32>}, {pipeline_mode = #tpu.pipeline_mode<synchronous>, transform_indices = @transform_15, window_bounds = array<i64: 32, 10>}, {pipeline_mode = #tpu.pipeline_mode<synchronous>, transform_indices = @transform_16, window_bounds = array<i64: 16, 10>}, {pipeline_mode = #tpu.pipeline_mode<synchronous>, transform_indices = @transform_17, window_bounds = array<i64: 1, 10>}, {transform_indices = @transform_18, window_bounds = array<i64: 2, 10>}]} {
    %c0 = arith.constant 0 : index
    %c0_0 = arith.constant 0 : index
    %c0_1 = arith.constant 0 : index
    %0 = vector.load %arg1[%c0, %c0_0, %c0_1] : memref<2x16x64xbf16, #tpu.memory_space<vmem>>, vector<2x16x64xbf16>
    %1 = vector.shape_cast %0 : vector<2x16x64xbf16> to vector<32x64xbf16>
    %c0_2 = arith.constant 0 : index
    %c0_3 = arith.constant 0 : index
    %2 = vector.load %arg6[%c0_2, %c0_3] : memref<64x32xbf16, #tpu.memory_space<vmem>>, vector<64x32xbf16>
    %cst = arith.constant dense<0.000000e+00> : vector<32x32xf32>
    %3 = tpu.matmul %1, %2, %cst {dimension_numbers = #tpu.dot_dimension_numbers<[1], [0], [0], [1], [0, 0, 1, 1], [], []>} : vector<32x64xbf16>, vector<64x32xbf16>, vector<32x32xf32> -> vector<32x32xf32>
    %c0_4 = arith.constant 0 : index
    %c0_5 = arith.constant 0 : index
    %4 = vector.load %arg3[%c0_4, %c0_5] : memref<2x32xbf16, #tpu.memory_space<vmem>>, vector<2x32xbf16>
    %c0_6 = arith.constant 0 : index
    %c0_7 = arith.constant 0 : index
    %5 = vector.load %arg7[%c0_6, %c0_7] : memref<32x32xbf16, #tpu.memory_space<vmem>>, vector<32x32xbf16>
    %cst_8 = arith.constant dense<0.000000e+00> : vector<2x32xf32>
    %6 = tpu.matmul %4, %5, %cst_8 {dimension_numbers = #tpu.dot_dimension_numbers<[1], [0], [0], [1], [0, 0, 1, 1], [], []>} : vector<2x32xbf16>, vector<32x32xbf16>, vector<2x32xf32> -> vector<2x32xf32>
    %7 = vector.shape_cast %3 : vector<32x32xf32> to vector<2x16x32xf32>
    %8 = vector.shape_cast %6 : vector<2x32xf32> to vector<2x1x32xf32>
    %9 = vector.broadcast %8 : vector<2x1x32xf32> to vector<2x16x32xf32>
    %10 = arith.addf %7, %9 : vector<2x16x32xf32>
    %c0_9 = arith.constant 0 : index
    %c0_10 = arith.constant 0 : index
    %11 = vector.load %arg4[%c0_9, %c0_10] : memref<16x32xf32, #tpu.memory_space<vmem>>, vector<16x32xf32>
    %12 = vector.shape_cast %11 : vector<16x32xf32> to vector<1x16x32xf32>
    %13 = vector.broadcast %12 : vector<1x16x32xf32> to vector<2x16x32xf32>
    %14 = arith.addf %10, %13 : vector<2x16x32xf32>
    %c0_11 = arith.constant 0 : index
    %c0_12 = arith.constant 0 : index
    %c0_13 = arith.constant 0 : index
    %15 = vector.load %arg2[%c0_11, %c0_12, %c0_13] : memref<2x16x64xbf16, #tpu.memory_space<vmem>>, vector<2x16x64xbf16>
    %16 = arith.extf %15 : vector<2x16x64xbf16> to vector<2x16x64xf32>
    %cst_14 = arith.constant dense<0.000000e+00> : vector<2x64xf32>
    %17 = vector.multi_reduction <add>, %16, %cst_14 [1] : vector<2x16x64xf32> to vector<2x64xf32>
    %cst_15 = arith.constant 1.600000e+01 : f32
    %18 = vector.broadcast %cst_15 : f32 to vector<2x64xf32>
    %19 = arith.divf %17, %18 : vector<2x64xf32>
    %c0_16 = arith.constant 0 : index
    %c0_17 = arith.constant 0 : index
    %20 = vector.load %arg5[%c0_16, %c0_17] : memref<10x32xbf16, #tpu.memory_space<vmem>>, vector<10x32xbf16>
    %c0_18 = arith.constant 0 : index
    %c0_19 = arith.constant 0 : index
    %21 = vector.load %arg8[%c0_18, %c0_19] : memref<32x32xbf16, #tpu.memory_space<vmem>>, vector<32x32xbf16>
    %cst_20 = arith.constant dense<0.000000e+00> : vector<10x32xf32>
    %22 = tpu.matmul %20, %21, %cst_20 {dimension_numbers = #tpu.dot_dimension_numbers<[1], [0], [0], [1], [0, 0, 1, 1], [], []>} : vector<10x32xbf16>, vector<32x32xbf16>, vector<10x32xf32> -> vector<10x32xf32>
    %23 = arith.truncf %19 : vector<2x64xf32> to vector<2x64xbf16>
    %c0_21 = arith.constant 0 : index
    %c0_22 = arith.constant 0 : index
    %24 = vector.load %arg9[%c0_21, %c0_22] : memref<64x32xbf16, #tpu.memory_space<vmem>>, vector<64x32xbf16>
    %cst_23 = arith.constant dense<0.000000e+00> : vector<2x32xf32>
    %25 = tpu.matmul %23, %24, %cst_23 {dimension_numbers = #tpu.dot_dimension_numbers<[1], [0], [0], [1], [0, 0, 1, 1], [], []>} : vector<2x64xbf16>, vector<64x32xbf16>, vector<2x32xf32> -> vector<2x32xf32>
    %26 = vector.shape_cast %22 : vector<10x32xf32> to vector<1x10x32xf32>
    %27 = vector.shape_cast %25 : vector<2x32xf32> to vector<2x1x32xf32>
    %28 = vector.broadcast %26 : vector<1x10x32xf32> to vector<2x10x32xf32>
    %29 = vector.broadcast %27 : vector<2x1x32xf32> to vector<2x10x32xf32>
    %30 = arith.addf %28, %29 : vector<2x10x32xf32>
    %31 = vector.shape_cast %14 : vector<2x16x32xf32> to vector<32x32xf32>
    %32 = arith.truncf %31 : vector<32x32xf32> to vector<32x32xbf16>
    %c0_24 = arith.constant 0 : index
    %c0_25 = arith.constant 0 : index
    %33 = vector.load %arg10[%c0_24, %c0_25] : memref<32x32xbf16, #tpu.memory_space<vmem>>, vector<32x32xbf16>
    %cst_26 = arith.constant dense<0.000000e+00> : vector<32x32xf32>
    %34 = tpu.matmul %32, %33, %cst_26 {dimension_numbers = #tpu.dot_dimension_numbers<[1], [0], [0], [1], [0, 0, 1, 1], [], []>} : vector<32x32xbf16>, vector<32x32xbf16>, vector<32x32xf32> -> vector<32x32xf32>
    %c0_27 = arith.constant 0 : index
    %c0_28 = arith.constant 0 : index
    %35 = vector.load %arg11[%c0_27, %c0_28] : memref<1x32xf32, #tpu.memory_space<vmem>>, vector<1x32xf32>
    %36 = vector.broadcast %35 : vector<1x32xf32> to vector<32x32xf32>
    %37 = arith.addf %34, %36 : vector<32x32xf32>
    %38 = vector.shape_cast %37 : vector<32x32xf32> to vector<2x16x32xf32>
    %39 = vector.shape_cast %30 : vector<2x10x32xf32> to vector<20x32xf32>
    %40 = arith.truncf %39 : vector<20x32xf32> to vector<20x32xbf16>
    %c0_29 = arith.constant 0 : index
    %c0_30 = arith.constant 0 : index
    %41 = vector.load %arg12[%c0_29, %c0_30] : memref<32x64xbf16, #tpu.memory_space<vmem>>, vector<32x64xbf16>
    %cst_31 = arith.constant dense<0.000000e+00> : vector<20x64xf32>
    %42 = tpu.matmul %40, %41, %cst_31 {dimension_numbers = #tpu.dot_dimension_numbers<[1], [0], [0], [1], [0, 0, 1, 1], [], []>} : vector<20x32xbf16>, vector<32x64xbf16>, vector<20x64xf32> -> vector<20x64xf32>
    %c0_32 = arith.constant 0 : index
    %c0_33 = arith.constant 0 : index
    %43 = vector.load %arg13[%c0_32, %c0_33] : memref<1x64xf32, #tpu.memory_space<vmem>>, vector<1x64xf32>
    %44 = vector.broadcast %43 : vector<1x64xf32> to vector<20x64xf32>
    %45 = arith.addf %42, %44 : vector<20x64xf32>
    %46 = vector.shape_cast %45 : vector<20x64xf32> to vector<2x10x64xf32>
    %47 = vector.extract_strided_slice %46 {offsets = [0, 0, 0], sizes = [2, 10, 32], strides = [1, 1, 1]} : vector<2x10x64xf32> to vector<2x10x32xf32>
    %48 = vector.extract_strided_slice %46 {offsets = [0, 0, 32], sizes = [2, 10, 32], strides = [1, 1, 1]} : vector<2x10x64xf32> to vector<2x10x32xf32>
    %49 = vector.extract_strided_slice %38 {offsets = [0, 0, 0], sizes = [2, 16, 4], strides = [1, 1, 1]} : vector<2x16x32xf32> to vector<2x16x4xf32>
    %50 = arith.truncf %49 : vector<2x16x4xf32> to vector<2x16x4xbf16>
    %51 = vector.extract_strided_slice %47 {offsets = [0, 0, 0], sizes = [2, 10, 4], strides = [1, 1, 1]} : vector<2x10x32xf32> to vector<2x10x4xf32>
    %52 = arith.truncf %51 : vector<2x10x4xf32> to vector<2x10x4xbf16>
    %53 = vector.extract_strided_slice %48 {offsets = [0, 0, 0], sizes = [2, 10, 4], strides = [1, 1, 1]} : vector<2x10x32xf32> to vector<2x10x4xf32>
    %54 = arith.truncf %53 : vector<2x10x4xf32> to vector<2x10x4xbf16>
    "tpu.trace_start"() <{level = 10 : i32, message = "bqd,bkd->bqk"}> : () -> ()
    %cst_34 = arith.constant dense<0.000000e+00> : vector<2x16x10xf32>
    %55 = tpu.matmul %50, %52, %cst_34 {dimension_numbers = #tpu.dot_dimension_numbers<[2], [2], [1], [1], [0, 0, 0, 1, 1, 1], [0], [0]>} : vector<2x16x4xbf16>, vector<2x10x4xbf16>, vector<2x16x10xf32> -> vector<2x16x10xf32>
    "tpu.trace_stop"() : () -> ()
    %cst_35 = arith.constant 5.000000e-01 : f32
    %56 = vector.broadcast %cst_35 : f32 to vector<2x16x10xf32>
    %57 = arith.mulf %55, %56 : vector<2x16x10xf32>
    %cst_36 = arith.constant dense<0xFF800000> : vector<2x16xf32>
    %58 = vector.multi_reduction <maximumf>, %57, %cst_36 [2] : vector<2x16x10xf32> to vector<2x16xf32>
    %59 = vector.shape_cast %58 : vector<2x16xf32> to vector<2x16x1xf32>
    %60 = vector.broadcast %59 : vector<2x16x1xf32> to vector<2x16x10xf32>
    %61 = arith.subf %57, %60 : vector<2x16x10xf32>
    %62 = math.exp %61 : vector<2x16x10xf32>
    %cst_37 = arith.constant dense<0.000000e+00> : vector<2x16xf32>
    %63 = vector.multi_reduction <add>, %62, %cst_37 [2] : vector<2x16x10xf32> to vector<2x16xf32>
    %64 = vector.shape_cast %63 : vector<2x16xf32> to vector<2x16x1xf32>
    %65 = tpu.reciprocal %64 {approx = true} : vector<2x16x1xf32> -> vector<2x16x1xf32>
    %66 = vector.broadcast %65 : vector<2x16x1xf32> to vector<2x16x10xf32>
    %67 = arith.mulf %62, %66 : vector<2x16x10xf32>
    %68 = arith.truncf %67 : vector<2x16x10xf32> to vector<2x16x10xbf16>
    "tpu.trace_start"() <{level = 10 : i32, message = "bqk,bkd->bqd"}> : () -> ()
    %cst_38 = arith.constant dense<0.000000e+00> : vector<2x16x4xf32>
    %69 = tpu.matmul %68, %54, %cst_38 {dimension_numbers = #tpu.dot_dimension_numbers<[2], [1], [1], [2], [0, 0, 0, 1, 1, 2], [0], [0]>} : vector<2x16x10xbf16>, vector<2x10x4xbf16>, vector<2x16x4xf32> -> vector<2x16x4xf32>
    "tpu.trace_stop"() : () -> ()
    %70 = vector.extract_strided_slice %38 {offsets = [0, 0, 4], sizes = [2, 16, 4], strides = [1, 1, 1]} : vector<2x16x32xf32> to vector<2x16x4xf32>
    %71 = arith.truncf %70 : vector<2x16x4xf32> to vector<2x16x4xbf16>
    %72 = vector.extract_strided_slice %47 {offsets = [0, 0, 4], sizes = [2, 10, 4], strides = [1, 1, 1]} : vector<2x10x32xf32> to vector<2x10x4xf32>
    %73 = arith.truncf %72 : vector<2x10x4xf32> to vector<2x10x4xbf16>
    %74 = vector.extract_strided_slice %48 {offsets = [0, 0, 4], sizes = [2, 10, 4], strides = [1, 1, 1]} : vector<2x10x32xf32> to vector<2x10x4xf32>
    %75 = arith.truncf %74 : vector<2x10x4xf32> to vector<2x10x4xbf16>
    "tpu.trace_start"() <{level = 10 : i32, message = "bqd,bkd->bqk"}> : () -> ()
    %cst_39 = arith.constant dense<0.000000e+00> : vector<2x16x10xf32>
    %76 = tpu.matmul %71, %73, %cst_39 {dimension_numbers = #tpu.dot_dimension_numbers<[2], [2], [1], [1], [0, 0, 0, 1, 1, 1], [0], [0]>} : vector<2x16x4xbf16>, vector<2x10x4xbf16>, vector<2x16x10xf32> -> vector<2x16x10xf32>
    "tpu.trace_stop"() : () -> ()
    %cst_40 = arith.constant 5.000000e-01 : f32
    %77 = vector.broadcast %cst_40 : f32 to vector<2x16x10xf32>
    %78 = arith.mulf %76, %77 : vector<2x16x10xf32>
    %cst_41 = arith.constant dense<0xFF800000> : vector<2x16xf32>
    %79 = vector.multi_reduction <maximumf>, %78, %cst_41 [2] : vector<2x16x10xf32> to vector<2x16xf32>
    %80 = vector.shape_cast %79 : vector<2x16xf32> to vector<2x16x1xf32>
    %81 = vector.broadcast %80 : vector<2x16x1xf32> to vector<2x16x10xf32>
    %82 = arith.subf %78, %81 : vector<2x16x10xf32>
    %83 = math.exp %82 : vector<2x16x10xf32>
    %cst_42 = arith.constant dense<0.000000e+00> : vector<2x16xf32>
    %84 = vector.multi_reduction <add>, %83, %cst_42 [2] : vector<2x16x10xf32> to vector<2x16xf32>
    %85 = vector.shape_cast %84 : vector<2x16xf32> to vector<2x16x1xf32>
    %86 = tpu.reciprocal %85 {approx = true} : vector<2x16x1xf32> -> vector<2x16x1xf32>
    %87 = vector.broadcast %86 : vector<2x16x1xf32> to vector<2x16x10xf32>
    %88 = arith.mulf %83, %87 : vector<2x16x10xf32>
    %89 = arith.truncf %88 : vector<2x16x10xf32> to vector<2x16x10xbf16>
    "tpu.trace_start"() <{level = 10 : i32, message = "bqk,bkd->bqd"}> : () -> ()
    %cst_43 = arith.constant dense<0.000000e+00> : vector<2x16x4xf32>
    %90 = tpu.matmul %89, %75, %cst_43 {dimension_numbers = #tpu.dot_dimension_numbers<[2], [1], [1], [2], [0, 0, 0, 1, 1, 2], [0], [0]>} : vector<2x16x10xbf16>, vector<2x10x4xbf16>, vector<2x16x4xf32> -> vector<2x16x4xf32>
    "tpu.trace_stop"() : () -> ()
    %91 = vector.extract_strided_slice %38 {offsets = [0, 0, 8], sizes = [2, 16, 4], strides = [1, 1, 1]} : vector<2x16x32xf32> to vector<2x16x4xf32>
    %92 = arith.truncf %91 : vector<2x16x4xf32> to vector<2x16x4xbf16>
    %93 = vector.extract_strided_slice %47 {offsets = [0, 0, 8], sizes = [2, 10, 4], strides = [1, 1, 1]} : vector<2x10x32xf32> to vector<2x10x4xf32>
    %94 = arith.truncf %93 : vector<2x10x4xf32> to vector<2x10x4xbf16>
    %95 = vector.extract_strided_slice %48 {offsets = [0, 0, 8], sizes = [2, 10, 4], strides = [1, 1, 1]} : vector<2x10x32xf32> to vector<2x10x4xf32>
    %96 = arith.truncf %95 : vector<2x10x4xf32> to vector<2x10x4xbf16>
    "tpu.trace_start"() <{level = 10 : i32, message = "bqd,bkd->bqk"}> : () -> ()
    %cst_44 = arith.constant dense<0.000000e+00> : vector<2x16x10xf32>
    %97 = tpu.matmul %92, %94, %cst_44 {dimension_numbers = #tpu.dot_dimension_numbers<[2], [2], [1], [1], [0, 0, 0, 1, 1, 1], [0], [0]>} : vector<2x16x4xbf16>, vector<2x10x4xbf16>, vector<2x16x10xf32> -> vector<2x16x10xf32>
    "tpu.trace_stop"() : () -> ()
    %cst_45 = arith.constant 5.000000e-01 : f32
    %98 = vector.broadcast %cst_45 : f32 to vector<2x16x10xf32>
    %99 = arith.mulf %97, %98 : vector<2x16x10xf32>
    %cst_46 = arith.constant dense<0xFF800000> : vector<2x16xf32>
    %100 = vector.multi_reduction <maximumf>, %99, %cst_46 [2] : vector<2x16x10xf32> to vector<2x16xf32>
    %101 = vector.shape_cast %100 : vector<2x16xf32> to vector<2x16x1xf32>
    %102 = vector.broadcast %101 : vector<2x16x1xf32> to vector<2x16x10xf32>
    %103 = arith.subf %99, %102 : vector<2x16x10xf32>
    %104 = math.exp %103 : vector<2x16x10xf32>
    %cst_47 = arith.constant dense<0.000000e+00> : vector<2x16xf32>
    %105 = vector.multi_reduction <add>, %104, %cst_47 [2] : vector<2x16x10xf32> to vector<2x16xf32>
    %106 = vector.shape_cast %105 : vector<2x16xf32> to vector<2x16x1xf32>
    %107 = tpu.reciprocal %106 {approx = true} : vector<2x16x1xf32> -> vector<2x16x1xf32>
    %108 = vector.broadcast %107 : vector<2x16x1xf32> to vector<2x16x10xf32>
    %109 = arith.mulf %104, %108 : vector<2x16x10xf32>
    %110 = arith.truncf %109 : vector<2x16x10xf32> to vector<2x16x10xbf16>
    "tpu.trace_start"() <{level = 10 : i32, message = "bqk,bkd->bqd"}> : () -> ()
    %cst_48 = arith.constant dense<0.000000e+00> : vector<2x16x4xf32>
    %111 = tpu.matmul %110, %96, %cst_48 {dimension_numbers = #tpu.dot_dimension_numbers<[2], [1], [1], [2], [0, 0, 0, 1, 1, 2], [0], [0]>} : vector<2x16x10xbf16>, vector<2x10x4xbf16>, vector<2x16x4xf32> -> vector<2x16x4xf32>
    "tpu.trace_stop"() : () -> ()
    %112 = vector.extract_strided_slice %38 {offsets = [0, 0, 12], sizes = [2, 16, 4], strides = [1, 1, 1]} : vector<2x16x32xf32> to vector<2x16x4xf32>
    %113 = arith.truncf %112 : vector<2x16x4xf32> to vector<2x16x4xbf16>
    %114 = vector.extract_strided_slice %47 {offsets = [0, 0, 12], sizes = [2, 10, 4], strides = [1, 1, 1]} : vector<2x10x32xf32> to vector<2x10x4xf32>
    %115 = arith.truncf %114 : vector<2x10x4xf32> to vector<2x10x4xbf16>
    %116 = vector.extract_strided_slice %48 {offsets = [0, 0, 12], sizes = [2, 10, 4], strides = [1, 1, 1]} : vector<2x10x32xf32> to vector<2x10x4xf32>
    %117 = arith.truncf %116 : vector<2x10x4xf32> to vector<2x10x4xbf16>
    "tpu.trace_start"() <{level = 10 : i32, message = "bqd,bkd->bqk"}> : () -> ()
    %cst_49 = arith.constant dense<0.000000e+00> : vector<2x16x10xf32>
    %118 = tpu.matmul %113, %115, %cst_49 {dimension_numbers = #tpu.dot_dimension_numbers<[2], [2], [1], [1], [0, 0, 0, 1, 1, 1], [0], [0]>} : vector<2x16x4xbf16>, vector<2x10x4xbf16>, vector<2x16x10xf32> -> vector<2x16x10xf32>
    "tpu.trace_stop"() : () -> ()
    %cst_50 = arith.constant 5.000000e-01 : f32
    %119 = vector.broadcast %cst_50 : f32 to vector<2x16x10xf32>
    %120 = arith.mulf %118, %119 : vector<2x16x10xf32>
    %cst_51 = arith.constant dense<0xFF800000> : vector<2x16xf32>
    %121 = vector.multi_reduction <maximumf>, %120, %cst_51 [2] : vector<2x16x10xf32> to vector<2x16xf32>
    %122 = vector.shape_cast %121 : vector<2x16xf32> to vector<2x16x1xf32>
    %123 = vector.broadcast %122 : vector<2x16x1xf32> to vector<2x16x10xf32>
    %124 = arith.subf %120, %123 : vector<2x16x10xf32>
    %125 = math.exp %124 : vector<2x16x10xf32>
    %cst_52 = arith.constant dense<0.000000e+00> : vector<2x16xf32>
    %126 = vector.multi_reduction <add>, %125, %cst_52 [2] : vector<2x16x10xf32> to vector<2x16xf32>
    %127 = vector.shape_cast %126 : vector<2x16xf32> to vector<2x16x1xf32>
    %128 = tpu.reciprocal %127 {approx = true} : vector<2x16x1xf32> -> vector<2x16x1xf32>
    %129 = vector.broadcast %128 : vector<2x16x1xf32> to vector<2x16x10xf32>
    %130 = arith.mulf %125, %129 : vector<2x16x10xf32>
    %131 = arith.truncf %130 : vector<2x16x10xf32> to vector<2x16x10xbf16>
    "tpu.trace_start"() <{level = 10 : i32, message = "bqk,bkd->bqd"}> : () -> ()
    %cst_53 = arith.constant dense<0.000000e+00> : vector<2x16x4xf32>
    %132 = tpu.matmul %131, %117, %cst_53 {dimension_numbers = #tpu.dot_dimension_numbers<[2], [1], [1], [2], [0, 0, 0, 1, 1, 2], [0], [0]>} : vector<2x16x10xbf16>, vector<2x10x4xbf16>, vector<2x16x4xf32> -> vector<2x16x4xf32>
    "tpu.trace_stop"() : () -> ()
    %133 = vector.extract_strided_slice %38 {offsets = [0, 0, 16], sizes = [2, 16, 4], strides = [1, 1, 1]} : vector<2x16x32xf32> to vector<2x16x4xf32>
    %134 = arith.truncf %133 : vector<2x16x4xf32> to vector<2x16x4xbf16>
    %135 = vector.extract_strided_slice %47 {offsets = [0, 0, 16], sizes = [2, 10, 4], strides = [1, 1, 1]} : vector<2x10x32xf32> to vector<2x10x4xf32>
    %136 = arith.truncf %135 : vector<2x10x4xf32> to vector<2x10x4xbf16>
    %137 = vector.extract_strided_slice %48 {offsets = [0, 0, 16], sizes = [2, 10, 4], strides = [1, 1, 1]} : vector<2x10x32xf32> to vector<2x10x4xf32>
    %138 = arith.truncf %137 : vector<2x10x4xf32> to vector<2x10x4xbf16>
    "tpu.trace_start"() <{level = 10 : i32, message = "bqd,bkd->bqk"}> : () -> ()
    %cst_54 = arith.constant dense<0.000000e+00> : vector<2x16x10xf32>
    %139 = tpu.matmul %134, %136, %cst_54 {dimension_numbers = #tpu.dot_dimension_numbers<[2], [2], [1], [1], [0, 0, 0, 1, 1, 1], [0], [0]>} : vector<2x16x4xbf16>, vector<2x10x4xbf16>, vector<2x16x10xf32> -> vector<2x16x10xf32>
    "tpu.trace_stop"() : () -> ()
    %cst_55 = arith.constant 5.000000e-01 : f32
    %140 = vector.broadcast %cst_55 : f32 to vector<2x16x10xf32>
    %141 = arith.mulf %139, %140 : vector<2x16x10xf32>
    %cst_56 = arith.constant dense<0xFF800000> : vector<2x16xf32>
    %142 = vector.multi_reduction <maximumf>, %141, %cst_56 [2] : vector<2x16x10xf32> to vector<2x16xf32>
    %143 = vector.shape_cast %142 : vector<2x16xf32> to vector<2x16x1xf32>
    %144 = vector.broadcast %143 : vector<2x16x1xf32> to vector<2x16x10xf32>
    %145 = arith.subf %141, %144 : vector<2x16x10xf32>
    %146 = math.exp %145 : vector<2x16x10xf32>
    %cst_57 = arith.constant dense<0.000000e+00> : vector<2x16xf32>
    %147 = vector.multi_reduction <add>, %146, %cst_57 [2] : vector<2x16x10xf32> to vector<2x16xf32>
    %148 = vector.shape_cast %147 : vector<2x16xf32> to vector<2x16x1xf32>
    %149 = tpu.reciprocal %148 {approx = true} : vector<2x16x1xf32> -> vector<2x16x1xf32>
    %150 = vector.broadcast %149 : vector<2x16x1xf32> to vector<2x16x10xf32>
    %151 = arith.mulf %146, %150 : vector<2x16x10xf32>
    %152 = arith.truncf %151 : vector<2x16x10xf32> to vector<2x16x10xbf16>
    "tpu.trace_start"() <{level = 10 : i32, message = "bqk,bkd->bqd"}> : () -> ()
    %cst_58 = arith.constant dense<0.000000e+00> : vector<2x16x4xf32>
    %153 = tpu.matmul %152, %138, %cst_58 {dimension_numbers = #tpu.dot_dimension_numbers<[2], [1], [1], [2], [0, 0, 0, 1, 1, 2], [0], [0]>} : vector<2x16x10xbf16>, vector<2x10x4xbf16>, vector<2x16x4xf32> -> vector<2x16x4xf32>
    "tpu.trace_stop"() : () -> ()
    %154 = vector.extract_strided_slice %38 {offsets = [0, 0, 20], sizes = [2, 16, 4], strides = [1, 1, 1]} : vector<2x16x32xf32> to vector<2x16x4xf32>
    %155 = arith.truncf %154 : vector<2x16x4xf32> to vector<2x16x4xbf16>
    %156 = vector.extract_strided_slice %47 {offsets = [0, 0, 20], sizes = [2, 10, 4], strides = [1, 1, 1]} : vector<2x10x32xf32> to vector<2x10x4xf32>
    %157 = arith.truncf %156 : vector<2x10x4xf32> to vector<2x10x4xbf16>
    %158 = vector.extract_strided_slice %48 {offsets = [0, 0, 20], sizes = [2, 10, 4], strides = [1, 1, 1]} : vector<2x10x32xf32> to vector<2x10x4xf32>
    %159 = arith.truncf %158 : vector<2x10x4xf32> to vector<2x10x4xbf16>
    "tpu.trace_start"() <{level = 10 : i32, message = "bqd,bkd->bqk"}> : () -> ()
    %cst_59 = arith.constant dense<0.000000e+00> : vector<2x16x10xf32>
    %160 = tpu.matmul %155, %157, %cst_59 {dimension_numbers = #tpu.dot_dimension_numbers<[2], [2], [1], [1], [0, 0, 0, 1, 1, 1], [0], [0]>} : vector<2x16x4xbf16>, vector<2x10x4xbf16>, vector<2x16x10xf32> -> vector<2x16x10xf32>
    "tpu.trace_stop"() : () -> ()
    %cst_60 = arith.constant 5.000000e-01 : f32
    %161 = vector.broadcast %cst_60 : f32 to vector<2x16x10xf32>
    %162 = arith.mulf %160, %161 : vector<2x16x10xf32>
    %cst_61 = arith.constant dense<0xFF800000> : vector<2x16xf32>
    %163 = vector.multi_reduction <maximumf>, %162, %cst_61 [2] : vector<2x16x10xf32> to vector<2x16xf32>
    %164 = vector.shape_cast %163 : vector<2x16xf32> to vector<2x16x1xf32>
    %165 = vector.broadcast %164 : vector<2x16x1xf32> to vector<2x16x10xf32>
    %166 = arith.subf %162, %165 : vector<2x16x10xf32>
    %167 = math.exp %166 : vector<2x16x10xf32>
    %cst_62 = arith.constant dense<0.000000e+00> : vector<2x16xf32>
    %168 = vector.multi_reduction <add>, %167, %cst_62 [2] : vector<2x16x10xf32> to vector<2x16xf32>
    %169 = vector.shape_cast %168 : vector<2x16xf32> to vector<2x16x1xf32>
    %170 = tpu.reciprocal %169 {approx = true} : vector<2x16x1xf32> -> vector<2x16x1xf32>
    %171 = vector.broadcast %170 : vector<2x16x1xf32> to vector<2x16x10xf32>
    %172 = arith.mulf %167, %171 : vector<2x16x10xf32>
    %173 = arith.truncf %172 : vector<2x16x10xf32> to vector<2x16x10xbf16>
    "tpu.trace_start"() <{level = 10 : i32, message = "bqk,bkd->bqd"}> : () -> ()
    %cst_63 = arith.constant dense<0.000000e+00> : vector<2x16x4xf32>
    %174 = tpu.matmul %173, %159, %cst_63 {dimension_numbers = #tpu.dot_dimension_numbers<[2], [1], [1], [2], [0, 0, 0, 1, 1, 2], [0], [0]>} : vector<2x16x10xbf16>, vector<2x10x4xbf16>, vector<2x16x4xf32> -> vector<2x16x4xf32>
    "tpu.trace_stop"() : () -> ()
    %175 = vector.extract_strided_slice %38 {offsets = [0, 0, 24], sizes = [2, 16, 4], strides = [1, 1, 1]} : vector<2x16x32xf32> to vector<2x16x4xf32>
    %176 = arith.truncf %175 : vector<2x16x4xf32> to vector<2x16x4xbf16>
    %177 = vector.extract_strided_slice %47 {offsets = [0, 0, 24], sizes = [2, 10, 4], strides = [1, 1, 1]} : vector<2x10x32xf32> to vector<2x10x4xf32>
    %178 = arith.truncf %177 : vector<2x10x4xf32> to vector<2x10x4xbf16>
    %179 = vector.extract_strided_slice %48 {offsets = [0, 0, 24], sizes = [2, 10, 4], strides = [1, 1, 1]} : vector<2x10x32xf32> to vector<2x10x4xf32>
    %180 = arith.truncf %179 : vector<2x10x4xf32> to vector<2x10x4xbf16>
    "tpu.trace_start"() <{level = 10 : i32, message = "bqd,bkd->bqk"}> : () -> ()
    %cst_64 = arith.constant dense<0.000000e+00> : vector<2x16x10xf32>
    %181 = tpu.matmul %176, %178, %cst_64 {dimension_numbers = #tpu.dot_dimension_numbers<[2], [2], [1], [1], [0, 0, 0, 1, 1, 1], [0], [0]>} : vector<2x16x4xbf16>, vector<2x10x4xbf16>, vector<2x16x10xf32> -> vector<2x16x10xf32>
    "tpu.trace_stop"() : () -> ()
    %cst_65 = arith.constant 5.000000e-01 : f32
    %182 = vector.broadcast %cst_65 : f32 to vector<2x16x10xf32>
    %183 = arith.mulf %181, %182 : vector<2x16x10xf32>
    %cst_66 = arith.constant dense<0xFF800000> : vector<2x16xf32>
    %184 = vector.multi_reduction <maximumf>, %183, %cst_66 [2] : vector<2x16x10xf32> to vector<2x16xf32>
    %185 = vector.shape_cast %184 : vector<2x16xf32> to vector<2x16x1xf32>
    %186 = vector.broadcast %185 : vector<2x16x1xf32> to vector<2x16x10xf32>
    %187 = arith.subf %183, %186 : vector<2x16x10xf32>
    %188 = math.exp %187 : vector<2x16x10xf32>
    %cst_67 = arith.constant dense<0.000000e+00> : vector<2x16xf32>
    %189 = vector.multi_reduction <add>, %188, %cst_67 [2] : vector<2x16x10xf32> to vector<2x16xf32>
    %190 = vector.shape_cast %189 : vector<2x16xf32> to vector<2x16x1xf32>
    %191 = tpu.reciprocal %190 {approx = true} : vector<2x16x1xf32> -> vector<2x16x1xf32>
    %192 = vector.broadcast %191 : vector<2x16x1xf32> to vector<2x16x10xf32>
    %193 = arith.mulf %188, %192 : vector<2x16x10xf32>
    %194 = arith.truncf %193 : vector<2x16x10xf32> to vector<2x16x10xbf16>
    "tpu.trace_start"() <{level = 10 : i32, message = "bqk,bkd->bqd"}> : () -> ()
    %cst_68 = arith.constant dense<0.000000e+00> : vector<2x16x4xf32>
    %195 = tpu.matmul %194, %180, %cst_68 {dimension_numbers = #tpu.dot_dimension_numbers<[2], [1], [1], [2], [0, 0, 0, 1, 1, 2], [0], [0]>} : vector<2x16x10xbf16>, vector<2x10x4xbf16>, vector<2x16x4xf32> -> vector<2x16x4xf32>
    "tpu.trace_stop"() : () -> ()
    %196 = vector.extract_strided_slice %38 {offsets = [0, 0, 28], sizes = [2, 16, 4], strides = [1, 1, 1]} : vector<2x16x32xf32> to vector<2x16x4xf32>
    %197 = arith.truncf %196 : vector<2x16x4xf32> to vector<2x16x4xbf16>
    %198 = vector.extract_strided_slice %47 {offsets = [0, 0, 28], sizes = [2, 10, 4], strides = [1, 1, 1]} : vector<2x10x32xf32> to vector<2x10x4xf32>
    %199 = arith.truncf %198 : vector<2x10x4xf32> to vector<2x10x4xbf16>
    %200 = vector.extract_strided_slice %48 {offsets = [0, 0, 28], sizes = [2, 10, 4], strides = [1, 1, 1]} : vector<2x10x32xf32> to vector<2x10x4xf32>
    %201 = arith.truncf %200 : vector<2x10x4xf32> to vector<2x10x4xbf16>
    "tpu.trace_start"() <{level = 10 : i32, message = "bqd,bkd->bqk"}> : () -> ()
    %cst_69 = arith.constant dense<0.000000e+00> : vector<2x16x10xf32>
    %202 = tpu.matmul %197, %199, %cst_69 {dimension_numbers = #tpu.dot_dimension_numbers<[2], [2], [1], [1], [0, 0, 0, 1, 1, 1], [0], [0]>} : vector<2x16x4xbf16>, vector<2x10x4xbf16>, vector<2x16x10xf32> -> vector<2x16x10xf32>
    "tpu.trace_stop"() : () -> ()
    %cst_70 = arith.constant 5.000000e-01 : f32
    %203 = vector.broadcast %cst_70 : f32 to vector<2x16x10xf32>
    %204 = arith.mulf %202, %203 : vector<2x16x10xf32>
    %cst_71 = arith.constant dense<0xFF800000> : vector<2x16xf32>
    %205 = vector.multi_reduction <maximumf>, %204, %cst_71 [2] : vector<2x16x10xf32> to vector<2x16xf32>
    %206 = vector.shape_cast %205 : vector<2x16xf32> to vector<2x16x1xf32>
    %207 = vector.broadcast %206 : vector<2x16x1xf32> to vector<2x16x10xf32>
    %208 = arith.subf %204, %207 : vector<2x16x10xf32>
    %209 = math.exp %208 : vector<2x16x10xf32>
    %cst_72 = arith.constant dense<0.000000e+00> : vector<2x16xf32>
    %210 = vector.multi_reduction <add>, %209, %cst_72 [2] : vector<2x16x10xf32> to vector<2x16xf32>
    %211 = vector.shape_cast %210 : vector<2x16xf32> to vector<2x16x1xf32>
    %212 = tpu.reciprocal %211 {approx = true} : vector<2x16x1xf32> -> vector<2x16x1xf32>
    %213 = vector.broadcast %212 : vector<2x16x1xf32> to vector<2x16x10xf32>
    %214 = arith.mulf %209, %213 : vector<2x16x10xf32>
    %215 = arith.truncf %214 : vector<2x16x10xf32> to vector<2x16x10xbf16>
    "tpu.trace_start"() <{level = 10 : i32, message = "bqk,bkd->bqd"}> : () -> ()
    %cst_73 = arith.constant dense<0.000000e+00> : vector<2x16x4xf32>
    %216 = tpu.matmul %215, %201, %cst_73 {dimension_numbers = #tpu.dot_dimension_numbers<[2], [1], [1], [2], [0, 0, 0, 1, 1, 2], [0], [0]>} : vector<2x16x10xbf16>, vector<2x10x4xbf16>, vector<2x16x4xf32> -> vector<2x16x4xf32>
    "tpu.trace_stop"() : () -> ()
    %217 = tpu.concatenate %69, %90, %111, %132, %153, %174, %195, %216 in 2 : vector<2x16x4xf32>, vector<2x16x4xf32>, vector<2x16x4xf32>, vector<2x16x4xf32>, vector<2x16x4xf32>, vector<2x16x4xf32>, vector<2x16x4xf32>, vector<2x16x4xf32> -> vector<2x16x32xf32>
    %218 = vector.shape_cast %217 : vector<2x16x32xf32> to vector<32x32xf32>
    %219 = arith.truncf %218 : vector<32x32xf32> to vector<32x32xbf16>
    %c0_74 = arith.constant 0 : index
    %c0_75 = arith.constant 0 : index
    %220 = vector.load %arg14[%c0_74, %c0_75] : memref<32x32xbf16, #tpu.memory_space<vmem>>, vector<32x32xbf16>
    %cst_76 = arith.constant dense<0.000000e+00> : vector<32x32xf32>
    %221 = tpu.matmul %219, %220, %cst_76 {dimension_numbers = #tpu.dot_dimension_numbers<[1], [0], [0], [1], [0, 0, 1, 1], [], []>} : vector<32x32xbf16>, vector<32x32xbf16>, vector<32x32xf32> -> vector<32x32xf32>
    %c0_77 = arith.constant 0 : index
    %c0_78 = arith.constant 0 : index
    %222 = vector.load %arg15[%c0_77, %c0_78] : memref<1x32xf32, #tpu.memory_space<vmem>>, vector<1x32xf32>
    %223 = vector.broadcast %222 : vector<1x32xf32> to vector<32x32xf32>
    %224 = arith.addf %221, %223 : vector<32x32xf32>
    %225 = arith.truncf %224 : vector<32x32xf32> to vector<32x32xbf16>
    %c0_79 = arith.constant 0 : index
    %c0_80 = arith.constant 0 : index
    %226 = vector.load %arg16[%c0_79, %c0_80] : memref<32x10xbf16, #tpu.memory_space<vmem>>, vector<32x10xbf16>
    %cst_81 = arith.constant dense<0.000000e+00> : vector<32x10xf32>
    %227 = tpu.matmul %225, %226, %cst_81 {dimension_numbers = #tpu.dot_dimension_numbers<[1], [0], [0], [1], [0, 0, 1, 1], [], []>} : vector<32x32xbf16>, vector<32x10xbf16>, vector<32x10xf32> -> vector<32x10xf32>
    %228 = vector.shape_cast %227 : vector<32x10xf32> to vector<2x16x10xf32>
    %c0_82 = arith.constant 0 : index
    %c0_83 = arith.constant 0 : index
    %229 = vector.load %arg17[%c0_82, %c0_83] : memref<16x10xf32, #tpu.memory_space<vmem>>, vector<16x10xf32>
    %230 = vector.shape_cast %229 : vector<16x10xf32> to vector<1x16x10xf32>
    %231 = vector.broadcast %230 : vector<1x16x10xf32> to vector<2x16x10xf32>
    %232 = arith.mulf %231, %228 : vector<2x16x10xf32>
    %cst_84 = arith.constant dense<0.000000e+00> : vector<2x10xf32>
    %233 = vector.multi_reduction <add>, %232, %cst_84 [1] : vector<2x16x10xf32> to vector<2x10xf32>
    %c0_85 = arith.constant 0 : index
    %c0_86 = arith.constant 0 : index
    %234 = vector.load %arg18[%c0_85, %c0_86] : memref<1x10xf32, #tpu.memory_space<vmem>>, vector<1x10xf32>
    %235 = vector.broadcast %234 : vector<1x10xf32> to vector<2x10xf32>
    %236 = arith.addf %233, %235 : vector<2x10xf32>
    %c0_87 = arith.constant 0 : index
    %c0_88 = arith.constant 0 : index
    %237 = vector.load %arg19[%c0_87, %c0_88] : memref<2x10xf32, #tpu.memory_space<vmem>>, vector<2x10xf32>
    tpu.vector_store %arg19[%c0_87, %c0_88], %236 {strides = array<i32>} : memref<2x10xf32, #tpu.memory_space<vmem>>, vector<2x10xf32>,
    return
  }
  func.func @transform_0(%arg0: i32) -> (i32, i32, i32) {
    %c0_i32 = arith.constant 0 : i32
    %c0_i32_0 = arith.constant 0 : i32
    %c0_i32_1 = arith.constant 0 : i32
    return %arg0, %c0_i32, %c0_i32_0 : i32, i32, i32
  }
  func.func @transform_1(%arg0: i32) -> (i32, i32, i32) {
    %c0_i32 = arith.constant 0 : i32
    %c0_i32_0 = arith.constant 0 : i32
    %c0_i32_1 = arith.constant 0 : i32
    return %arg0, %c0_i32, %c0_i32_0 : i32, i32, i32
  }
  func.func @transform_2(%arg0: i32) -> (i32, i32) {
    %c0_i32 = arith.constant 0 : i32
    %c0_i32_0 = arith.constant 0 : i32
    return %arg0, %c0_i32 : i32, i32
  }
  func.func @transform_3(%arg0: i32) -> (i32, i32) {
    %c0_i32 = arith.constant 0 : i32
    %c0_i32_0 = arith.constant 0 : i32
    %c0_i32_1 = arith.constant 0 : i32
    return %c0_i32, %c0_i32_0 : i32, i32
  }
  func.func @transform_4(%arg0: i32) -> (i32, i32) {
    %c0_i32 = arith.constant 0 : i32
    %c0_i32_0 = arith.constant 0 : i32
    %c0_i32_1 = arith.constant 0 : i32
    return %c0_i32, %c0_i32_0 : i32, i32
  }
  func.func @transform_5(%arg0: i32) -> (i32, i32) {
    %c0_i32 = arith.constant 0 : i32
    %c0_i32_0 = arith.constant 0 : i32
    %c0_i32_1 = arith.constant 0 : i32
    return %c0_i32, %c0_i32_0 : i32, i32
  }
  func.func @transform_6(%arg0: i32) -> (i32, i32) {
    %c0_i32 = arith.constant 0 : i32
    %c0_i32_0 = arith.constant 0 : i32
    %c0_i32_1 = arith.constant 0 : i32
    return %c0_i32, %c0_i32_0 : i32, i32
  }
  func.func @transform_7(%arg0: i32) -> (i32, i32) {
    %c0_i32 = arith.constant 0 : i32
    %c0_i32_0 = arith.constant 0 : i32
    %c0_i32_1 = arith.constant 0 : i32
    return %c0_i32, %c0_i32_0 : i32, i32
  }
  func.func @transform_8(%arg0: i32) -> (i32, i32) {
    %c0_i32 = arith.constant 0 : i32
    %c0_i32_0 = arith.constant 0 : i32
    %c0_i32_1 = arith.constant 0 : i32
    return %c0_i32, %c0_i32_0 : i32, i32
  }
  func.func @transform_9(%arg0: i32) -> (i32, i32) {
    %c0_i32 = arith.constant 0 : i32
    %c0_i32_0 = arith.constant 0 : i32
    %c0_i32_1 = arith.constant 0 : i32
    return %c0_i32, %c0_i32_0 : i32, i32
  }
  func.func @transform_10(%arg0: i32) -> (i32, i32) {
    %c0_i32 = arith.constant 0 : i32
    %c0_i32_0 = arith.constant 0 : i32
    %c0_i32_1 = arith.constant 0 : i32
    return %c0_i32, %c0_i32_0 : i32, i32
  }
  func.func @transform_11(%arg0: i32) -> (i32, i32) {
    %c0_i32 = arith.constant 0 : i32
    %c0_i32_0 = arith.constant 0 : i32
    %c0_i32_1 = arith.constant 0 : i32
    return %c0_i32, %c0_i32_0 : i32, i32
  }
  func.func @transform_12(%arg0: i32) -> (i32, i32) {
    %c0_i32 = arith.constant 0 : i32
    %c0_i32_0 = arith.constant 0 : i32
    %c0_i32_1 = arith.constant 0 : i32
    return %c0_i32, %c0_i32_0 : i32, i32
  }
  func.func @transform_13(%arg0: i32) -> (i32, i32) {
    %c0_i32 = arith.constant 0 : i32
    %c0_i32_0 = arith.constant 0 : i32
    %c0_i32_1 = arith.constant 0 : i32
    return %c0_i32, %c0_i32_0 : i32, i32
  }
  func.func @transform_14(%arg0: i32) -> (i32, i32) {
    %c0_i32 = arith.constant 0 : i32
    %c0_i32_0 = arith.constant 0 : i32
    %c0_i32_1 = arith.constant 0 : i32
    return %c0_i32, %c0_i32_0 : i32, i32
  }
  func.func @transform_15(%arg0: i32) -> (i32, i32) {
    %c0_i32 = arith.constant 0 : i32
    %c0_i32_0 = arith.constant 0 : i32
    %c0_i32_1 = arith.constant 0 : i32
    return %c0_i32, %c0_i32_0 : i32, i32
  }
  func.func @transform_16(%arg0: i32) -> (i32, i32) {
    %c0_i32 = arith.constant 0 : i32
    %c0_i32_0 = arith.constant 0 : i32
    %c0_i32_1 = arith.constant 0 : i32
    return %c0_i32, %c0_i32_0 : i32, i32
  }
  func.func @transform_17(%arg0: i32) -> (i32, i32) {
    %c0_i32 = arith.constant 0 : i32
    %c0_i32_0 = arith.constant 0 : i32
    %c0_i32_1 = arith.constant 0 : i32
    return %c0_i32, %c0_i32_0 : i32, i32
  }
  func.func @transform_18(%arg0: i32) -> (i32, i32) {
    %c0_i32 = arith.constant 0 : i32
    %c0_i32_0 = arith.constant 0 : i32
    return %arg0, %c0_i32 : i32, i32
  }
}

</mosaic_0001>

<llo_original>
// kernel: msqnet_forward.4
$region0: #{msqnet_forward.4}
  #allocation0 [shape = 'u32[]', space=smem, size = 0x4, offset = 0x4, fixed_abs, tag = 'smem constant byte address 0x4 - core index']
  #allocation1 [shape = 'u32[144,128]{1,0:T(1,128)}', space=vmem, size = 0x12000, scoped, tag = 'internal scratch']
  #allocation2 [shape = 'f32[128,64]{1,0:T(8,128)}', space=vmem, size = 0x10000, scoped, tag = 'scratch operand']
  %s0 = inlined_call_operand.hbm [shape: bf16[128,192], index: 0, kind: input, shape index: {}]
  %s1 = inlined_call_operand.hbm [shape: bf16[192,64], index: 1, kind: input, shape index: {}]
  %s2 = inlined_call_operand.hbm [shape: bf16[128,64], index: 2, kind: output, shape index: {}]
  %s3 = sld [smem:[#allocation0]]
  $region34: #{msqnet_forward.4} parent=0
    _
  %s5 = ssub.s32 1, %s3
  %s6 = scalar_select 0, %s5, %s3
  $region1: #{msqnet_forward.4} parent=0
    #allocation3 [shape = 'u8[65536]{0}', space=vmem, size = 0x10000, scoped, tag = 'input window, operand 0, single buffered']
    #allocation4 [shape = 's32[1]{0}', space=sflag, size = 0x4, scoped, tag = 'scoped memory for msqnet_forward.4']
    #allocation5 [shape = 's32[1]{0}', space=sflag, size = 0x4, scoped, tag = 'scoped memory for msqnet_forward.4']
    #allocation6 [shape = 'u8[49152]{0}', space=vmem, size = 0xc000, scoped, tag = 'input window, operand 1, single buffered']
    #allocation7 [shape = 's32[1]{0}', space=sflag, size = 0x4, scoped, tag = 'scoped memory for msqnet_forward.4']
    #allocation8 [shape = 'u8[32768]{0}', space=vmem, size = 0x8000, scoped, tag = 'output window, operand 0, single buffered']
    %7 = vsyncpa [#allocation4], 0
    %8 = vsyncpa [#allocation7], 0
    %9 = vsyncpa [#allocation5], 0
    // Predicated region
    $region2: #{msqnet_forward.4} parent=1 // pred_check
      _
    $region3: #{msqnet_forward.4} parent=1 // pred_check_branch
      %11 = sbr.rel (0) target = $region5
    $region4: #{msqnet_forward.4} parent=1 // pred_region
      %s13 = ssub.s32 2048, 2048
      %14 = vsyncadd [#allocation4], %s13
      %s15 = sshll.u32 [#allocation3], 4
      %s16 = int_to_ptr.vmem [resolvable:$true] %s15
      %21 = dma.hbm_to_vmem [thread:$0]  %s0, 2048, %s16, [#allocation4], 128, 128, 8
    $region5: #{msqnet_forward.4} parent=1 // pred_fallthru
      _
    // Predicated region
    $region6: #{msqnet_forward.4} parent=1 // pred_check
      _
    $region7: #{msqnet_forward.4} parent=1 // pred_check_branch
      %23 = sbr.rel (0) target = $region9
    $region8: #{msqnet_forward.4} parent=1 // pred_region
      %s25 = ssub.s32 1536, 1536
      %26 = vsyncadd [#allocation7], %s25
      %s27 = sshll.u32 [#allocation6], 4
      %s28 = int_to_ptr.vmem [resolvable:$true] %s27
      %33 = dma.hbm_to_vmem [thread:$0]  %s1, 1536, %s28, [#allocation7], 64, 64, 4
    $region9: #{msqnet_forward.4} parent=1 // pred_fallthru
      _
    // Predicated region
    $region10: #{msqnet_forward.4} parent=1 // pred_check
      _
    $region11: #{msqnet_forward.4} parent=1 // pred_check_branch
      %35 = sbr.rel (0) target = $region13
    $region12: #{msqnet_forward.4} parent=1 // pred_region
      %36 = dma.done [#allocation4], 2048
    $region13: #{msqnet_forward.4} parent=1 // pred_fallthru
      _
    // Predicated region
    $region14: #{msqnet_forward.4} parent=1 // pred_check
      _
    $region15: #{msqnet_forward.4} parent=1 // pred_check_branch
      %38 = sbr.rel (0) target = $region17
    $region16: #{msqnet_forward.4} parent=1 // pred_region
      %39 = dma.done [#allocation7], 1536
    $region17: #{msqnet_forward.4} parent=1 // pred_fallthru
      _
    %p41 = scmp.eq.s32.totalorder 0, 0
    // Predicated region
    $region18: #{msqnet_forward.4} parent=1 // pred_check
      %p42 = pneg %p41
    $region19: #{msqnet_forward.4} parent=1 // pred_check_branch
      %44 = sbr.rel (%p42) target = $region21
    $region20: #{msqnet_forward.4} parent=1 // pred_region
      %vm45 = vcmask 523264
      %46 = vst.msk [vmem:[#allocation2] sm:$0xff] %vm45, 0.0
      %47 = vst.msk [vmem:[#allocation2 + $0x8] sm:$0xff] %vm45, 0.0
      %48 = vst.msk [vmem:[#allocation2 + $0x10] sm:$0xff] %vm45, 0.0
      %49 = vst.msk [vmem:[#allocation2 + $0x18] sm:$0xff] %vm45, 0.0
      %50 = vst.msk [vmem:[#allocation2 + $0x20] sm:$0xff] %vm45, 0.0
      %51 = vst.msk [vmem:[#allocation2 + $0x28] sm:$0xff] %vm45, 0.0
      %52 = vst.msk [vmem:[#allocation2 + $0x30] sm:$0xff] %vm45, 0.0
      %53 = vst.msk [vmem:[#allocation2 + $0x38] sm:$0xff] %vm45, 0.0
      %54 = vst.msk [vmem:[#allocation2 + $0x40] sm:$0xff] %vm45, 0.0
      %55 = vst.msk [vmem:[#allocation2 + $0x48] sm:$0xff] %vm45, 0.0
      %56 = vst.msk [vmem:[#allocation2 + $0x50] sm:$0xff] %vm45, 0.0
      %57 = vst.msk [vmem:[#allocation2 + $0x58] sm:$0xff] %vm45, 0.0
      %58 = vst.msk [vmem:[#allocation2 + $0x60] sm:$0xff] %vm45, 0.0
      %59 = vst.msk [vmem:[#allocation2 + $0x68] sm:$0xff] %vm45, 0.0
      %60 = vst.msk [vmem:[#allocation2 + $0x70] sm:$0xff] %vm45, 0.0
      %61 = vst.msk [vmem:[#allocation2 + $0x78] sm:$0xff] %vm45, 0.0
    $region21: #{msqnet_forward.4} parent=1 // pred_fallthru
      _
    %v62 = vld [vmem:[#allocation2] sm:$0xff]
    %v63 = vld [vmem:[#allocation2 + $0x8] sm:$0xff]
    %v64 = vld [vmem:[#allocation2 + $0x10] sm:$0xff]
    %v65 = vld [vmem:[#allocation2 + $0x18] sm:$0xff]
    %v66 = vld [vmem:[#allocation2 + $0x20] sm:$0xff]
    %v67 = vld [vmem:[#allocation2 + $0x28] sm:$0xff]
    %v68 = vld [vmem:[#allocation2 + $0x30] sm:$0xff]
    %v69 = vld [vmem:[#allocation2 + $0x38] sm:$0xff]
    %v70 = vld [vmem:[#allocation2 + $0x40] sm:$0xff]
    %v71 = vld [vmem:[#allocation2 + $0x48] sm:$0xff]
    %v72 = vld [vmem:[#allocation2 + $0x50] sm:$0xff]
    %v73 = vld [vmem:[#allocation2 + $0x58] sm:$0xff]
    %v74 = vld [vmem:[#allocation2 + $0x60] sm:$0xff]
    %v75 = vld [vmem:[#allocation2 + $0x68] sm:$0xff]
    %v76 = vld [vmem:[#allocation2 + $0x70] sm:$0xff]
    %v77 = vld [vmem:[#allocation2 + $0x78] sm:$0xff]
    %v78 = vld [vmem:[#allocation3] sm:$0xff]
    %v79 = vld [vmem:[#allocation3 + $0x8] sm:$0xff]
    %v80 = vld [vmem:[#allocation3 + $0x10] sm:$0xff]
    %v81 = vld [vmem:[#allocation3 + $0x18] sm:$0xff]
    %v82 = vld [vmem:[#allocation3 + $0x20] sm:$0xff]
    %v83 = vld [vmem:[#allocation3 + $0x28] sm:$0xff]
    %v84 = vld [vmem:[#allocation3 + $0x30] sm:$0xff]
    %v85 = vld [vmem:[#allocation3 + $0x38] sm:$0xff]
    %v86 = vld [vmem:[#allocation3 + $0x40] sm:$0xff]
    %v87 = vld [vmem:[#allocation3 + $0x48] sm:$0xff]
    %v88 = vld [vmem:[#allocation3 + $0x50] sm:$0xff]
    %v89 = vld [vmem:[#allocation3 + $0x58] sm:$0xff]
    %v90 = vld [vmem:[#allocation3 + $0x60] sm:$0xff]
    %v91 = vld [vmem:[#allocation3 + $0x68] sm:$0xff]
    %v92 = vld [vmem:[#allocation3 + $0x70] sm:$0xff]
    %v93 = vld [vmem:[#allocation3 + $0x78] sm:$0xff]
    %v94 = vld [vmem:[#allocation6] sm:$0xf]
    %v95 = vld [vmem:[#allocation6 + $0x4] sm:$0xf]
    %v96 = vld [vmem:[#allocation6 + $0x8] sm:$0xf]
    %v97 = vld [vmem:[#allocation6 + $0xc] sm:$0xf]
    %v98 = vld [vmem:[#allocation6 + $0x10] sm:$0xf]
    %v99 = vld [vmem:[#allocation6 + $0x14] sm:$0xf]
    %v100 = vld [vmem:[#allocation6 + $0x18] sm:$0xf]
    %v101 = vld [vmem:[#allocation6 + $0x1c] sm:$0xf]
    %v102 = vld [vmem:[#allocation6 + $0x20] sm:$0xf]
    %v103 = vld [vmem:[#allocation6 + $0x24] sm:$0xf]
    %v104 = vld [vmem:[#allocation6 + $0x28] sm:$0xf]
    %v105 = vld [vmem:[#allocation6 + $0x2c] sm:$0xf]
    %v106 = vld [vmem:[#allocation6 + $0x30] sm:$0xf]
    %v107 = vld [vmem:[#allocation6 + $0x34] sm:$0xf]
    %v108 = vld [vmem:[#allocation6 + $0x38] sm:$0xf]
    %v109 = vld [vmem:[#allocation6 + $0x3c] sm:$0xf]
    %v110 = vld [vmem:[#allocation6 + $0x40] sm:$0xf]
    %v111 = vld [vmem:[#allocation6 + $0x44] sm:$0xf]
    %v112 = vld [vmem:[#allocation6 + $0x48] sm:$0xf]
    %v113 = vld [vmem:[#allocation6 + $0x4c] sm:$0xf]
    %v114 = vld [vmem:[#allocation6 + $0x50] sm:$0xf]
    %v115 = vld [vmem:[#allocation6 + $0x54] sm:$0xf]
    %v116 = vld [vmem:[#allocation6 + $0x58] sm:$0xf]
    %v117 = vld [vmem:[#allocation6 + $0x5c] sm:$0xf]
    %v134 = vunpack.c.l.b16 %v78
    %v135 = vunpack.c.h.b16 %v78
    %v136 = vunpack.c.l.b16 %v79
    %v137 = vunpack.c.h.b16 %v79
    %v138 = vunpack.c.l.b16 %v80
    %v139 = vunpack.c.h.b16 %v80
    %v140 = vunpack.c.l.b16 %v81
    %v141 = vunpack.c.h.b16 %v81
    %v142 = vunpack.c.l.b16 %v82
    %v143 = vunpack.c.h.b16 %v82
    %v144 = vunpack.c.l.b16 %v83
    %v145 = vunpack.c.h.b16 %v83
    %v146 = vunpack.c.l.b16 %v84
    %v147 = vunpack.c.h.b16 %v84
    %v148 = vunpack.c.l.b16 %v85
    %v149 = vunpack.c.h.b16 %v85
    %v150 = vunpack.c.l.b16 %v86
    %v151 = vunpack.c.h.b16 %v86
    %v152 = vunpack.c.l.b16 %v87
    %v153 = vunpack.c.h.b16 %v87
    %v154 = vunpack.c.l.b16 %v88
    %v155 = vunpack.c.h.b16 %v88
    %v156 = vunpack.c.l.b16 %v89
    %v157 = vunpack.c.h.b16 %v89
    %v158 = vunpack.c.l.b16 %v90
    %v159 = vunpack.c.h.b16 %v90
    %v160 = vunpack.c.l.b16 %v91
    %v161 = vunpack.c.h.b16 %v91
    %v162 = vunpack.c.l.b16 %v92
    %v163 = vunpack.c.h.b16 %v92
    %v164 = vunpack.c.l.b16 %v93
    %v165 = vunpack.c.h.b16 %v93
    %v166 = vpack.c.b16 %v136, %v134
    %v167 = vpack.c.b16 %v137, %v135
    %v168 = vpack.c.b16 %v140, %v138
    %v169 = vpack.c.b16 %v141, %v139
    %v170 = vpack.c.b16 %v144, %v142
    %v171 = vpack.c.b16 %v145, %v143
    %v172 = vpack.c.b16 %v148, %v146
    %v173 = vpack.c.b16 %v149, %v147
    %v174 = vpack.c.b16 %v152, %v150
    %v175 = vpack.c.b16 %v153, %v151
    %v176 = vpack.c.b16 %v156, %v154
    %v177 = vpack.c.b16 %v157, %v155
    %v178 = vpack.c.b16 %v160, %v158
    %v179 = vpack.c.b16 %v161, %v159
    %v180 = vpack.c.b16 %v164, %v162
    %v181 = vpack.c.b16 %v165, %v163
    %v214 = vunpack.c.l.b16 %v94
    %v215 = vunpack.c.l.b16 %v95
    %v216 = vunpack.c.l.b16 %v96
    %v217 = vunpack.c.l.b16 %v97
    %v218 = vunpack.c.l.b16 %v98
    %v219 = vunpack.c.l.b16 %v99
    %v220 = vunpack.c.l.b16 %v100
    %v221 = vunpack.c.l.b16 %v101
    %v222 = vunpack.c.l.b16 %v102
    %v223 = vunpack.c.l.b16 %v103
    %v224 = vunpack.c.l.b16 %v104
    %v225 = vunpack.c.l.b16 %v105
    %v226 = vunpack.c.l.b16 %v106
    %v227 = vunpack.c.l.b16 %v107
    %v228 = vunpack.c.l.b16 %v108
    %v229 = vunpack.c.l.b16 %v109
    %v230 = vunpack.c.l.b16 %v110
    %v231 = vunpack.c.l.b16 %v111
    %v232 = vunpack.c.l.b16 %v112
    %v233 = vunpack.c.l.b16 %v113
    %v234 = vunpack.c.l.b16 %v114
    %v235 = vunpack.c.l.b16 %v115
    %v236 = vunpack.c.l.b16 %v116
    %v237 = vunpack.c.l.b16 %v117
    %v238 = vpack.c.b16 %v215, %v214
    %v239 = vpack.c.b16 %v217, %v216
    %v240 = vpack.c.b16 %v219, %v218
    %v241 = vpack.c.b16 %v221, %v220
    %v242 = vpack.c.b16 %v223, %v222
    %v243 = vpack.c.b16 %v225, %v224
    %v244 = vpack.c.b16 %v227, %v226
    %v245 = vpack.c.b16 %v229, %v228
    %v246 = vpack.c.b16 %v231, %v230
    %v247 = vpack.c.b16 %v233, %v232
    %v248 = vpack.c.b16 %v235, %v234
    %v249 = vpack.c.b16 %v237, %v236
    %vm262 = vcmask 523264
    %v264 = vsel %vm262, %v167, 0
    %v267 = vsel %vm262, %v169, 0
    %v270 = vsel %vm262, %v171, 0
    %v273 = vsel %vm262, %v173, 0
    %v276 = vsel %vm262, %v175, 0
    %v279 = vsel %vm262, %v177, 0
    %v282 = vsel %vm262, %v179, 0
    %v285 = vsel %vm262, %v181, 0
    %287 = vmatprep.subr.bf16.mxu0 0
    %288 = vmatpush1.bf16.msra.mxu0 %v238
    %289 = vmatprep.subr.bf16.mxu0 0
    %290 = vmatpush1.bf16.msra.mxu0 %v239
    %291 = vmatprep.subr.bf16.mxu0 0
    %292 = vmatpush1.bf16.msra.mxu0 %v240
    %293 = vmatprep.subr.bf16.mxu0 0
    %294 = vmatpush1.bf16.msra.mxu0 %v241
    %295 = vmatprep.subr.bf16.mxu0 0
    %296 = vmatpush1.bf16.msra.mxu0 %v242
    %297 = vmatprep.subr.bf16.mxu0 0
    %298 = vmatpush1.bf16.msra.mxu0 %v243
    %299 = vmatprep.subr.bf16.mxu0 0
    %300 = vmatpush1.bf16.msra.mxu0 %v244
    %301 = vmatprep.subr.bf16.mxu0 0
    %302 = vmatpush1.bf16.msra.mxu0 %v245
    %303 = vmatprep.subr.bf16.mxu0 0
    %304 = vmatpush1.bf16.msra.mxu0 %v246
    %305 = vmatprep.subr.bf16.mxu0 0
    %306 = vmatpush1.bf16.msra.mxu0 %v247
    %307 = vmatprep.subr.bf16.mxu0 0
    %308 = vmatpush1.bf16.msra.mxu0 %v248
    %309 = vmatprep.subr.bf16.mxu0 0
    %310 = vmatpush1.bf16.msra.mxu0 %v249
    %311 = vmatprep.subr.bf16.mxu0 0
    %312 = vmatpush1.bf16.msra.mxu0 0
    %313 = vmatprep.subr.bf16.mxu0 0
    %314 = vmatpush1.bf16.msra.mxu0 0
    %315 = vmatprep.subr.bf16.mxu0 0
    %316 = vmatpush1.bf16.msra.mxu0 0
    %317 = vmatprep.subr.bf16.mxu0 0
    %318 = vmatpush1.bf16.msra.mxu0 0
    %319 = vmatprep.mubr.bf16.mxu0 %v264
    %320 = vmatmul.mubr.bf16.gmra.mrb[0].mxu0 %v166
    %v321 = vpop.f32.mrb[0].mxu0
    %v322 = vadd.f32 0.0, %v321
    %v323 = vpop.f32.mrb[0].mxu0
    %v324 = vpop.f32.mrb[0].mxu0
    %v325 = vadd.f32 0.0, %v324
    %v326 = vpop.f32.mrb[0].mxu0
    %327 = vmatprep.mubr.bf16.mxu0 %v267
    %328 = vmatmul.mubr.bf16.gmra.mrb[0].mxu0 %v168
    %v329 = vpop.f32.mrb[0].mxu0
    %v330 = vadd.f32 0.0, %v329
    %v331 = vpop.f32.mrb[0].mxu0
    %v332 = vpop.f32.mrb[0].mxu0
    %v333 = vadd.f32 0.0, %v332
    %v334 = vpop.f32.mrb[0].mxu0
    %335 = vmatprep.mubr.bf16.mxu0 %v270
    %336 = vmatmul.mubr.bf16.gmra.mrb[0].mxu0 %v170
    %v337 = vpop.f32.mrb[0].mxu0
    %v338 = vadd.f32 0.0, %v337
    %v339 = vpop.f32.mrb[0].mxu0
    %v340 = vpop.f32.mrb[0].mxu0
    %v341 = vadd.f32 0.0, %v340
    %v342 = vpop.f32.mrb[0].mxu0
    %343 = vmatprep.mubr.bf16.mxu0 %v273
    %344 = vmatmul.mubr.bf16.gmra.mrb[0].mxu0 %v172
    %v345 = vpop.f32.mrb[0].mxu0
    %v346 = vadd.f32 0.0, %v345
    %v347 = vpop.f32.mrb[0].mxu0
    %v348 = vpop.f32.mrb[0].mxu0
    %v349 = vadd.f32 0.0, %v348
    %v350 = vpop.f32.mrb[0].mxu0
    %351 = vmatprep.mubr.bf16.mxu0 %v276
    %352 = vmatmul.mubr.bf16.gmra.mrb[0].mxu0 %v174
    %v353 = vpop.f32.mrb[0].mxu0
    %v354 = vadd.f32 0.0, %v353
    %v355 = vpop.f32.mrb[0].mxu0
    %v356 = vpop.f32.mrb[0].mxu0
    %v357 = vadd.f32 0.0, %v356
    %v358 = vpop.f32.mrb[0].mxu0
    %359 = vmatprep.mubr.bf16.mxu0 %v279
    %360 = vmatmul.mubr.bf16.gmra.mrb[0].mxu0 %v176
    %v361 = vpop.f32.mrb[0].mxu0
    %v362 = vadd.f32 0.0, %v361
    %v363 = vpop.f32.mrb[0].mxu0
    %v364 = vpop.f32.mrb[0].mxu0
    %v365 = vadd.f32 0.0, %v364
    %v366 = vpop.f32.mrb[0].mxu0
    %367 = vmatprep.mubr.bf16.mxu0 %v282
    %368 = vmatmul.mubr.bf16.gmra.mrb[0].mxu0 %v178
    %v369 = vpop.f32.mrb[0].mxu0
    %v370 = vadd.f32 0.0, %v369
    %v371 = vpop.f32.mrb[0].mxu0
    %v372 = vpop.f32.mrb[0].mxu0
    %v373 = vadd.f32 0.0, %v372
    %v374 = vpop.f32.mrb[0].mxu0
    %375 = vmatprep.mubr.bf16.mxu0 %v285
    %376 = vmatmul.mubr.bf16.gmra.mrb[0].mxu0 %v180
    %v377 = vpop.f32.mrb[0].mxu0
    %v378 = vadd.f32 0.0, %v377
    %v379 = vpop.f32.mrb[0].mxu0
    %v380 = vpop.f32.mrb[0].mxu0
    %v381 = vadd.f32 0.0, %v380
    %v382 = vpop.f32.mrb[0].mxu0
    %383 = vdwg.mxu0
    %v384 = vadd.f32 %v62, %v322
    %v385 = vadd.f32 %v63, %v325
    %v386 = vadd.f32 %v64, %v330
    %v387 = vadd.f32 %v65, %v333
    %v388 = vadd.f32 %v66, %v338
    %v389 = vadd.f32 %v67, %v341
    %v390 = vadd.f32 %v68, %v346
    %v391 = vadd.f32 %v69, %v349
    %v392 = vadd.f32 %v70, %v354
    %v393 = vadd.f32 %v71, %v357
    %v394 = vadd.f32 %v72, %v362
    %v395 = vadd.f32 %v73, %v365
    %v396 = vadd.f32 %v74, %v370
    %v397 = vadd.f32 %v75, %v373
    %v398 = vadd.f32 %v76, %v378
    %v399 = vadd.f32 %v77, %v381
    %400 = vst.msk [vmem:[#allocation2] sm:$0xff] %vm262, %v384
    %401 = vst.msk [vmem:[#allocation2 + $0x8] sm:$0xff] %vm262, %v385
    %402 = vst.msk [vmem:[#allocation2 + $0x10] sm:$0xff] %vm262, %v386
    %403 = vst.msk [vmem:[#allocation2 + $0x18] sm:$0xff] %vm262, %v387
    %404 = vst.msk [vmem:[#allocation2 + $0x20] sm:$0xff] %vm262, %v388
    %405 = vst.msk [vmem:[#allocation2 + $0x28] sm:$0xff] %vm262, %v389
    %406 = vst.msk [vmem:[#allocation2 + $0x30] sm:$0xff] %vm262, %v390
    %407 = vst.msk [vmem:[#allocation2 + $0x38] sm:$0xff] %vm262, %v391
    %408 = vst.msk [vmem:[#allocation2 + $0x40] sm:$0xff] %vm262, %v392
    %409 = vst.msk [vmem:[#allocation2 + $0x48] sm:$0xff] %vm262, %v393
    %410 = vst.msk [vmem:[#allocation2 + $0x50] sm:$0xff] %vm262, %v394
    %411 = vst.msk [vmem:[#allocation2 + $0x58] sm:$0xff] %vm262, %v395
    %412 = vst.msk [vmem:[#allocation2 + $0x60] sm:$0xff] %vm262, %v396
    %413 = vst.msk [vmem:[#allocation2 + $0x68] sm:$0xff] %vm262, %v397
    %414 = vst.msk [vmem:[#allocation2 + $0x70] sm:$0xff] %vm262, %v398
    %415 = vst.msk [vmem:[#allocation2 + $0x78] sm:$0xff] %vm262, %v399
    // Predicated region
    $region22: #{msqnet_forward.4} parent=1 // pred_check
      %p416 = pneg %p41
    $region23: #{msqnet_forward.4} parent=1 // pred_check_branch
      %418 = sbr.rel (%p416) target = $region25
    $region24: #{msqnet_forward.4} parent=1 // pred_region
      %v419 = vld [vmem:[#allocation2] sm:$0xff]
      %v420 = vld [vmem:[#allocation2 + $0x8] sm:$0xff]
      %v421 = vld [vmem:[#allocation2 + $0x10] sm:$0xff]
      %v422 = vld [vmem:[#allocation2 + $0x18] sm:$0xff]
      %v423 = vld [vmem:[#allocation2 + $0x20] sm:$0xff]
      %v424 = vld [vmem:[#allocation2 + $0x28] sm:$0xff]
      %v425 = vld [vmem:[#allocation2 + $0x30] sm:$0xff]
      %v426 = vld [vmem:[#allocation2 + $0x38] sm:$0xff]
      %v427 = vld [vmem:[#allocation2 + $0x40] sm:$0xff]
      %v428 = vld [vmem:[#allocation2 + $0x48] sm:$0xff]
      %v429 = vld [vmem:[#allocation2 + $0x50] sm:$0xff]
      %v430 = vld [vmem:[#allocation2 + $0x58] sm:$0xff]
      %v431 = vld [vmem:[#allocation2 + $0x60] sm:$0xff]
      %v432 = vld [vmem:[#allocation2 + $0x68] sm:$0xff]
      %v433 = vld [vmem:[#allocation2 + $0x70] sm:$0xff]
      %v434 = vld [vmem:[#allocation2 + $0x78] sm:$0xff]
      %v435 = vpack.c.bf16 %v420, %v419
      %v436 = vpack.c.bf16 %v422, %v421
      %v437 = vpack.c.bf16 %v424, %v423
      %v438 = vpack.c.bf16 %v426, %v425
      %v439 = vpack.c.bf16 %v428, %v427
      %v440 = vpack.c.bf16 %v430, %v429
      %v441 = vpack.c.bf16 %v432, %v431
      %v442 = vpack.c.bf16 %v434, %v433
      %v451 = vunpack.c.l.b16 %v435
      %v452 = vunpack.c.h.b16 %v435
      %v453 = vunpack.c.l.b16 %v436
      %v454 = vunpack.c.h.b16 %v436
      %v455 = vunpack.c.l.b16 %v437
      %v456 = vunpack.c.h.b16 %v437
      %v457 = vunpack.c.l.b16 %v438
      %v458 = vunpack.c.h.b16 %v438
      %v459 = vunpack.c.l.b16 %v439
      %v460 = vunpack.c.h.b16 %v439
      %v461 = vunpack.c.l.b16 %v440
      %v462 = vunpack.c.h.b16 %v440
      %v463 = vunpack.c.l.b16 %v441
      %v464 = vunpack.c.h.b16 %v441
      %v465 = vunpack.c.l.b16 %v442
      %v466 = vunpack.c.h.b16 %v442
      %v467 = vpack.c.b16 %v451, %v451
      %v468 = vpack.c.b16 %v452, %v452
      %v469 = vpack.c.b16 %v453, %v453
      %v470 = vpack.c.b16 %v454, %v454
      %v471 = vpack.c.b16 %v455, %v455
      %v472 = vpack.c.b16 %v456, %v456
      %v473 = vpack.c.b16 %v457, %v457
      %v474 = vpack.c.b16 %v458, %v458
      %v475 = vpack.c.b16 %v459, %v459
      %v476 = vpack.c.b16 %v460, %v460
      %v477 = vpack.c.b16 %v461, %v461
      %v478 = vpack.c.b16 %v462, %v462
      %v479 = vpack.c.b16 %v463, %v463
      %v480 = vpack.c.b16 %v464, %v464
      %v481 = vpack.c.b16 %v465, %v465
      %v482 = vpack.c.b16 %v466, %v466
      %vm499 = vcmask 519168
      %500 = vst.msk [vmem:[#allocation8] sm:$0xf] %vm499, %v467
      %501 = vst.msk [vmem:[#allocation8 + $0x4] sm:$0xf] %vm499, %v468
      %502 = vst.msk [vmem:[#allocation8 + $0x8] sm:$0xf] %vm499, %v469
      %503 = vst.msk [vmem:[#allocation8 + $0xc] sm:$0xf] %vm499, %v470
      %504 = vst.msk [vmem:[#allocation8 + $0x10] sm:$0xf] %vm499, %v471
      %505 = vst.msk [vmem:[#allocation8 + $0x14] sm:$0xf] %vm499, %v472
      %506 = vst.msk [vmem:[#allocation8 + $0x18] sm:$0xf] %vm499, %v473
      %507 = vst.msk [vmem:[#allocation8 + $0x1c] sm:$0xf] %vm499, %v474
      %508 = vst.msk [vmem:[#allocation8 + $0x20] sm:$0xf] %vm499, %v475
      %509 = vst.msk [vmem:[#allocation8 + $0x24] sm:$0xf] %vm499, %v476
      %510 = vst.msk [vmem:[#allocation8 + $0x28] sm:$0xf] %vm499, %v477
      %511 = vst.msk [vmem:[#allocation8 + $0x2c] sm:$0xf] %vm499, %v478
      %512 = vst.msk [vmem:[#allocation8 + $0x30] sm:$0xf] %vm499, %v479
      %513 = vst.msk [vmem:[#allocation8 + $0x34] sm:$0xf] %vm499, %v480
      %514 = vst.msk [vmem:[#allocation8 + $0x38] sm:$0xf] %vm499, %v481
      %515 = vst.msk [vmem:[#allocation8 + $0x3c] sm:$0xf] %vm499, %v482
    $region25: #{msqnet_forward.4} parent=1 // pred_fallthru
      _
    // Predicated region
    $region26: #{msqnet_forward.4} parent=1 // pred_check
      _
    $region27: #{msqnet_forward.4} parent=1 // pred_check_branch
      %517 = sbr.rel (0) target = $region29
    $region28: #{msqnet_forward.4} parent=1 // pred_region
      %s519 = ssub.s32 1024, 1024
      %520 = vsyncadd [#allocation5], %s519
      %s521 = sshll.u32 [#allocation8], 4
      %s522 = int_to_ptr.vmem [resolvable:$true] %s521
      %527 = dma.vmem_to_hbm [thread:$0]  %s522, 1024, %s2, [#allocation5], 64, 64, 4
    $region29: #{msqnet_forward.4} parent=1 // pred_fallthru
      _
    // Predicated region
    $region30: #{msqnet_forward.4} parent=1 // pred_check
      _
    $region31: #{msqnet_forward.4} parent=1 // pred_check_branch
      %529 = sbr.rel (0) target = $region33
    $region32: #{msqnet_forward.4} parent=1 // pred_region
      %530 = dma.done [#allocation5], 1024
    $region33: #{msqnet_forward.4} parent=1 // pred_fallthru
      _
    %531 = vsyncpa [#allocation4], 1
    %532 = vsyncpa [#allocation7], 1
    %533 = vsyncpa [#allocation5], 1

// kernel: msqnet_forward.6
$region0: #{msqnet_forward.6}
  #allocation0 [shape = 'u32[]', space=smem, size = 0x4, offset = 0x4, fixed_abs, tag = 'smem constant byte address 0x4 - core index']
  #allocation1 [shape = 'u32[144,128]{1,0:T(1,128)}', space=vmem, size = 0x12000, scoped, tag = 'internal scratch']
  %s0 = inlined_call_operand.hbm [shape: bf16[16,64], index: 0, kind: input, shape index: {}]
  %s1 = inlined_call_operand.hbm [shape: bf16[2,64,64], index: 1, kind: input, shape index: {}]
  %s2 = inlined_call_operand.hbm [shape: bf16[2,16,64], index: 2, kind: output, shape index: {}]
  %s3 = sld [smem:[#allocation0]]
  $region49: #{msqnet_forward.6} parent=0
    _
  %s5 = ssub.s32 1, %s3
  %s6 = scalar_select 0, %s5, %s3
  $region1: #{msqnet_forward.6} parent=0
    #allocation2 [shape = 'u8[4096]{0}', space=vmem, size = 0x1000, scoped, tag = 'input window, operand 0, single buffered']
    #allocation3 [shape = 's32[2]{0}', space=sflag, size = 0x8, scoped, tag = 'scoped memory for msqnet_forward.6']
    #allocation4 [shape = 's32[2]{0}', space=sflag, size = 0x8, scoped, tag = 'scoped memory for msqnet_forward.6']
    #allocation5 [shape = 'u8[32768]{0}', space=vmem, size = 0x8000, scoped, tag = 'input window, operand 1']
    #allocation6 [shape = 's32[2]{0}', space=sflag, size = 0x8, scoped, tag = 'scoped memory for msqnet_forward.6']
    #allocation7 [shape = 'u8[8192]{0}', space=vmem, size = 0x2000, scoped, tag = 'output window, operand 0']
    %7 = vsyncpa [#allocation3], 0
    %8 = vsyncpa [#allocation6], 0
    %s9 = scalar_lea.sflag [#allocation6], 1
    %10 = vsyncpa %s9, 0
    %11 = vsyncpa [#allocation4], 0
    %s12 = scalar_lea.sflag [#allocation4], 1
    %13 = vsyncpa %s12, 0
    loop: start=0, step=1, limit=4
    $region2: #{msqnet_forward.6} parent=1 // loop_pre_header
      _
    $region3: #{msqnet_forward.6} parent=1 // loop_header
      %s15 = sphi 0, %s19
      %p16 = scmp.ge.s32.totalorder %s15, 4
      %s23 = sphi 0, %s23
      %s25 = sphi 0, %s23
      %s26 = sphi 0, %s25
      %s40 = sphi 0, %s26
      %s46 = sphi 0, %s48
      %s49 = sphi 0, %s46
      %s50 = sphi 0, %s49
      %s66 = sphi 0, %s50
      %s72 = sphi 0, %s74
      %s75 = sphi 0, %s72
      %s76 = sphi 0, %s75
      %s92 = sphi 0, %s76
    $region4: #{msqnet_forward.6} parent=1 // loop_header_branch
      %18 = sbr.rel (%p16) target = $region8
    $region5: #{msqnet_forward.6} parent=1 // loop_body
      %s20 = ssub.s32 %s15, 1
      %s21 = ssub.s32 %s15, 2
      %s22 = sadd.s32 %s15, 1
      %s24 = sadd.s32 %s23, 1
      %p27 = scmp.eq.s32.totalorder %s15, 1
      %p28 = scmp.ne.s32.totalorder %s23, %s25
      %p29 = scmp.eq.s32.totalorder %s15, 0
      %p30 = por %p28, %p29
      %p31 = scmp.ne.s32.totalorder %s23, %s25
      %p32 = scmp.eq.s32.totalorder %s20, 1
      %p33 = por %p31, %p32
      %p34 = scmp.ne.s32.totalorder %s25, %s26
      %p35 = scmp.eq.s32.totalorder %s20, 0
      %p36 = por %p34, %p35
      %p37 = scmp.ne.s32.totalorder %s25, %s26
      %p38 = scmp.eq.s32.totalorder %s21, 1
      %p39 = por %p37, %p38
      %p41 = scmp.ne.s32.totalorder %s26, %s40
      %p42 = scmp.eq.s32.totalorder %s21, 0
      %p43 = por %p41, %p42
      %s44 = ssub.s32 %s15, %s22
      %p45 = scmp.eq.s32.totalorder %s44, 0
      %s47 = sadd.s32 %s46, 1
      %s48 = scalar_select %p45, %s46, %s47
      %p51 = pneg %p45
      %p52 = scmp.eq.s32.totalorder %s15, 1
      %p53 = por %p51, %p52
      %p54 = scmp.ne.s32.totalorder %s46, %s49
      %p55 = scmp.eq.s32.totalorder %s15, 0
      %p56 = por %p54, %p55
      %p57 = scmp.ne.s32.totalorder %s46, %s49
      %p58 = scmp.eq.s32.totalorder %s20, 1
      %p59 = por %p57, %p58
      %p60 = scmp.ne.s32.totalorder %s49, %s50
      %p61 = scmp.eq.s32.totalorder %s20, 0
      %p62 = por %p60, %p61
      %p63 = scmp.ne.s32.totalorder %s49, %s50
      %p64 = scmp.eq.s32.totalorder %s21, 1
      %p65 = por %p63, %p64
      %p67 = scmp.ne.s32.totalorder %s50, %s66
      %p68 = scmp.eq.s32.totalorder %s21, 0
      %p69 = por %p67, %p68
      %s70 = ssub.s32 %s15, %s22
      %p71 = scmp.eq.s32.totalorder %s70, 0
      %s73 = sadd.s32 %s72, 1
      %s74 = scalar_select %p71, %s72, %s73
      %p77 = pneg %p71
      %p78 = scmp.eq.s32.totalorder %s15, 1
      %p79 = por %p77, %p78
      %p80 = scmp.ne.s32.totalorder %s72, %s75
      %p81 = scmp.eq.s32.totalorder %s15, 0
      %p82 = por %p80, %p81
      %p83 = scmp.ne.s32.totalorder %s72, %s75
      %p84 = scmp.eq.s32.totalorder %s20, 1
      %p85 = por %p83, %p84
      %p86 = scmp.ne.s32.totalorder %s75, %s76
      %p87 = scmp.eq.s32.totalorder %s20, 0
      %p88 = por %p86, %p87
      %p89 = scmp.ne.s32.totalorder %s75, %s76
      %p90 = scmp.eq.s32.totalorder %s21, 1
      %p91 = por %p89, %p90
      %p93 = scmp.ne.s32.totalorder %s76, %s92
      %p94 = scmp.eq.s32.totalorder %s21, 0
      %p95 = por %p93, %p94
      %p96 = scmp.le.s32.totalorder 1, %s15
      %p97 = scmp.lt.s32.totalorder %s15, 3
      %p98 = pnand %p96, %p97
      %p99 = pneg %p98
      // Predicated region
      $region9: #{msqnet_forward.6} parent=5 // pred_check
        _
      $region10: #{msqnet_forward.6} parent=5 // pred_check_branch
        %101 = sbr.rel (%p98) target = $region12
      $region11: #{msqnet_forward.6} parent=5 // pred_region
        %s102 = ssub.s32 %s15, 1
        // Predicated region
        $region13: #{msqnet_forward.6} parent=11 // pred_check
          %p103 = pneg %p36
        $region14: #{msqnet_forward.6} parent=11 // pred_check_branch
          %105 = sbr.rel (%p103) target = $region16
        $region15: #{msqnet_forward.6} parent=11 // pred_region
          %s107 = ssub.s32 128, 128
          %108 = vsyncadd [#allocation3], %s107
          %s109 = sshll.u32 [#allocation2], 4
          %s110 = int_to_ptr.vmem [resolvable:$true] %s109
          %115 = dma.hbm_to_vmem [thread:$0]  %s0, 128, %s110, [#allocation3], 64, 64, 4
        $region16: #{msqnet_forward.6} parent=11 // pred_fallthru
          _
      $region12: #{msqnet_forward.6} parent=5 // pred_fallthru
        _
      %p116 = scmp.lt.s32.totalorder %s15, 2
      // Predicated region
      $region17: #{msqnet_forward.6} parent=5 // pred_check
        %p117 = pneg %p116
      $region18: #{msqnet_forward.6} parent=5 // pred_check_branch
        %119 = sbr.rel (%p117) target = $region20
      $region19: #{msqnet_forward.6} parent=5 // pred_region
        // Predicated region
        $region21: #{msqnet_forward.6} parent=19 // pred_check
          %p120 = pneg %p56
        $region22: #{msqnet_forward.6} parent=19 // pred_check_branch
          %122 = sbr.rel (%p120) target = $region24
        $region23: #{msqnet_forward.6} parent=19 // pred_region
          %s123 = sand.u32 %s46, 1
          %s124 = scalar_lea.sflag [#allocation6], %s123
          %s125 = sand.u32 %s46, 1
          %s126 = smul.addr %s125, 32
          %s127 = scalar_lea.vmem [#allocation5], %s126
          %s129 = ssub.s32 512, 512
          %130 = vsyncadd %s124, %s129
          %s131 = smul.addr %s15, 8
          %s132 = smul.addr %s131, 64
          %s133 = scalar_lea.hbm %s1, %s132
          %s134 = sshll.u32 %s127, 4
          %s135 = int_to_ptr.vmem [resolvable:$true] %s134
          %140 = dma.hbm_to_vmem [thread:$0]  %s133, 512, %s135, %s124, 64, 64, 4
        $region24: #{msqnet_forward.6} parent=19 // pred_fallthru
          _
      $region20: #{msqnet_forward.6} parent=5 // pred_fallthru
        _
      %p141 = scmp.le.s32.totalorder 1, %s15
      %p142 = scmp.lt.s32.totalorder %s15, 3
      %p143 = pnand %p141, %p142
      %p144 = pneg %p143
      // Predicated region
      $region25: #{msqnet_forward.6} parent=5 // pred_check
        _
      $region26: #{msqnet_forward.6} parent=5 // pred_check_branch
        %146 = sbr.rel (%p143) target = $region28
      $region27: #{msqnet_forward.6} parent=5 // pred_region
        %s147 = ssub.s32 %s15, 1
        // Predicated region
        $region29: #{msqnet_forward.6} parent=27 // pred_check
          %p148 = pneg %p36
        $region30: #{msqnet_forward.6} parent=27 // pred_check_branch
          %150 = sbr.rel (%p148) target = $region32
        $region31: #{msqnet_forward.6} parent=27 // pred_region
          %151 = dma.done [#allocation3], 128
        $region32: #{msqnet_forward.6} parent=27 // pred_fallthru
          _
        %s152 = sand.u32 %s49, 1
        %s153 = scalar_lea.sflag [#allocation6], %s152
        %s154 = sand.u32 %s49, 1
        %s155 = smul.addr %s154, 32
        %s156 = scalar_lea.vmem [#allocation5], %s155
        // Predicated region
        $region33: #{msqnet_forward.6} parent=27 // pred_check
          %p157 = pneg %p62
        $region34: #{msqnet_forward.6} parent=27 // pred_check_branch
          %159 = sbr.rel (%p157) target = $region36
        $region35: #{msqnet_forward.6} parent=27 // pred_region
          %160 = dma.done %s153, 512
        $region36: #{msqnet_forward.6} parent=27 // pred_fallthru
          _
        %p161 = pneg %p36
        %p162 = pneg %p33
        %s163 = sand.u32 %s49, 1
        %s164 = scalar_lea.sflag [#allocation6], %s163
        %s165 = sand.u32 %s49, 1
        %s166 = smul.addr %s165, 32
        %s167 = scalar_lea.vmem [#allocation5], %s166
        %p168 = pneg %p62
        %p169 = pneg %p59
        %p170 = pneg %p88
        %p171 = pneg %p85
        %s172 = sand.u32 %s75, 1
        %s173 = scalar_lea.sflag [#allocation4], %s172
        %s174 = sand.u32 %s75, 1
        %s175 = smul.addr %s174, 8
        %s176 = scalar_lea.vmem [#allocation7], %s175
        %v178 = vld [vmem:[#allocation2] sm:$0xf]
        %v179 = vld [vmem:[#allocation2 + $0x4] sm:$0xf]
        %v180 = vld [vmem:[%s156] sm:$0xf]
        %v181 = vld [vmem:[%s156 + $0x4] sm:$0xf]
        %v182 = vld [vmem:[%s156 + $0x8] sm:$0xf]
        %v183 = vld [vmem:[%s156 + $0xc] sm:$0xf]
        %v184 = vld [vmem:[%s156 + $0x10] sm:$0xf]
        %v185 = vld [vmem:[%s156 + $0x14] sm:$0xf]
        %v186 = vld [vmem:[%s156 + $0x18] sm:$0xf]
        %v187 = vld [vmem:[%s156 + $0x1c] sm:$0xf]
        %v190 = vunpack.c.l.b16 %v178
        %v191 = vunpack.c.l.b16 %v179
        %v192 = vpack.c.b16 %v191, %v190
        %v201 = vunpack.c.l.b16 %v180
        %v202 = vunpack.c.l.b16 %v181
        %v203 = vunpack.c.l.b16 %v182
        %v204 = vunpack.c.l.b16 %v183
        %v205 = vunpack.c.l.b16 %v184
        %v206 = vunpack.c.l.b16 %v185
        %v207 = vunpack.c.l.b16 %v186
        %v208 = vunpack.c.l.b16 %v187
        %v209 = vpack.c.b16 %v202, %v201
        %v210 = vpack.c.b16 %v204, %v203
        %v211 = vpack.c.b16 %v206, %v205
        %v212 = vpack.c.b16 %v208, %v207
        %vm217 = vcmask 523264
        %v219 = vsel %vm217, %v192, 0
        %221 = vmatprep.subr.bf16.mxu0 0
        %222 = vmatpush1.bf16.msra.mxu0 %v209
        %223 = vmatprep.subr.bf16.mxu0 0
        %224 = vmatpush1.bf16.msra.mxu0 %v210
        %225 = vmatprep.subr.bf16.mxu0 0
        %226 = vmatpush1.bf16.msra.mxu0 %v211
        %227 = vmatprep.subr.bf16.mxu0 0
        %228 = vmatpush1.bf16.msra.mxu0 %v212
        %229 = vmatprep.subr.bf16.mxu0 0
        %230 = vmatpush1.bf16.msra.mxu0 0
        %231 = vmatprep.subr.bf16.mxu0 0
        %232 = vmatpush1.bf16.msra.mxu0 0
        %233 = vmatprep.subr.bf16.mxu0 0
        %234 = vmatpush1.bf16.msra.mxu0 0
        %235 = vmatprep.subr.bf16.mxu0 0
        %236 = vmatpush1.bf16.msra.mxu0 0
        %237 = vmatprep.subr.bf16.mxu0 0
        %238 = vmatpush1.bf16.msra.mxu0 0
        %239 = vmatprep.subr.bf16.mxu0 0
        %240 = vmatpush1.bf16.msra.mxu0 0
        %241 = vmatprep.subr.bf16.mxu0 0
        %242 = vmatpush1.bf16.msra.mxu0 0
        %243 = vmatprep.subr.bf16.mxu0 0
        %244 = vmatpush1.bf16.msra.mxu0 0
        %245 = vmatprep.subr.bf16.mxu0 0
        %246 = vmatpush1.bf16.msra.mxu0 0
        %247 = vmatprep.subr.bf16.mxu0 0
        %248 = vmatpush1.bf16.msra.mxu0 0
        %249 = vmatprep.subr.bf16.mxu0 0
        %250 = vmatpush1.bf16.msra.mxu0 0
        %251 = vmatprep.subr.bf16.mxu0 0
        %252 = vmatpush1.bf16.msra.mxu0 0
        %253 = vmatprep.mubr.bf16.mxu0 0
        %254 = vmatmul.mubr.bf16.gmra.mrb[0].mxu0 %v219
        %v255 = vpop.f32.mrb[0].mxu0
        %v256 = vadd.f32 0.0, %v255
        %v257 = vpop.f32.mrb[0].mxu0
        %v258 = vpop.f32.mrb[0].mxu0
        %v259 = vadd.f32 0.0, %v258
        %v260 = vpop.f32.mrb[0].mxu0
        %261 = vdwg.mxu0
        %v262 = vpack.c.bf16 %v259, %v256
        %v264 = vunpack.c.l.b16 %v262
        %v265 = vunpack.c.h.b16 %v262
        %v266 = vpack.c.b16 %v264, %v264
        %v267 = vpack.c.b16 %v265, %v265
        %vm270 = vcmask 519168
        %271 = vst.msk [vmem:[%s176] sm:$0xf] %vm270, %v266
        %272 = vst.msk [vmem:[%s176 + $0x4] sm:$0xf] %vm270, %v267
        %s273 = sand.u32 %s75, 1
        %s274 = scalar_lea.sflag [#allocation4], %s273
        %s275 = sand.u32 %s75, 1
        %s276 = smul.addr %s275, 8
        %s277 = scalar_lea.vmem [#allocation7], %s276
        // Predicated region
        $region37: #{msqnet_forward.6} parent=27 // pred_check
          %p278 = pneg %p85
        $region38: #{msqnet_forward.6} parent=27 // pred_check_branch
          %280 = sbr.rel (%p278) target = $region40
        $region39: #{msqnet_forward.6} parent=27 // pred_region
          %s282 = ssub.s32 128, 128
          %283 = vsyncadd %s274, %s282
          %s284 = smul.addr %s20, 2
          %s285 = smul.addr %s284, 64
          %s286 = scalar_lea.hbm %s2, %s285
          %s287 = sshll.u32 %s277, 4
          %s288 = int_to_ptr.vmem [resolvable:$true] %s287
          %293 = dma.vmem_to_hbm [thread:$0]  %s288, 128, %s286, %s274, 64, 64, 4
        $region40: #{msqnet_forward.6} parent=27 // pred_fallthru
          _
      $region28: #{msqnet_forward.6} parent=5 // pred_fallthru
        _
      %p294 = scmp.le.s32.totalorder 2, %s15
      // Predicated region
      $region41: #{msqnet_forward.6} parent=5 // pred_check
        %p295 = pneg %p294
      $region42: #{msqnet_forward.6} parent=5 // pred_check_branch
        %297 = sbr.rel (%p295) target = $region44
      $region43: #{msqnet_forward.6} parent=5 // pred_region
        %s298 = ssub.s32 %s15, 2
        // Predicated region
        $region45: #{msqnet_forward.6} parent=43 // pred_check
          %p299 = pneg %p91
        $region46: #{msqnet_forward.6} parent=43 // pred_check_branch
          %301 = sbr.rel (%p299) target = $region48
        $region47: #{msqnet_forward.6} parent=43 // pred_region
          %s302 = sand.u32 %s76, 1
          %s303 = scalar_lea.sflag [#allocation4], %s302
          %s304 = sand.u32 %s76, 1
          %s305 = smul.addr %s304, 8
          %s306 = scalar_lea.vmem [#allocation7], %s305
          %307 = dma.done %s303, 128
        $region48: #{msqnet_forward.6} parent=43 // pred_fallthru
          _
      $region44: #{msqnet_forward.6} parent=5 // pred_fallthru
        _
    $region6: #{msqnet_forward.6} parent=1 // loop_footer
      %s19 = sadd.s32 1, %s15
    $region7: #{msqnet_forward.6} parent=1 // loop_footer_branch
      %14 = sbr.rel target = $region3
    $region8: #{msqnet_forward.6} parent=1 // loop_exit
      _
    %308 = vsyncpa [#allocation3], 1
    %s309 = scalar_lea.sflag [#allocation3], 1
    %310 = vsyncpa %s309, 1
    %311 = vsyncpa [#allocation6], 1
    %s312 = scalar_lea.sflag [#allocation6], 1
    %313 = vsyncpa %s312, 1
    %314 = vsyncpa [#allocation4], 1
    %s315 = scalar_lea.sflag [#allocation4], 1
    %316 = vsyncpa %s315, 1

// kernel: msqnet_forward.5
$region0: #{msqnet_forward.5}
  #allocation0 [shape = 'u32[]', space=smem, size = 0x4, offset = 0x4, fixed_abs, tag = 'smem constant byte address 0x4 - core index']
  #allocation1 [shape = 'u32[144,128]{1,0:T(1,128)}', space=vmem, size = 0x12000, scoped, tag = 'internal scratch']
  #allocation2 [shape = 'f32[32,64]{1,0:T(8,128)}', space=vmem, size = 0x4000, scoped, tag = 'scratch operand']
  %s0 = inlined_call_operand.hbm [shape: bf16[32,768], index: 0, kind: input, shape index: {}]
  %s1 = inlined_call_operand.hbm [shape: bf16[768,64], index: 1, kind: input, shape index: {}]
  %s2 = inlined_call_operand.hbm [shape: bf16[32,64], index: 2, kind: output, shape index: {}]
  %s3 = sld [smem:[#allocation0]]
  $region57: #{msqnet_forward.5} parent=0
    _
  %s5 = ssub.s32 1, %s3
  %s6 = scalar_select 0, %s5, %s3
  $region1: #{msqnet_forward.5} parent=0
    #allocation3 [shape = 'u8[49152]{0}', space=vmem, size = 0xc000, scoped, tag = 'input window, operand 0']
    #allocation4 [shape = 's32[2]{0}', space=sflag, size = 0x8, scoped, tag = 'scoped memory for msqnet_forward.5']
    #allocation5 [shape = 's32[2]{0}', space=sflag, size = 0x8, scoped, tag = 'scoped memory for msqnet_forward.5']
    #allocation6 [shape = 'u8[196608]{0}', space=vmem, size = 0x30000, scoped, tag = 'input window, operand 1']
    #allocation7 [shape = 's32[2]{0}', space=sflag, size = 0x8, scoped, tag = 'scoped memory for msqnet_forward.5']
    #allocation8 [shape = 'u8[8192]{0}', space=vmem, size = 0x2000, scoped, tag = 'output window, operand 0, single buffered']
    %7 = vsyncpa [#allocation4], 0
    %s8 = scalar_lea.sflag [#allocation4], 1
    %9 = vsyncpa %s8, 0
    %10 = vsyncpa [#allocation7], 0
    %s11 = scalar_lea.sflag [#allocation7], 1
    %12 = vsyncpa %s11, 0
    %13 = vsyncpa [#allocation5], 0
    loop: start=0, step=1, limit=4
    $region2: #{msqnet_forward.5} parent=1 // loop_pre_header
      _
    $region3: #{msqnet_forward.5} parent=1 // loop_header
      %s15 = sphi 0, %s19
      %p16 = scmp.ge.s32.totalorder %s15, 4
      %s22 = sphi 0, %s41
      %s23 = sphi 0, %s37
      %s24 = sphi 0, %s33
      %s25 = sphi 0, %s22
      %s26 = sphi 0, %s23
      %s27 = sphi 0, %s24
      %s28 = sphi 0, %s25
      %s29 = sphi 0, %s26
      %s30 = sphi 0, %s27
      %s46 = sphi 0, %s48
      %s49 = sphi 0, %s46
      %s50 = sphi 0, %s49
      %s66 = sphi 0, %s50
      %s74 = sphi 0, %s76
      %s77 = sphi 0, %s74
      %s78 = sphi 0, %s77
      %s94 = sphi 0, %s78
      %s102 = sphi 0, %s104
      %s105 = sphi 0, %s102
      %s106 = sphi 0, %s105
      %s122 = sphi 0, %s106
    $region4: #{msqnet_forward.5} parent=1 // loop_header_branch
      %18 = sbr.rel (%p16) target = $region8
    $region5: #{msqnet_forward.5} parent=1 // loop_body
      %s20 = ssub.s32 %s15, 1
      %s21 = ssub.s32 %s15, 2
      %s31 = sadd.s32 1, %s24
      %p32 = scmp.ge.s32.totalorder %s31, 2
      %s33 = scalar_select %p32, 0, %s31
      %s34 = sadd.s32 1, %s23
      %s35 = scalar_select %p32, %s34, %s23
      %p36 = scmp.ge.s32.totalorder %s35, 1
      %s37 = scalar_select %p36, 0, %s35
      %s38 = sadd.s32 1, %s22
      %s39 = scalar_select %p36, %s38, %s22
      %p40 = scmp.ge.s32.totalorder %s39, 1
      %s41 = scalar_select %p40, 0, %s39
      %s42 = ssub.s32 %s22, %s41
      %s43 = ssub.s32 %s24, %s33
      %s44 = sor.u32 %s42, %s43
      %p45 = scmp.eq.s32.totalorder %s44, 0
      %s47 = sadd.s32 %s46, 1
      %s48 = scalar_select %p45, %s46, %s47
      %p51 = pneg %p45
      %p52 = scmp.eq.s32.totalorder %s15, 1
      %p53 = por %p51, %p52
      %p54 = scmp.ne.s32.totalorder %s46, %s49
      %p55 = scmp.eq.s32.totalorder %s15, 0
      %p56 = por %p54, %p55
      %p57 = scmp.ne.s32.totalorder %s46, %s49
      %p58 = scmp.eq.s32.totalorder %s20, 1
      %p59 = por %p57, %p58
      %p60 = scmp.ne.s32.totalorder %s49, %s50
      %p61 = scmp.eq.s32.totalorder %s20, 0
      %p62 = por %p60, %p61
      %p63 = scmp.ne.s32.totalorder %s49, %s50
      %p64 = scmp.eq.s32.totalorder %s21, 1
      %p65 = por %p63, %p64
      %p67 = scmp.ne.s32.totalorder %s50, %s66
      %p68 = scmp.eq.s32.totalorder %s21, 0
      %p69 = por %p67, %p68
      %s70 = ssub.s32 %s24, %s33
      %s71 = ssub.s32 %s23, %s37
      %s72 = sor.u32 %s70, %s71
      %p73 = scmp.eq.s32.totalorder %s72, 0
      %s75 = sadd.s32 %s74, 1
      %s76 = scalar_select %p73, %s74, %s75
      %p79 = pneg %p73
      %p80 = scmp.eq.s32.totalorder %s15, 1
      %p81 = por %p79, %p80
      %p82 = scmp.ne.s32.totalorder %s74, %s77
      %p83 = scmp.eq.s32.totalorder %s15, 0
      %p84 = por %p82, %p83
      %p85 = scmp.ne.s32.totalorder %s74, %s77
      %p86 = scmp.eq.s32.totalorder %s20, 1
      %p87 = por %p85, %p86
      %p88 = scmp.ne.s32.totalorder %s77, %s78
      %p89 = scmp.eq.s32.totalorder %s20, 0
      %p90 = por %p88, %p89
      %p91 = scmp.ne.s32.totalorder %s77, %s78
      %p92 = scmp.eq.s32.totalorder %s21, 1
      %p93 = por %p91, %p92
      %p95 = scmp.ne.s32.totalorder %s78, %s94
      %p96 = scmp.eq.s32.totalorder %s21, 0
      %p97 = por %p95, %p96
      %s98 = ssub.s32 %s22, %s41
      %s99 = ssub.s32 %s23, %s37
      %s100 = sor.u32 %s98, %s99
      %p101 = scmp.eq.s32.totalorder %s100, 0
      %s103 = sadd.s32 %s102, 1
      %s104 = scalar_select %p101, %s102, %s103
      %p107 = pneg %p101
      %p108 = scmp.eq.s32.totalorder %s15, 1
      %p109 = por %p107, %p108
      %p110 = scmp.ne.s32.totalorder %s102, %s105
      %p111 = scmp.eq.s32.totalorder %s15, 0
      %p112 = por %p110, %p111
      %p113 = scmp.ne.s32.totalorder %s102, %s105
      %p114 = scmp.eq.s32.totalorder %s20, 1
      %p115 = por %p113, %p114
      %p116 = scmp.ne.s32.totalorder %s105, %s106
      %p117 = scmp.eq.s32.totalorder %s20, 0
      %p118 = por %p116, %p117
      %p119 = scmp.ne.s32.totalorder %s105, %s106
      %p120 = scmp.eq.s32.totalorder %s21, 1
      %p121 = por %p119, %p120
      %p123 = scmp.ne.s32.totalorder %s106, %s122
      %p124 = scmp.eq.s32.totalorder %s21, 0
      %p125 = por %p123, %p124
      %p126 = scmp.le.s32.totalorder 1, %s15
      %p127 = scmp.lt.s32.totalorder %s15, 3
      %p128 = pnand %p126, %p127
      %p129 = pneg %p128
      // Predicated region
      $region9: #{msqnet_forward.5} parent=5 // pred_check
        _
      $region10: #{msqnet_forward.5} parent=5 // pred_check_branch
        %131 = sbr.rel (%p128) target = $region12
      $region11: #{msqnet_forward.5} parent=5 // pred_region
        %s132 = ssub.s32 %s15, 1
      $region12: #{msqnet_forward.5} parent=5 // pred_fallthru
        _
      %p133 = scmp.lt.s32.totalorder %s15, 2
      // Predicated region
      $region13: #{msqnet_forward.5} parent=5 // pred_check
        %p134 = pneg %p133
      $region14: #{msqnet_forward.5} parent=5 // pred_check_branch
        %136 = sbr.rel (%p134) target = $region16
      $region15: #{msqnet_forward.5} parent=5 // pred_region
        // Predicated region
        $region17: #{msqnet_forward.5} parent=15 // pred_check
          %p137 = pneg %p56
        $region18: #{msqnet_forward.5} parent=15 // pred_check_branch
          %139 = sbr.rel (%p137) target = $region20
        $region19: #{msqnet_forward.5} parent=15 // pred_region
          %s140 = sand.u32 %s46, 1
          %s141 = scalar_lea.sflag [#allocation4], %s140
          %s142 = sand.u32 %s46, 1
          %s143 = smul.addr %s142, 48
          %s144 = scalar_lea.vmem [#allocation3], %s143
          %s145 = smul.u32 4, %s22
          %s146 = smul.u32 3, %s24
          %s148 = ssub.s32 768, 768
          %149 = vsyncadd %s141, %s148
          %s150 = smul.addr %s145, 6
          %s151 = sadd.s32 %s146, %s150
          %s152 = smul.addr %s151, 64
          %s153 = scalar_lea.hbm %s0, %s152
          %s154 = sshll.u32 %s144, 4
          %s155 = int_to_ptr.vmem [resolvable:$true] %s154
          %160 = dma.hbm_to_vmem [thread:$0]  %s153, 768, %s155, %s141, 384, 192, 12
        $region20: #{msqnet_forward.5} parent=15 // pred_fallthru
          _
        // Predicated region
        $region21: #{msqnet_forward.5} parent=15 // pred_check
          %p161 = pneg %p84
        $region22: #{msqnet_forward.5} parent=15 // pred_check_branch
          %163 = sbr.rel (%p161) target = $region24
        $region23: #{msqnet_forward.5} parent=15 // pred_region
          %s164 = sand.u32 %s74, 1
          %s165 = scalar_lea.sflag [#allocation7], %s164
          %s166 = sand.u32 %s74, 1
          %s167 = smul.addr %s166, 192
          %s168 = scalar_lea.vmem [#allocation6], %s167
          %s169 = smul.u32 48, %s24
          %s171 = ssub.s32 3072, 3072
          %172 = vsyncadd %s165, %s171
          %s173 = sadd.s32 %s23, %s169
          %s174 = smul.addr %s173, 64
          %s175 = scalar_lea.hbm %s1, %s174
          %s176 = sshll.u32 %s168, 4
          %s177 = int_to_ptr.vmem [resolvable:$true] %s176
          %182 = dma.hbm_to_vmem [thread:$0]  %s175, 3072, %s177, %s165, 64, 64, 4
        $region24: #{msqnet_forward.5} parent=15 // pred_fallthru
          _
      $region16: #{msqnet_forward.5} parent=5 // pred_fallthru
        _
      %p183 = scmp.le.s32.totalorder 1, %s15
      %p184 = scmp.lt.s32.totalorder %s15, 3
      %p185 = pnand %p183, %p184
      %p186 = pneg %p185
      // Predicated region
      $region25: #{msqnet_forward.5} parent=5 // pred_check
        _
      $region26: #{msqnet_forward.5} parent=5 // pred_check_branch
        %188 = sbr.rel (%p185) target = $region28
      $region27: #{msqnet_forward.5} parent=5 // pred_region
        %s189 = ssub.s32 %s15, 1
        %s190 = sand.u32 %s49, 1
        %s191 = scalar_lea.sflag [#allocation4], %s190
        %s192 = sand.u32 %s49, 1
        %s193 = smul.addr %s192, 48
        %s194 = scalar_lea.vmem [#allocation3], %s193
        // Predicated region
        $region29: #{msqnet_forward.5} parent=27 // pred_check
          %p195 = pneg %p62
        $region30: #{msqnet_forward.5} parent=27 // pred_check_branch
          %197 = sbr.rel (%p195) target = $region32
        $region31: #{msqnet_forward.5} parent=27 // pred_region
          %198 = dma.done %s191, 768
        $region32: #{msqnet_forward.5} parent=27 // pred_fallthru
          _
        %s199 = sand.u32 %s77, 1
        %s200 = scalar_lea.sflag [#allocation7], %s199
        %s201 = sand.u32 %s77, 1
        %s202 = smul.addr %s201, 192
        %s203 = scalar_lea.vmem [#allocation6], %s202
        // Predicated region
        $region33: #{msqnet_forward.5} parent=27 // pred_check
          %p204 = pneg %p90
        $region34: #{msqnet_forward.5} parent=27 // pred_check_branch
          %206 = sbr.rel (%p204) target = $region36
        $region35: #{msqnet_forward.5} parent=27 // pred_region
          %207 = dma.done %s200, 3072
        $region36: #{msqnet_forward.5} parent=27 // pred_fallthru
          _
        %s208 = sand.u32 %s49, 1
        %s209 = scalar_lea.sflag [#allocation4], %s208
        %s210 = sand.u32 %s49, 1
        %s211 = smul.addr %s210, 48
        %s212 = scalar_lea.vmem [#allocation3], %s211
        %p213 = pneg %p62
        %p214 = pneg %p59
        %s215 = sand.u32 %s77, 1
        %s216 = scalar_lea.sflag [#allocation7], %s215
        %s217 = sand.u32 %s77, 1
        %s218 = smul.addr %s217, 192
        %s219 = scalar_lea.vmem [#allocation6], %s218
        %p220 = pneg %p90
        %p221 = pneg %p87
        %p222 = pneg %p118
        %p223 = pneg %p115
        %s224 = smul.u32 4, %s25
        %s225 = smul.u32 3, %s27
        %s226 = smul.u32 48, %s27
        %s227 = smul.u32 4, %s25
        %p229 = scmp.eq.s32.totalorder %s27, 0
        // Predicated region
        $region37: #{msqnet_forward.5} parent=27 // pred_check
          %p230 = pneg %p229
        $region38: #{msqnet_forward.5} parent=27 // pred_check_branch
          %232 = sbr.rel (%p230) target = $region40
        $region39: #{msqnet_forward.5} parent=27 // pred_region
          %vm233 = vcmask 523264
          %234 = vst.msk [vmem:[#allocation2] sm:$0xff] %vm233, 0.0
          %235 = vst.msk [vmem:[#allocation2 + $0x8] sm:$0xff] %vm233, 0.0
          %236 = vst.msk [vmem:[#allocation2 + $0x10] sm:$0xff] %vm233, 0.0
          %237 = vst.msk [vmem:[#allocation2 + $0x18] sm:$0xff] %vm233, 0.0
        $region40: #{msqnet_forward.5} parent=27 // pred_fallthru
          _
        %v238 = vld [vmem:[#allocation2] sm:$0xff]
        %v239 = vld [vmem:[#allocation2 + $0x8] sm:$0xff]
        %v240 = vld [vmem:[#allocation2 + $0x10] sm:$0xff]
        %v241 = vld [vmem:[#allocation2 + $0x18] sm:$0xff]
        %v242 = vld [vmem:[%s194] sm:$0xff]
        %v243 = vld [vmem:[%s194 + $0x8] sm:$0xf]
        %v244 = vld [vmem:[%s194 + $0xc] sm:$0xff]
        %v245 = vld [vmem:[%s194 + $0x14] sm:$0xf]
        %v246 = vld [vmem:[%s194 + $0x18] sm:$0xff]
        %v247 = vld [vmem:[%s194 + $0x20] sm:$0xf]
        %v248 = vld [vmem:[%s194 + $0x24] sm:$0xff]
        %v249 = vld [vmem:[%s194 + $0x2c] sm:$0xf]
        %v250 = vld [vmem:[%s203] sm:$0xf]
        %v251 = vld [vmem:[%s203 + $0x4] sm:$0xf]
        %v252 = vld [vmem:[%s203 + $0x8] sm:$0xf]
        %v253 = vld [vmem:[%s203 + $0xc] sm:$0xf]
        %v254 = vld [vmem:[%s203 + $0x10] sm:$0xf]
        %v255 = vld [vmem:[%s203 + $0x14] sm:$0xf]
        %v256 = vld [vmem:[%s203 + $0x18] sm:$0xf]
        %v257 = vld [vmem:[%s203 + $0x1c] sm:$0xf]
        %v258 = vld [vmem:[%s203 + $0x20] sm:$0xf]
        %v259 = vld [vmem:[%s203 + $0x24] sm:$0xf]
        %v260 = vld [vmem:[%s203 + $0x28] sm:$0xf]
        %v261 = vld [vmem:[%s203 + $0x2c] sm:$0xf]
        %v262 = vld [vmem:[%s203 + $0x30] sm:$0xf]
        %v263 = vld [vmem:[%s203 + $0x34] sm:$0xf]
        %v264 = vld [vmem:[%s203 + $0x38] sm:$0xf]
        %v265 = vld [vmem:[%s203 + $0x3c] sm:$0xf]
        %v266 = vld [vmem:[%s203 + $0x40] sm:$0xf]
        %v267 = vld [vmem:[%s203 + $0x44] sm:$0xf]
        %v268 = vld [vmem:[%s203 + $0x48] sm:$0xf]
        %v269 = vld [vmem:[%s203 + $0x4c] sm:$0xf]
        %v270 = vld [vmem:[%s203 + $0x50] sm:$0xf]
        %v271 = vld [vmem:[%s203 + $0x54] sm:$0xf]
        %v272 = vld [vmem:[%s203 + $0x58] sm:$0xf]
        %v273 = vld [vmem:[%s203 + $0x5c] sm:$0xf]
        %v274 = vld [vmem:[%s203 + $0x60] sm:$0xf]
        %v275 = vld [vmem:[%s203 + $0x64] sm:$0xf]
        %v276 = vld [vmem:[%s203 + $0x68] sm:$0xf]
        %v277 = vld [vmem:[%s203 + $0x6c] sm:$0xf]
        %v278 = vld [vmem:[%s203 + $0x70] sm:$0xf]
        %v279 = vld [vmem:[%s203 + $0x74] sm:$0xf]
        %v280 = vld [vmem:[%s203 + $0x78] sm:$0xf]
        %v281 = vld [vmem:[%s203 + $0x7c] sm:$0xf]
        %v282 = vld [vmem:[%s203 + $0x80] sm:$0xf]
        %v283 = vld [vmem:[%s203 + $0x84] sm:$0xf]
        %v284 = vld [vmem:[%s203 + $0x88] sm:$0xf]
        %v285 = vld [vmem:[%s203 + $0x8c] sm:$0xf]
        %v286 = vld [vmem:[%s203 + $0x90] sm:$0xf]
        %v287 = vld [vmem:[%s203 + $0x94] sm:$0xf]
        %v288 = vld [vmem:[%s203 + $0x98] sm:$0xf]
        %v289 = vld [vmem:[%s203 + $0x9c] sm:$0xf]
        %v290 = vld [vmem:[%s203 + $0xa0] sm:$0xf]
        %v291 = vld [vmem:[%s203 + $0xa4] sm:$0xf]
        %v292 = vld [vmem:[%s203 + $0xa8] sm:$0xf]
        %v293 = vld [vmem:[%s203 + $0xac] sm:$0xf]
        %v294 = vld [vmem:[%s203 + $0xb0] sm:$0xf]
        %v295 = vld [vmem:[%s203 + $0xb4] sm:$0xf]
        %v296 = vld [vmem:[%s203 + $0xb8] sm:$0xf]
        %v297 = vld [vmem:[%s203 + $0xbc] sm:$0xf]
        %v306 = vunpack.c.l.b16 %v242
        %v307 = vunpack.c.h.b16 %v242
        %v308 = vunpack.c.l.b16 %v243
        %v309 = vunpack.c.l.b16 %v244
        %v310 = vunpack.c.h.b16 %v244
        %v311 = vunpack.c.l.b16 %v245
        %v312 = vunpack.c.l.b16 %v246
        %v313 = vunpack.c.h.b16 %v246
        %v314 = vunpack.c.l.b16 %v247
        %v315 = vunpack.c.l.b16 %v248
        %v316 = vunpack.c.h.b16 %v248
        %v317 = vunpack.c.l.b16 %v249
        %v318 = vpack.c.b16 %v309, %v306
        %v319 = vpack.c.b16 %v310, %v307
        %v320 = vpack.c.b16 %v311, %v308
        %v321 = vpack.c.b16 %v315, %v312
        %v322 = vpack.c.b16 %v316, %v313
        %v323 = vpack.c.b16 %v317, %v314
        %v378 = vunpack.c.l.b16 %v250
        %v379 = vunpack.c.l.b16 %v251
        %v380 = vunpack.c.l.b16 %v252
        %v381 = vunpack.c.l.b16 %v253
        %v382 = vunpack.c.l.b16 %v254
        %v383 = vunpack.c.l.b16 %v255
        %v384 = vunpack.c.l.b16 %v256
        %v385 = vunpack.c.l.b16 %v257
        %v386 = vunpack.c.l.b16 %v258
        %v387 = vunpack.c.l.b16 %v259
        %v388 = vunpack.c.l.b16 %v260
        %v389 = vunpack.c.l.b16 %v261
        %v390 = vunpack.c.l.b16 %v262
        %v391 = vunpack.c.l.b16 %v263
        %v392 = vunpack.c.l.b16 %v264
        %v393 = vunpack.c.l.b16 %v265
        %v394 = vunpack.c.l.b16 %v266
        %v395 = vunpack.c.l.b16 %v267
        %v396 = vunpack.c.l.b16 %v268
        %v397 = vunpack.c.l.b16 %v269
        %v398 = vunpack.c.l.b16 %v270
        %v399 = vunpack.c.l.b16 %v271
        %v400 = vunpack.c.l.b16 %v272
        %v401 = vunpack.c.l.b16 %v273
        %v402 = vunpack.c.l.b16 %v274
        %v403 = vunpack.c.l.b16 %v275
        %v404 = vunpack.c.l.b16 %v276
        %v405 = vunpack.c.l.b16 %v277
        %v406 = vunpack.c.l.b16 %v278
        %v407 = vunpack.c.l.b16 %v279
        %v408 = vunpack.c.l.b16 %v280
        %v409 = vunpack.c.l.b16 %v281
        %v410 = vunpack.c.l.b16 %v282
        %v411 = vunpack.c.l.b16 %v283
        %v412 = vunpack.c.l.b16 %v284
        %v413 = vunpack.c.l.b16 %v285
        %v414 = vunpack.c.l.b16 %v286
        %v415 = vunpack.c.l.b16 %v287
        %v416 = vunpack.c.l.b16 %v288
        %v417 = vunpack.c.l.b16 %v289
        %v418 = vunpack.c.l.b16 %v290
        %v419 = vunpack.c.l.b16 %v291
        %v420 = vunpack.c.l.b16 %v292
        %v421 = vunpack.c.l.b16 %v293
        %v422 = vunpack.c.l.b16 %v294
        %v423 = vunpack.c.l.b16 %v295
        %v424 = vunpack.c.l.b16 %v296
        %v425 = vunpack.c.l.b16 %v297
        %v426 = vpack.c.b16 %v379, %v378
        %v427 = vpack.c.b16 %v381, %v380
        %v428 = vpack.c.b16 %v383, %v382
        %v429 = vpack.c.b16 %v385, %v384
        %v430 = vpack.c.b16 %v387, %v386
        %v431 = vpack.c.b16 %v389, %v388
        %v432 = vpack.c.b16 %v391, %v390
        %v433 = vpack.c.b16 %v393, %v392
        %v434 = vpack.c.b16 %v395, %v394
        %v435 = vpack.c.b16 %v397, %v396
        %v436 = vpack.c.b16 %v399, %v398
        %v437 = vpack.c.b16 %v401, %v400
        %v438 = vpack.c.b16 %v403, %v402
        %v439 = vpack.c.b16 %v405, %v404
        %v440 = vpack.c.b16 %v407, %v406
        %v441 = vpack.c.b16 %v409, %v408
        %v442 = vpack.c.b16 %v411, %v410
        %v443 = vpack.c.b16 %v413, %v412
        %v444 = vpack.c.b16 %v415, %v414
        %v445 = vpack.c.b16 %v417, %v416
        %v446 = vpack.c.b16 %v419, %v418
        %v447 = vpack.c.b16 %v421, %v420
        %v448 = vpack.c.b16 %v423, %v422
        %v449 = vpack.c.b16 %v425, %v424
        %474 = vmatprep.subr.bf16.mxu0 0
        %475 = vmatpush1.bf16.msra.mxu0 %v426
        %476 = vmatprep.subr.bf16.mxu0 0
        %477 = vmatpush1.bf16.msra.mxu0 %v427
        %478 = vmatprep.subr.bf16.mxu0 0
        %479 = vmatpush1.bf16.msra.mxu0 %v428
        %480 = vmatprep.subr.bf16.mxu0 0
        %481 = vmatpush1.bf16.msra.mxu0 %v429
        %482 = vmatprep.subr.bf16.mxu0 0
        %483 = vmatpush1.bf16.msra.mxu0 %v430
        %484 = vmatprep.subr.bf16.mxu0 0
        %485 = vmatpush1.bf16.msra.mxu0 %v431
        %486 = vmatprep.subr.bf16.mxu0 0
        %487 = vmatpush1.bf16.msra.mxu0 %v432
        %488 = vmatprep.subr.bf16.mxu0 0
        %489 = vmatpush1.bf16.msra.mxu0 %v433
        %490 = vmatprep.subr.bf16.mxu0 0
        %491 = vmatpush1.bf16.msra.mxu0 %v434
        %492 = vmatprep.subr.bf16.mxu0 0
        %493 = vmatpush1.bf16.msra.mxu0 %v435
        %494 = vmatprep.subr.bf16.mxu0 0
        %495 = vmatpush1.bf16.msra.mxu0 %v436
        %496 = vmatprep.subr.bf16.mxu0 0
        %497 = vmatpush1.bf16.msra.mxu0 %v437
        %498 = vmatprep.subr.bf16.mxu0 0
        %499 = vmatpush1.bf16.msra.mxu0 %v438
        %500 = vmatprep.subr.bf16.mxu0 0
        %501 = vmatpush1.bf16.msra.mxu0 %v439
        %502 = vmatprep.subr.bf16.mxu0 0
        %503 = vmatpush1.bf16.msra.mxu0 %v440
        %504 = vmatprep.subr.bf16.mxu0 0
        %505 = vmatpush1.bf16.msra.mxu0 %v441
        %506 = vmatprep.mubr.bf16.mxu0 %v319
        %507 = vmatmul.mubr.bf16.gmra.mrb[0].mxu0 %v318
        %v508 = vpop.f32.mrb[0].mxu0
        %v509 = vadd.f32 0.0, %v508
        %v510 = vpop.f32.mrb[0].mxu0
        %v511 = vpop.f32.mrb[0].mxu0
        %v512 = vadd.f32 0.0, %v511
        %v513 = vpop.f32.mrb[0].mxu0
        %514 = vmatprep.mubr.bf16.mxu0 %v322
        %515 = vmatmul.mubr.bf16.gmra.mrb[0].mxu0 %v321
        %v516 = vpop.f32.mrb[0].mxu0
        %v517 = vadd.f32 0.0, %v516
        %v518 = vpop.f32.mrb[0].mxu0
        %v519 = vpop.f32.mrb[0].mxu0
        %v520 = vadd.f32 0.0, %v519
        %v521 = vpop.f32.mrb[0].mxu0
        %522 = vdwg.mxu0
        %523 = vmatprep.subr.bf16.mxu0 0
        %524 = vmatpush1.bf16.msra.mxu0 %v442
        %525 = vmatprep.subr.bf16.mxu0 0
        %526 = vmatpush1.bf16.msra.mxu0 %v443
        %527 = vmatprep.subr.bf16.mxu0 0
        %528 = vmatpush1.bf16.msra.mxu0 %v444
        %529 = vmatprep.subr.bf16.mxu0 0
        %530 = vmatpush1.bf16.msra.mxu0 %v445
        %531 = vmatprep.subr.bf16.mxu0 0
        %532 = vmatpush1.bf16.msra.mxu0 %v446
        %533 = vmatprep.subr.bf16.mxu0 0
        %534 = vmatpush1.bf16.msra.mxu0 %v447
        %535 = vmatprep.subr.bf16.mxu0 0
        %536 = vmatpush1.bf16.msra.mxu0 %v448
        %537 = vmatprep.subr.bf16.mxu0 0
        %538 = vmatpush1.bf16.msra.mxu0 %v449
        %539 = vmatprep.subr.bf16.mxu0 0
        %540 = vmatpush1.bf16.msra.mxu0 0
        %541 = vmatprep.subr.bf16.mxu0 0
        %542 = vmatpush1.bf16.msra.mxu0 0
        %543 = vmatprep.subr.bf16.mxu0 0
        %544 = vmatpush1.bf16.msra.mxu0 0
        %545 = vmatprep.subr.bf16.mxu0 0
        %546 = vmatpush1.bf16.msra.mxu0 0
        %547 = vmatprep.subr.bf16.mxu0 0
        %548 = vmatpush1.bf16.msra.mxu0 0
        %549 = vmatprep.subr.bf16.mxu0 0
        %550 = vmatpush1.bf16.msra.mxu0 0
        %551 = vmatprep.subr.bf16.mxu0 0
        %552 = vmatpush1.bf16.msra.mxu0 0
        %553 = vmatprep.subr.bf16.mxu0 0
        %554 = vmatpush1.bf16.msra.mxu0 0
        %555 = vmatprep.mubr.bf16.mxu0 0
        %556 = vmatmul.mubr.bf16.gmra.mrb[0].mxu0 %v320
        %v557 = vpop.f32.mrb[0].mxu0
        %v558 = vadd.f32 %v509, %v557
        %v559 = vpop.f32.mrb[0].mxu0
        %v560 = vpop.f32.mrb[0].mxu0
        %v561 = vadd.f32 %v512, %v560
        %v562 = vpop.f32.mrb[0].mxu0
        %563 = vmatprep.mubr.bf16.mxu0 0
        %564 = vmatmul.mubr.bf16.gmra.mrb[0].mxu0 %v323
        %v565 = vpop.f32.mrb[0].mxu0
        %v566 = vadd.f32 %v517, %v565
        %v567 = vpop.f32.mrb[0].mxu0
        %v568 = vpop.f32.mrb[0].mxu0
        %v569 = vadd.f32 %v520, %v568
        %v570 = vpop.f32.mrb[0].mxu0
        %571 = vdwg.mxu0
        %v572 = vadd.f32 %v238, %v558
        %v573 = vadd.f32 %v239, %v561
        %v574 = vadd.f32 %v240, %v566
        %v575 = vadd.f32 %v241, %v569
        %vm576 = vcmask 523264
        %577 = vst.msk [vmem:[#allocation2] sm:$0xff] %vm576, %v572
        %578 = vst.msk [vmem:[#allocation2 + $0x8] sm:$0xff] %vm576, %v573
        %579 = vst.msk [vmem:[#allocation2 + $0x10] sm:$0xff] %vm576, %v574
        %580 = vst.msk [vmem:[#allocation2 + $0x18] sm:$0xff] %vm576, %v575
        %p581 = scmp.eq.s32.totalorder %s27, 1
        // Predicated region
        $region41: #{msqnet_forward.5} parent=27 // pred_check
          %p582 = pneg %p581
        $region42: #{msqnet_forward.5} parent=27 // pred_check_branch
          %584 = sbr.rel (%p582) target = $region44
        $region43: #{msqnet_forward.5} parent=27 // pred_region
          %v585 = vld [vmem:[#allocation2] sm:$0xff]
          %v586 = vld [vmem:[#allocation2 + $0x8] sm:$0xff]
          %v587 = vld [vmem:[#allocation2 + $0x10] sm:$0xff]
          %v588 = vld [vmem:[#allocation2 + $0x18] sm:$0xff]
          %v589 = vpack.c.bf16 %v586, %v585
          %v590 = vpack.c.bf16 %v588, %v587
          %v593 = vunpack.c.l.b16 %v589
          %v594 = vunpack.c.h.b16 %v589
          %v595 = vunpack.c.l.b16 %v590
          %v596 = vunpack.c.h.b16 %v590
          %v597 = vpack.c.b16 %v593, %v593
          %v598 = vpack.c.b16 %v594, %v594
          %v599 = vpack.c.b16 %v595, %v595
          %v600 = vpack.c.b16 %v596, %v596
          %vm605 = vcmask 519168
          %606 = vst.msk [vmem:[#allocation8] sm:$0xf] %vm605, %v597
          %607 = vst.msk [vmem:[#allocation8 + $0x4] sm:$0xf] %vm605, %v598
          %608 = vst.msk [vmem:[#allocation8 + $0x8] sm:$0xf] %vm605, %v599
          %609 = vst.msk [vmem:[#allocation8 + $0xc] sm:$0xf] %vm605, %v600
        $region44: #{msqnet_forward.5} parent=27 // pred_fallthru
          _
        // Predicated region
        $region45: #{msqnet_forward.5} parent=27 // pred_check
          %p610 = pneg %p115
        $region46: #{msqnet_forward.5} parent=27 // pred_check_branch
          %612 = sbr.rel (%p610) target = $region48
        $region47: #{msqnet_forward.5} parent=27 // pred_region
          %s613 = smul.u32 4, %s25
          %s615 = ssub.s32 256, 256
          %616 = vsyncadd [#allocation5], %s615
          %s617 = sadd.s32 %s26, %s613
          %s618 = smul.addr %s617, 64
          %s619 = scalar_lea.hbm %s2, %s618
          %s620 = sshll.u32 [#allocation8], 4
          %s621 = int_to_ptr.vmem [resolvable:$true] %s620
          %626 = dma.vmem_to_hbm [thread:$0]  %s621, 256, %s619, [#allocation5], 64, 64, 4
        $region48: #{msqnet_forward.5} parent=27 // pred_fallthru
          _
        // Predicated region
        $region49: #{msqnet_forward.5} parent=27 // pred_check
          %p627 = pneg %p115
        $region50: #{msqnet_forward.5} parent=27 // pred_check_branch
          %629 = sbr.rel (%p627) target = $region52
        $region51: #{msqnet_forward.5} parent=27 // pred_region
          %630 = dma.done [#allocation5], 256
        $region52: #{msqnet_forward.5} parent=27 // pred_fallthru
          _
      $region28: #{msqnet_forward.5} parent=5 // pred_fallthru
        _
      %p631 = scmp.le.s32.totalorder 2, %s15
      // Predicated region
      $region53: #{msqnet_forward.5} parent=5 // pred_check
        %p632 = pneg %p631
      $region54: #{msqnet_forward.5} parent=5 // pred_check_branch
        %634 = sbr.rel (%p632) target = $region56
      $region55: #{msqnet_forward.5} parent=5 // pred_region
        %s635 = ssub.s32 %s15, 2
      $region56: #{msqnet_forward.5} parent=5 // pred_fallthru
        _
    $region6: #{msqnet_forward.5} parent=1 // loop_footer
      %s19 = sadd.s32 1, %s15
    $region7: #{msqnet_forward.5} parent=1 // loop_footer_branch
      %14 = sbr.rel target = $region3
    $region8: #{msqnet_forward.5} parent=1 // loop_exit
      _
    %636 = vsyncpa [#allocation4], 1
    %s637 = scalar_lea.sflag [#allocation4], 1
    %638 = vsyncpa %s637, 1
    %639 = vsyncpa [#allocation7], 1
    %s640 = scalar_lea.sflag [#allocation7], 1
    %641 = vsyncpa %s640, 1
    %642 = vsyncpa [#allocation5], 1
    %s643 = scalar_lea.sflag [#allocation5], 1
    %644 = vsyncpa %s643, 1

// kernel: msqnet_forward.7
$region0: #{msqnet_forward.7}
  #allocation0 [shape = 'u32[]', space=smem, size = 0x4, offset = 0x4, fixed_abs, tag = 'smem constant byte address 0x4 - core index']
  #allocation1 [shape = 'u32[144,128]{1,0:T(1,128)}', space=vmem, size = 0x12000, scoped, tag = 'internal scratch']
  %s0 = inlined_call_operand.hbm [shape: bf16[2,16,64], index: 0, kind: input, shape index: {}]
  %s1 = inlined_call_operand.hbm [shape: bf16[2,16,64], index: 1, kind: input, shape index: {}]
  %s2 = inlined_call_operand.hbm [shape: bf16[2,32], index: 2, kind: input, shape index: {}]
  %s3 = inlined_call_operand.hbm [shape: f32[16,32], index: 3, kind: input, shape index: {}]
  %s4 = inlined_call_operand.hbm [shape: bf16[10,32], index: 4, kind: input, shape index: {}]
  %s5 = inlined_call_operand.hbm [shape: bf16[64,32], index: 5, kind: input, shape index: {}]
  %s6 = inlined_call_operand.hbm [shape: bf16[32,32], index: 6, kind: input, shape index: {}]
  %s7 = inlined_call_operand.hbm [shape: bf16[32,32], index: 7, kind: input, shape index: {}]
  %s8 = inlined_call_operand.hbm [shape: bf16[64,32], index: 8, kind: input, shape index: {}]
  %s9 = inlined_call_operand.hbm [shape: bf16[32,32], index: 9, kind: input, shape index: {}]
  %s10 = inlined_call_operand.hbm [shape: f32[1,32], index: 10, kind: input, shape index: {}]
  %s11 = inlined_call_operand.hbm [shape: bf16[32,64], index: 11, kind: input, shape index: {}]
  %s12 = inlined_call_operand.hbm [shape: f32[1,64], index: 12, kind: input, shape index: {}]
  %s13 = inlined_call_operand.hbm [shape: bf16[32,32], index: 13, kind: input, shape index: {}]
  %s14 = inlined_call_operand.hbm [shape: f32[1,32], index: 14, kind: input, shape index: {}]
  %s15 = inlined_call_operand.hbm [shape: bf16[32,10], index: 15, kind: input, shape index: {}]
  %s16 = inlined_call_operand.hbm [shape: f32[16,10], index: 16, kind: input, shape index: {}]
  %s17 = inlined_call_operand.hbm [shape: f32[1,10], index: 17, kind: input, shape index: {}]
  %s18 = inlined_call_operand.hbm [shape: f32[2,10], index: 18, kind: output, shape index: {}]
  %s19 = sld [smem:[#allocation0]]
  $region154: #{msqnet_forward.7} parent=0
    _
  %s21 = ssub.s32 1, %s19
  %s22 = scalar_select 0, %s21, %s19
  $region1: #{msqnet_forward.7} parent=0
    #allocation2 [shape = 'u8[8192]{0}', space=vmem, size = 0x2000, scoped, tag = 'input window, operand 0, single buffered']
    #allocation3 [shape = 's32[1]{0}', space=sflag, size = 0x4, scoped, tag = 'scoped memory for msqnet_forward.7']
    #allocation4 [shape = 's32[1]{0}', space=sflag, size = 0x4, scoped, tag = 'scoped memory for msqnet_forward.7']
    #allocation5 [shape = 'u8[8192]{0}', space=vmem, size = 0x2000, scoped, tag = 'input window, operand 1, single buffered']
    #allocation6 [shape = 's32[1]{0}', space=sflag, size = 0x4, scoped, tag = 'scoped memory for msqnet_forward.7']
    #allocation7 [shape = 'u8[512]{0}', space=vmem, size = 0x400, scoped, tag = 'input window, operand 2, single buffered']
    #allocation8 [shape = 'u8[8192]{0}', space=vmem, size = 0x2000, scoped, tag = 'input window, operand 3, single buffered']
    #allocation9 [shape = 's32[1]{0}', space=sflag, size = 0x4, scoped, tag = 'scoped memory for msqnet_forward.7']
    #allocation10 [shape = 'u8[4096]{0}', space=vmem, size = 0x1000, scoped, tag = 'input window, operand 4, single buffered']
    #allocation11 [shape = 'u8[16384]{0}', space=vmem, size = 0x4000, scoped, tag = 'input window, operand 5, single buffered']
    #allocation12 [shape = 's32[1]{0}', space=sflag, size = 0x4, scoped, tag = 'scoped memory for msqnet_forward.7']
    #allocation13 [shape = 'u8[8192]{0}', space=vmem, size = 0x2000, scoped, tag = 'input window, operand 6, single buffered']
    #allocation14 [shape = 'u8[8192]{0}', space=vmem, size = 0x2000, scoped, tag = 'input window, operand 7, single buffered']
    #allocation15 [shape = 's32[1]{0}', space=sflag, size = 0x4, scoped, tag = 'scoped memory for msqnet_forward.7']
    #allocation16 [shape = 'u8[16384]{0}', space=vmem, size = 0x4000, scoped, tag = 'input window, operand 8, single buffered']
    #allocation17 [shape = 'u8[8192]{0}', space=vmem, size = 0x2000, scoped, tag = 'input window, operand 9, single buffered']
    #allocation18 [shape = 's32[1]{0}', space=sflag, size = 0x4, scoped, tag = 'scoped memory for msqnet_forward.7']
    #allocation19 [shape = 'u8[512]{0}', space=vmem, size = 0x400, scoped, tag = 'input window, operand 10, single buffered']
    #allocation20 [shape = 'u8[8192]{0}', space=vmem, size = 0x2000, scoped, tag = 'input window, operand 11, single buffered']
    #allocation21 [shape = 's32[1]{0}', space=sflag, size = 0x4, scoped, tag = 'scoped memory for msqnet_forward.7']
    #allocation22 [shape = 'u8[512]{0}', space=vmem, size = 0x400, scoped, tag = 'input window, operand 12, single buffered']
    #allocation23 [shape = 'u8[8192]{0}', space=vmem, size = 0x2000, scoped, tag = 'input window, operand 13, single buffered']
    #allocation24 [shape = 's32[1]{0}', space=sflag, size = 0x4, scoped, tag = 'scoped memory for msqnet_forward.7']
    #allocation25 [shape = 'u8[512]{0}', space=vmem, size = 0x400, scoped, tag = 'input window, operand 14, single buffered']
    #allocation26 [shape = 'u8[8192]{0}', space=vmem, size = 0x2000, scoped, tag = 'input window, operand 15, single buffered']
    #allocation27 [shape = 's32[1]{0}', space=sflag, size = 0x4, scoped, tag = 'scoped memory for msqnet_forward.7']
    #allocation28 [shape = 'u8[8192]{0}', space=vmem, size = 0x2000, scoped, tag = 'input window, operand 16, single buffered']
    #allocation29 [shape = 'u8[512]{0}', space=vmem, size = 0x400, scoped, tag = 'input window, operand 17, single buffered']
    #allocation30 [shape = 's32[1]{0}', space=sflag, size = 0x4, scoped, tag = 'scoped memory for msqnet_forward.7']
    #allocation31 [shape = 'u8[1024]{0}', space=vmem, size = 0x400, scoped, tag = 'output window, operand 0, single buffered']
    %23 = vsyncpa [#allocation3], 0
    %24 = vsyncpa [#allocation6], 0
    %25 = vsyncpa [#allocation9], 0
    %26 = vsyncpa [#allocation12], 0
    %27 = vsyncpa [#allocation15], 0
    %28 = vsyncpa [#allocation18], 0
    %29 = vsyncpa [#allocation21], 0
    %30 = vsyncpa [#allocation24], 0
    %31 = vsyncpa [#allocation27], 0
    %32 = vsyncpa [#allocation30], 0
    %33 = vsyncpa [#allocation4], 0
    // Predicated region
    $region2: #{msqnet_forward.7} parent=1 // pred_check
      _
    $region3: #{msqnet_forward.7} parent=1 // pred_check_branch
      %35 = sbr.rel (0) target = $region5
    $region4: #{msqnet_forward.7} parent=1 // pred_region
      %s37 = ssub.s32 256, 256
      %38 = vsyncadd [#allocation3], %s37
      %s39 = sshll.u32 [#allocation2], 4
      %s40 = int_to_ptr.vmem [resolvable:$true] %s39
      %45 = dma.hbm_to_vmem [thread:$0]  %s0, 256, %s40, [#allocation3], 64, 64, 4
    $region5: #{msqnet_forward.7} parent=1 // pred_fallthru
      _
    // Predicated region
    $region6: #{msqnet_forward.7} parent=1 // pred_check
      _
    $region7: #{msqnet_forward.7} parent=1 // pred_check_branch
      %47 = sbr.rel (0) target = $region9
    $region8: #{msqnet_forward.7} parent=1 // pred_region
      %s49 = ssub.s32 256, 256
      %50 = vsyncadd [#allocation6], %s49
      %s51 = sshll.u32 [#allocation5], 4
      %s52 = int_to_ptr.vmem [resolvable:$true] %s51
      %57 = dma.hbm_to_vmem [thread:$0]  %s1, 256, %s52, [#allocation6], 64, 64, 4
    $region9: #{msqnet_forward.7} parent=1 // pred_fallthru
      _
    // Predicated region
    $region10: #{msqnet_forward.7} parent=1 // pred_check
      _
    $region11: #{msqnet_forward.7} parent=1 // pred_check_branch
      %59 = sbr.rel (0) target = $region13
    $region12: #{msqnet_forward.7} parent=1 // pred_region
      %s61 = ssub.s32 16, 16
      %62 = vsyncadd [#allocation6], %s61
      %s64 = sshll.u32 [#allocation7], 4
      %s65 = int_to_ptr.vmem [resolvable:$true] %s64
      %67 = dma.hbm_to_vmem [thread:$0]  %s2, 16, %s65, [#allocation6]
    $region13: #{msqnet_forward.7} parent=1 // pred_fallthru
      _
    // Predicated region
    $region14: #{msqnet_forward.7} parent=1 // pred_check
      _
    $region15: #{msqnet_forward.7} parent=1 // pred_check_branch
      %69 = sbr.rel (0) target = $region17
    $region16: #{msqnet_forward.7} parent=1 // pred_region
      %s71 = ssub.s32 256, 256
      %72 = vsyncadd [#allocation9], %s71
      %s73 = sshll.u32 [#allocation8], 4
      %s74 = int_to_ptr.vmem [resolvable:$true] %s73
      %79 = dma.hbm_to_vmem [thread:$0]  %s3, 256, %s74, [#allocation9], 128, 128, 8
    $region17: #{msqnet_forward.7} parent=1 // pred_fallthru
      _
    // Predicated region
    $region18: #{msqnet_forward.7} parent=1 // pred_check
      _
    $region19: #{msqnet_forward.7} parent=1 // pred_check_branch
      %81 = sbr.rel (0) target = $region21
    $region20: #{msqnet_forward.7} parent=1 // pred_region
      %s83 = ssub.s32 128, 128
      %84 = vsyncadd [#allocation9], %s83
      %s85 = sshll.u32 [#allocation10], 4
      %s86 = int_to_ptr.vmem [resolvable:$true] %s85
      %91 = dma.hbm_to_vmem [thread:$0]  %s4, 128, %s86, [#allocation9], 64, 64, 4
    $region21: #{msqnet_forward.7} parent=1 // pred_fallthru
      _
    // Predicated region
    $region22: #{msqnet_forward.7} parent=1 // pred_check
      _
    $region23: #{msqnet_forward.7} parent=1 // pred_check_branch
      %93 = sbr.rel (0) target = $region25
    $region24: #{msqnet_forward.7} parent=1 // pred_region
      %s95 = ssub.s32 512, 512
      %96 = vsyncadd [#allocation12], %s95
      %s97 = sshll.u32 [#allocation11], 4
      %s98 = int_to_ptr.vmem [resolvable:$true] %s97
      %103 = dma.hbm_to_vmem [thread:$0]  %s5, 512, %s98, [#allocation12], 64, 64, 4
    $region25: #{msqnet_forward.7} parent=1 // pred_fallthru
      _
    // Predicated region
    $region26: #{msqnet_forward.7} parent=1 // pred_check
      _
    $region27: #{msqnet_forward.7} parent=1 // pred_check_branch
      %105 = sbr.rel (0) target = $region29
    $region28: #{msqnet_forward.7} parent=1 // pred_region
      %s107 = ssub.s32 256, 256
      %108 = vsyncadd [#allocation12], %s107
      %s109 = sshll.u32 [#allocation13], 4
      %s110 = int_to_ptr.vmem [resolvable:$true] %s109
      %115 = dma.hbm_to_vmem [thread:$0]  %s6, 256, %s110, [#allocation12], 64, 64, 4
    $region29: #{msqnet_forward.7} parent=1 // pred_fallthru
      _
    // Predicated region
    $region30: #{msqnet_forward.7} parent=1 // pred_check
      _
    $region31: #{msqnet_forward.7} parent=1 // pred_check_branch
      %117 = sbr.rel (0) target = $region33
    $region32: #{msqnet_forward.7} parent=1 // pred_region
      %s119 = ssub.s32 256, 256
      %120 = vsyncadd [#allocation15], %s119
      %s121 = sshll.u32 [#allocation14], 4
      %s122 = int_to_ptr.vmem [resolvable:$true] %s121
      %127 = dma.hbm_to_vmem [thread:$0]  %s7, 256, %s122, [#allocation15], 64, 64, 4
    $region33: #{msqnet_forward.7} parent=1 // pred_fallthru
      _
    // Predicated region
    $region34: #{msqnet_forward.7} parent=1 // pred_check
      _
    $region35: #{msqnet_forward.7} parent=1 // pred_check_branch
      %129 = sbr.rel (0) target = $region37
    $region36: #{msqnet_forward.7} parent=1 // pred_region
      %s131 = ssub.s32 512, 512
      %132 = vsyncadd [#allocation15], %s131
      %s133 = sshll.u32 [#allocation16], 4
      %s134 = int_to_ptr.vmem [resolvable:$true] %s133
      %139 = dma.hbm_to_vmem [thread:$0]  %s8, 512, %s134, [#allocation15], 64, 64, 4
    $region37: #{msqnet_forward.7} parent=1 // pred_fallthru
      _
    // Predicated region
    $region38: #{msqnet_forward.7} parent=1 // pred_check
      _
    $region39: #{msqnet_forward.7} parent=1 // pred_check_branch
      %141 = sbr.rel (0) target = $region41
    $region40: #{msqnet_forward.7} parent=1 // pred_region
      %s143 = ssub.s32 256, 256
      %144 = vsyncadd [#allocation18], %s143
      %s145 = sshll.u32 [#allocation17], 4
      %s146 = int_to_ptr.vmem [resolvable:$true] %s145
      %151 = dma.hbm_to_vmem [thread:$0]  %s9, 256, %s146, [#allocation18], 64, 64, 4
    $region41: #{msqnet_forward.7} parent=1 // pred_fallthru
      _
    // Predicated region
    $region42: #{msqnet_forward.7} parent=1 // pred_check
      _
    $region43: #{msqnet_forward.7} parent=1 // pred_check_branch
      %153 = sbr.rel (0) target = $region45
    $region44: #{msqnet_forward.7} parent=1 // pred_region
      %s155 = ssub.s32 16, 16
      %156 = vsyncadd [#allocation18], %s155
      %s158 = sshll.u32 [#allocation19], 4
      %s159 = int_to_ptr.vmem [resolvable:$true] %s158
      %161 = dma.hbm_to_vmem [thread:$0]  %s10, 16, %s159, [#allocation18]
    $region45: #{msqnet_forward.7} parent=1 // pred_fallthru
      _
    // Predicated region
    $region46: #{msqnet_forward.7} parent=1 // pred_check
      _
    $region47: #{msqnet_forward.7} parent=1 // pred_check_branch
      %163 = sbr.rel (0) target = $region49
    $region48: #{msqnet_forward.7} parent=1 // pred_region
      %s165 = ssub.s32 256, 256
      %166 = vsyncadd [#allocation21], %s165
      %s167 = sshll.u32 [#allocation20], 4
      %s168 = int_to_ptr.vmem [resolvable:$true] %s167
      %173 = dma.hbm_to_vmem [thread:$0]  %s11, 256, %s168, [#allocation21], 64, 64, 4
    $region49: #{msqnet_forward.7} parent=1 // pred_fallthru
      _
    // Predicated region
    $region50: #{msqnet_forward.7} parent=1 // pred_check
      _
    $region51: #{msqnet_forward.7} parent=1 // pred_check_branch
      %175 = sbr.rel (0) target = $region53
    $region52: #{msqnet_forward.7} parent=1 // pred_region
      %s177 = ssub.s32 16, 16
      %178 = vsyncadd [#allocation21], %s177
      %s180 = sshll.u32 [#allocation22], 4
      %s181 = int_to_ptr.vmem [resolvable:$true] %s180
      %183 = dma.hbm_to_vmem [thread:$0]  %s12, 16, %s181, [#allocation21]
    $region53: #{msqnet_forward.7} parent=1 // pred_fallthru
      _
    // Predicated region
    $region54: #{msqnet_forward.7} parent=1 // pred_check
      _
    $region55: #{msqnet_forward.7} parent=1 // pred_check_branch
      %185 = sbr.rel (0) target = $region57
    $region56: #{msqnet_forward.7} parent=1 // pred_region
      %s187 = ssub.s32 256, 256
      %188 = vsyncadd [#allocation24], %s187
      %s189 = sshll.u32 [#allocation23], 4
      %s190 = int_to_ptr.vmem [resolvable:$true] %s189
      %195 = dma.hbm_to_vmem [thread:$0]  %s13, 256, %s190, [#allocation24], 64, 64, 4
    $region57: #{msqnet_forward.7} parent=1 // pred_fallthru
      _
    // Predicated region
    $region58: #{msqnet_forward.7} parent=1 // pred_check
      _
    $region59: #{msqnet_forward.7} parent=1 // pred_check_branch
      %197 = sbr.rel (0) target = $region61
    $region60: #{msqnet_forward.7} parent=1 // pred_region
      %s199 = ssub.s32 16, 16
      %200 = vsyncadd [#allocation24], %s199
      %s202 = sshll.u32 [#allocation25], 4
      %s203 = int_to_ptr.vmem [resolvable:$true] %s202
      %205 = dma.hbm_to_vmem [thread:$0]  %s14, 16, %s203, [#allocation24]
    $region61: #{msqnet_forward.7} parent=1 // pred_fallthru
      _
    // Predicated region
    $region62: #{msqnet_forward.7} parent=1 // pred_check
      _
    $region63: #{msqnet_forward.7} parent=1 // pred_check_branch
      %207 = sbr.rel (0) target = $region65
    $region64: #{msqnet_forward.7} parent=1 // pred_region
      %s209 = ssub.s32 256, 256
      %210 = vsyncadd [#allocation27], %s209
      %s211 = sshll.u32 [#allocation26], 4
      %s212 = int_to_ptr.vmem [resolvable:$true] %s211
      %217 = dma.hbm_to_vmem [thread:$0]  %s15, 256, %s212, [#allocation27], 64, 64, 4
    $region65: #{msqnet_forward.7} parent=1 // pred_fallthru
      _
    // Predicated region
    $region66: #{msqnet_forward.7} parent=1 // pred_check
      _
    $region67: #{msqnet_forward.7} parent=1 // pred_check_branch
      %219 = sbr.rel (0) target = $region69
    $region68: #{msqnet_forward.7} parent=1 // pred_region
      %s221 = ssub.s32 256, 256
      %222 = vsyncadd [#allocation27], %s221
      %s223 = sshll.u32 [#allocation28], 4
      %s224 = int_to_ptr.vmem [resolvable:$true] %s223
      %229 = dma.hbm_to_vmem [thread:$0]  %s16, 256, %s224, [#allocation27], 128, 128, 8
    $region69: #{msqnet_forward.7} parent=1 // pred_fallthru
      _
    // Predicated region
    $region70: #{msqnet_forward.7} parent=1 // pred_check
      _
    $region71: #{msqnet_forward.7} parent=1 // pred_check_branch
      %231 = sbr.rel (0) target = $region73
    $region72: #{msqnet_forward.7} parent=1 // pred_region
      %s233 = ssub.s32 16, 16
      %234 = vsyncadd [#allocation30], %s233
      %s236 = sshll.u32 [#allocation29], 4
      %s237 = int_to_ptr.vmem [resolvable:$true] %s236
      %239 = dma.hbm_to_vmem [thread:$0]  %s17, 16, %s237, [#allocation30]
    $region73: #{msqnet_forward.7} parent=1 // pred_fallthru
      _
    // Predicated region
    $region74: #{msqnet_forward.7} parent=1 // pred_check
      _
    $region75: #{msqnet_forward.7} parent=1 // pred_check_branch
      %241 = sbr.rel (0) target = $region77
    $region76: #{msqnet_forward.7} parent=1 // pred_region
      %242 = dma.done [#allocation3], 256
    $region77: #{msqnet_forward.7} parent=1 // pred_fallthru
      _
    // Predicated region
    $region78: #{msqnet_forward.7} parent=1 // pred_check
      _
    $region79: #{msqnet_forward.7} parent=1 // pred_check_branch
      %244 = sbr.rel (0) target = $region81
    $region80: #{msqnet_forward.7} parent=1 // pred_region
      %245 = dma.done [#allocation6], 256
    $region81: #{msqnet_forward.7} parent=1 // pred_fallthru
      _
    // Predicated region
    $region82: #{msqnet_forward.7} parent=1 // pred_check
      _
    $region83: #{msqnet_forward.7} parent=1 // pred_check_branch
      %247 = sbr.rel (0) target = $region85
    $region84: #{msqnet_forward.7} parent=1 // pred_region
      %248 = dma.done [#allocation6], 16
    $region85: #{msqnet_forward.7} parent=1 // pred_fallthru
      _
    // Predicated region
    $region86: #{msqnet_forward.7} parent=1 // pred_check
      _
    $region87: #{msqnet_forward.7} parent=1 // pred_check_branch
      %250 = sbr.rel (0) target = $region89
    $region88: #{msqnet_forward.7} parent=1 // pred_region
      %251 = dma.done [#allocation9], 256
    $region89: #{msqnet_forward.7} parent=1 // pred_fallthru
      _
    // Predicated region
    $region90: #{msqnet_forward.7} parent=1 // pred_check
      _
    $region91: #{msqnet_forward.7} parent=1 // pred_check_branch
      %253 = sbr.rel (0) target = $region93
    $region92: #{msqnet_forward.7} parent=1 // pred_region
      %254 = dma.done [#allocation9], 128
    $region93: #{msqnet_forward.7} parent=1 // pred_fallthru
      _
    // Predicated region
    $region94: #{msqnet_forward.7} parent=1 // pred_check
      _
    $region95: #{msqnet_forward.7} parent=1 // pred_check_branch
      %256 = sbr.rel (0) target = $region97
    $region96: #{msqnet_forward.7} parent=1 // pred_region
      %257 = dma.done [#allocation12], 512
    $region97: #{msqnet_forward.7} parent=1 // pred_fallthru
      _
    // Predicated region
    $region98: #{msqnet_forward.7} parent=1 // pred_check
      _
    $region99: #{msqnet_forward.7} parent=1 // pred_check_branch
      %259 = sbr.rel (0) target = $region101
    $region100: #{msqnet_forward.7} parent=1 // pred_region
      %260 = dma.done [#allocation12], 256
    $region101: #{msqnet_forward.7} parent=1 // pred_fallthru
      _
    // Predicated region
    $region102: #{msqnet_forward.7} parent=1 // pred_check
      _
    $region103: #{msqnet_forward.7} parent=1 // pred_check_branch
      %262 = sbr.rel (0) target = $region105
    $region104: #{msqnet_forward.7} parent=1 // pred_region
      %263 = dma.done [#allocation15], 256
    $region105: #{msqnet_forward.7} parent=1 // pred_fallthru
      _
    // Predicated region
    $region106: #{msqnet_forward.7} parent=1 // pred_check
      _
    $region107: #{msqnet_forward.7} parent=1 // pred_check_branch
      %265 = sbr.rel (0) target = $region109
    $region108: #{msqnet_forward.7} parent=1 // pred_region
      %266 = dma.done [#allocation15], 512
    $region109: #{msqnet_forward.7} parent=1 // pred_fallthru
      _
    // Predicated region
    $region110: #{msqnet_forward.7} parent=1 // pred_check
      _
    $region111: #{msqnet_forward.7} parent=1 // pred_check_branch
      %268 = sbr.rel (0) target = $region113
    $region112: #{msqnet_forward.7} parent=1 // pred_region
      %269 = dma.done [#allocation18], 256
    $region113: #{msqnet_forward.7} parent=1 // pred_fallthru
      _
    // Predicated region
    $region114: #{msqnet_forward.7} parent=1 // pred_check
      _
    $region115: #{msqnet_forward.7} parent=1 // pred_check_branch
      %271 = sbr.rel (0) target = $region117
    $region116: #{msqnet_forward.7} parent=1 // pred_region
      %272 = dma.done [#allocation18], 16
    $region117: #{msqnet_forward.7} parent=1 // pred_fallthru
      _
    // Predicated region
    $region118: #{msqnet_forward.7} parent=1 // pred_check
      _
    $region119: #{msqnet_forward.7} parent=1 // pred_check_branch
      %274 = sbr.rel (0) target = $region121
    $region120: #{msqnet_forward.7} parent=1 // pred_region
      %275 = dma.done [#allocation21], 256
    $region121: #{msqnet_forward.7} parent=1 // pred_fallthru
      _
    // Predicated region
    $region122: #{msqnet_forward.7} parent=1 // pred_check
      _
    $region123: #{msqnet_forward.7} parent=1 // pred_check_branch
      %277 = sbr.rel (0) target = $region125
    $region124: #{msqnet_forward.7} parent=1 // pred_region
      %278 = dma.done [#allocation21], 16
    $region125: #{msqnet_forward.7} parent=1 // pred_fallthru
      _
    // Predicated region
    $region126: #{msqnet_forward.7} parent=1 // pred_check
      _
    $region127: #{msqnet_forward.7} parent=1 // pred_check_branch
      %280 = sbr.rel (0) target = $region129
    $region128: #{msqnet_forward.7} parent=1 // pred_region
      %281 = dma.done [#allocation24], 256
    $region129: #{msqnet_forward.7} parent=1 // pred_fallthru
      _
    // Predicated region
    $region130: #{msqnet_forward.7} parent=1 // pred_check
      _
    $region131: #{msqnet_forward.7} parent=1 // pred_check_branch
      %283 = sbr.rel (0) target = $region133
    $region132: #{msqnet_forward.7} parent=1 // pred_region
      %284 = dma.done [#allocation24], 16
    $region133: #{msqnet_forward.7} parent=1 // pred_fallthru
      _
    // Predicated region
    $region134: #{msqnet_forward.7} parent=1 // pred_check
      _
    $region135: #{msqnet_forward.7} parent=1 // pred_check_branch
      %286 = sbr.rel (0) target = $region137
    $region136: #{msqnet_forward.7} parent=1 // pred_region
      %287 = dma.done [#allocation27], 256
    $region137: #{msqnet_forward.7} parent=1 // pred_fallthru
      _
    // Predicated region
    $region138: #{msqnet_forward.7} parent=1 // pred_check
      _
    $region139: #{msqnet_forward.7} parent=1 // pred_check_branch
      %289 = sbr.rel (0) target = $region141
    $region140: #{msqnet_forward.7} parent=1 // pred_region
      %290 = dma.done [#allocation27], 256
    $region141: #{msqnet_forward.7} parent=1 // pred_fallthru
      _
    // Predicated region
    $region142: #{msqnet_forward.7} parent=1 // pred_check
      _
    $region143: #{msqnet_forward.7} parent=1 // pred_check_branch
      %292 = sbr.rel (0) target = $region145
    $region144: #{msqnet_forward.7} parent=1 // pred_region
      %293 = dma.done [#allocation30], 16
    $region145: #{msqnet_forward.7} parent=1 // pred_fallthru
      _
    %v295 = vld [vmem:[#allocation2] sm:$0xf]
    %v296 = vld [vmem:[#allocation2 + $0x4] sm:$0xf]
    %v297 = vld [vmem:[#allocation2 + $0x8] sm:$0xf]
    %v298 = vld [vmem:[#allocation2 + $0xc] sm:$0xf]
    %v299 = vld [vmem:[#allocation11] sm:$0xf]
    %v300 = vld [vmem:[#allocation11 + $0x4] sm:$0xf]
    %v301 = vld [vmem:[#allocation11 + $0x8] sm:$0xf]
    %v302 = vld [vmem:[#allocation11 + $0xc] sm:$0xf]
    %v303 = vld [vmem:[#allocation11 + $0x10] sm:$0xf]
    %v304 = vld [vmem:[#allocation11 + $0x14] sm:$0xf]
    %v305 = vld [vmem:[#allocation11 + $0x18] sm:$0xf]
    %v306 = vld [vmem:[#allocation11 + $0x1c] sm:$0xf]
    %v311 = vunpack.c.l.b16 %v295
    %v312 = vunpack.c.l.b16 %v296
    %v313 = vunpack.c.l.b16 %v297
    %v314 = vunpack.c.l.b16 %v298
    %v315 = vpack.c.b16 %v312, %v311
    %v316 = vpack.c.b16 %v314, %v313
    %v325 = vunpack.c.l.b16 %v299
    %v326 = vunpack.c.l.b16 %v300
    %v327 = vunpack.c.l.b16 %v301
    %v328 = vunpack.c.l.b16 %v302
    %v329 = vunpack.c.l.b16 %v303
    %v330 = vunpack.c.l.b16 %v304
    %v331 = vunpack.c.l.b16 %v305
    %v332 = vunpack.c.l.b16 %v306
    %v333 = vpack.c.b16 %v326, %v325
    %v334 = vpack.c.b16 %v328, %v327
    %v335 = vpack.c.b16 %v330, %v329
    %v336 = vpack.c.b16 %v332, %v331
    %vm341 = vcmask 523264
    %v343 = vsel %vm341, %v315, 0
    %v346 = vsel %vm341, %v316, 0
    %348 = vmatprep.subr.bf16.mxu0 0
    %349 = vmatpush1.bf16.msra.mxu0 %v333
    %350 = vmatprep.subr.bf16.mxu0 0
    %351 = vmatpush1.bf16.msra.mxu0 %v334
    %352 = vmatprep.subr.bf16.mxu0 0
    %353 = vmatpush1.bf16.msra.mxu0 %v335
    %354 = vmatprep.subr.bf16.mxu0 0
    %355 = vmatpush1.bf16.msra.mxu0 %v336
    %356 = vmatprep.subr.bf16.mxu0 0
    %357 = vmatpush1.bf16.msra.mxu0 0
    %358 = vmatprep.subr.bf16.mxu0 0
    %359 = vmatpush1.bf16.msra.mxu0 0
    %360 = vmatprep.subr.bf16.mxu0 0
    %361 = vmatpush1.bf16.msra.mxu0 0
    %362 = vmatprep.subr.bf16.mxu0 0
    %363 = vmatpush1.bf16.msra.mxu0 0
    %364 = vmatprep.subr.bf16.mxu0 0
    %365 = vmatpush1.bf16.msra.mxu0 0
    %366 = vmatprep.subr.bf16.mxu0 0
    %367 = vmatpush1.bf16.msra.mxu0 0
    %368 = vmatprep.subr.bf16.mxu0 0
    %369 = vmatpush1.bf16.msra.mxu0 0
    %370 = vmatprep.subr.bf16.mxu0 0
    %371 = vmatpush1.bf16.msra.mxu0 0
    %372 = vmatprep.subr.bf16.mxu0 0
    %373 = vmatpush1.bf16.msra.mxu0 0
    %374 = vmatprep.subr.bf16.mxu0 0
    %375 = vmatpush1.bf16.msra.mxu0 0
    %376 = vmatprep.subr.bf16.mxu0 0
    %377 = vmatpush1.bf16.msra.mxu0 0
    %378 = vmatprep.subr.bf16.mxu0 0
    %379 = vmatpush1.bf16.msra.mxu0 0
    %380 = vmatprep.mubr.bf16.mxu0 0
    %381 = vmatmul.mubr.bf16.gmra.mrb[0].mxu0 %v343
    %v382 = vpop.f32.mrb[0].mxu0
    %v383 = vadd.f32 0.0, %v382
    %v384 = vpop.f32.mrb[0].mxu0
    %v385 = vpop.f32.mrb[0].mxu0
    %v386 = vadd.f32 0.0, %v385
    %v387 = vpop.f32.mrb[0].mxu0
    %388 = vmatprep.mubr.bf16.mxu0 0
    %389 = vmatmul.mubr.bf16.gmra.mrb[0].mxu0 %v346
    %v390 = vpop.f32.mrb[0].mxu0
    %v391 = vadd.f32 0.0, %v390
    %v392 = vpop.f32.mrb[0].mxu0
    %v393 = vpop.f32.mrb[0].mxu0
    %v394 = vadd.f32 0.0, %v393
    %v395 = vpop.f32.mrb[0].mxu0
    %396 = vdwg.mxu0
    %v397 = vld [vmem:[#allocation7] sm:$0x1]
    %v398 = vld [vmem:[#allocation13] sm:$0xf]
    %v399 = vld [vmem:[#allocation13 + $0x4] sm:$0xf]
    %v400 = vld [vmem:[#allocation13 + $0x8] sm:$0xf]
    %v401 = vld [vmem:[#allocation13 + $0xc] sm:$0xf]
    %v406 = vunpack.c.l.b16 %v398
    %v407 = vunpack.c.l.b16 %v399
    %v408 = vunpack.c.l.b16 %v400
    %v409 = vunpack.c.l.b16 %v401
    %v410 = vpack.c.b16 %v407, %v406
    %v411 = vpack.c.b16 %v409, %v408
    %vm414 = vcmask 261120
    %v416 = vsel %vm414, %v397, 0
    %418 = vmatprep.subr.bf16.mxu0 0
    %419 = vmatpush1.bf16.msra.mxu0 %v410
    %420 = vmatprep.subr.bf16.mxu0 0
    %421 = vmatpush1.bf16.msra.mxu0 %v411
    %422 = vmatprep.subr.bf16.mxu0 0
    %423 = vmatpush1.bf16.msra.mxu0 0
    %424 = vmatprep.subr.bf16.mxu0 0
    %425 = vmatpush1.bf16.msra.mxu0 0
    %426 = vmatprep.subr.bf16.mxu0 0
    %427 = vmatpush1.bf16.msra.mxu0 0
    %428 = vmatprep.subr.bf16.mxu0 0
    %429 = vmatpush1.bf16.msra.mxu0 0
    %430 = vmatprep.subr.bf16.mxu0 0
    %431 = vmatpush1.bf16.msra.mxu0 0
    %432 = vmatprep.subr.bf16.mxu0 0
    %433 = vmatpush1.bf16.msra.mxu0 0
    %434 = vmatprep.subr.bf16.mxu0 0
    %435 = vmatpush1.bf16.msra.mxu0 0
    %436 = vmatprep.subr.bf16.mxu0 0
    %437 = vmatpush1.bf16.msra.mxu0 0
    %438 = vmatprep.subr.bf16.mxu0 0
    %439 = vmatpush1.bf16.msra.mxu0 0
    %440 = vmatprep.subr.bf16.mxu0 0
    %441 = vmatpush1.bf16.msra.mxu0 0
    %442 = vmatprep.subr.bf16.mxu0 0
    %443 = vmatpush1.bf16.msra.mxu0 0
    %444 = vmatprep.subr.bf16.mxu0 0
    %445 = vmatpush1.bf16.msra.mxu0 0
    %446 = vmatprep.subr.bf16.mxu0 0
    %447 = vmatpush1.bf16.msra.mxu0 0
    %448 = vmatprep.subr.bf16.mxu0 0
    %449 = vmatpush1.bf16.msra.mxu0 0
    %450 = vmatprep.mubr.bf16.mxu0 0
    %451 = vmatmul.mubr.bf16.gmra.mrb[0].mxu0 %v416
    %v452 = vpop.f32.mrb[0].mxu0
    %v453 = vadd.f32 0.0, %v452
    %v454 = vpop.f32.mrb[0].mxu0
    %v455 = vpop.f32.mrb[0].mxu0
    %v456 = vpop.f32.mrb[0].mxu0
    %457 = vdwg.mxu0
    %v460 = vunpack.c.l.s4 1966171168
    %v461 = vunpack.c.0.s8 %v460
    %v462 = vlaneseq
    %v463 = vshrl.u32 %v462, 7
    %v464 = vsub.s32 %v461, %v463
    %v465 = vrot.slane %v453, %v464
    %v466 = vcombine.high %v465, %v465
    %v468 = vunpack.c.l.s4 1966171168
    %v469 = vunpack.c.0.s8 %v468
    %v470 = vlaneseq
    %v471 = vshrl.u32 %v470, 7
    %v472 = vsub.s32 %v469, %v471
    %v473 = vrot.slane %v465, %v472
    %v475 = vunpack.c.l.s4 1966171168
    %v476 = vunpack.c.0.s8 %v475
    %v477 = vlaneseq
    %v478 = vshrl.u32 %v477, 7
    %v479 = vsub.s32 %v476, %v478
    %v480 = vrot.slane %v466, %v479
    %v481 = vlaneseq
    %v482 = vshrl.u32 %v481, 7
    %v483 = vsub.s32 0, %v482
    %v484 = vrot.slane %v473, %v483
    %v485 = vlaneseq
    %v486 = vshrl.u32 %v485, 7
    %v487 = vsub.s32 0, %v486
    %v488 = vrot.slane %v480, %v487
    %v491 = vadd.f32 %v383, %v484
    %v492 = vadd.f32 %v386, %v484
    %v493 = vadd.f32 %v391, %v488
    %v494 = vadd.f32 %v394, %v488
    %v495 = vld [vmem:[#allocation8] sm:$0xff]
    %v496 = vld [vmem:[#allocation8 + $0x8] sm:$0xff]
    %v497 = vadd.f32 %v491, %v495
    %v498 = vadd.f32 %v492, %v496
    %v499 = vadd.f32 %v493, %v495
    %v500 = vadd.f32 %v494, %v496
    %v501 = vld [vmem:[#allocation5] sm:$0xf]
    %v502 = vld [vmem:[#allocation5 + $0x4] sm:$0xf]
    %v503 = vld [vmem:[#allocation5 + $0x8] sm:$0xf]
    %v504 = vld [vmem:[#allocation5 + $0xc] sm:$0xf]
    %v505 = vunpack.c.l.bf16 %v501
    %v506 = vunpack.c.l.bf16 %v502
    %v507 = vunpack.c.l.bf16 %v503
    %v508 = vunpack.c.l.bf16 %v504
    %v509 = vsel %vm341, %v505, 0.0
    %v510 = vsel %vm341, %v506, 0.0
    %v511 = vadd.f32 %v509, %v510
    %v512 = vrot.slane %v511, 4
    %v513 = vadd.f32 %v511, %v512
    %v514 = vrot.slane %v513, 2
    %v515 = vadd.f32 %v513, %v514
    %v516 = vrot.slane %v515, 1
    %v517 = vadd.f32 %v515, %v516
    %v518 = vsel %vm341, %v507, 0.0
    %v519 = vsel %vm341, %v508, 0.0
    %v520 = vadd.f32 %v518, %v519
    %v521 = vrot.slane %v520, 4
    %v522 = vadd.f32 %v520, %v521
    %v523 = vrot.slane %v522, 2
    %v524 = vadd.f32 %v522, %v523
    %v525 = vrot.slane %v524, 1
    %v526 = vadd.f32 %v524, %v525
    %v527 = vrcp.pop 16.0
    %v528 = vmul.f32 %v517, %v527
    %v529 = vmul.f32 %v526, %v527
    %v530 = vld [vmem:[#allocation10] sm:$0xf]
    %v531 = vld [vmem:[#allocation10 + $0x4] sm:$0x1]
    %v532 = vld [vmem:[#allocation14] sm:$0xf]
    %v533 = vld [vmem:[#allocation14 + $0x4] sm:$0xf]
    %v534 = vld [vmem:[#allocation14 + $0x8] sm:$0xf]
    %v535 = vld [vmem:[#allocation14 + $0xc] sm:$0xf]
    %v538 = vunpack.c.l.b16 %v530
    %v539 = vunpack.c.l.b16 %v531
    %v540 = vpack.c.b16 %v539, %v538
    %v545 = vunpack.c.l.b16 %v532
    %v546 = vunpack.c.l.b16 %v533
    %v547 = vunpack.c.l.b16 %v534
    %v548 = vunpack.c.l.b16 %v535
    %v549 = vpack.c.b16 %v546, %v545
    %v550 = vpack.c.b16 %v548, %v547
    %v554 = vsel %vm414, %v540, 0
    %556 = vmatprep.subr.bf16.mxu0 0
    %557 = vmatpush1.bf16.msra.mxu0 %v549
    %558 = vmatprep.subr.bf16.mxu0 0
    %559 = vmatpush1.bf16.msra.mxu0 %v550
    %560 = vmatprep.subr.bf16.mxu0 0
    %561 = vmatpush1.bf16.msra.mxu0 0
    %562 = vmatprep.subr.bf16.mxu0 0
    %563 = vmatpush1.bf16.msra.mxu0 0
    %564 = vmatprep.subr.bf16.mxu0 0
    %565 = vmatpush1.bf16.msra.mxu0 0
    %566 = vmatprep.subr.bf16.mxu0 0
    %567 = vmatpush1.bf16.msra.mxu0 0
    %568 = vmatprep.subr.bf16.mxu0 0
    %569 = vmatpush1.bf16.msra.mxu0 0
    %570 = vmatprep.subr.bf16.mxu0 0
    %571 = vmatpush1.bf16.msra.mxu0 0
    %572 = vmatprep.subr.bf16.mxu0 0
    %573 = vmatpush1.bf16.msra.mxu0 0
    %574 = vmatprep.subr.bf16.mxu0 0
    %575 = vmatpush1.bf16.msra.mxu0 0
    %576 = vmatprep.subr.bf16.mxu0 0
    %577 = vmatpush1.bf16.msra.mxu0 0
    %578 = vmatprep.subr.bf16.mxu0 0
    %579 = vmatpush1.bf16.msra.mxu0 0
    %580 = vmatprep.subr.bf16.mxu0 0
    %581 = vmatpush1.bf16.msra.mxu0 0
    %582 = vmatprep.subr.bf16.mxu0 0
    %583 = vmatpush1.bf16.msra.mxu0 0
    %584 = vmatprep.subr.bf16.mxu0 0
    %585 = vmatpush1.bf16.msra.mxu0 0
    %586 = vmatprep.subr.bf16.mxu0 0
    %587 = vmatpush1.bf16.msra.mxu0 0
    %588 = vmatprep.mubr.bf16.mxu0 0
    %589 = vmatmul.mubr.bf16.gmra.mrb[0].mxu0 %v554
    %v590 = vpop.f32.mrb[0].mxu0
    %v591 = vadd.f32 0.0, %v590
    %v592 = vpop.f32.mrb[0].mxu0
    %v593 = vpop.f32.mrb[0].mxu0
    %v594 = vadd.f32 0.0, %v593
    %v595 = vpop.f32.mrb[0].mxu0
    %596 = vdwg.mxu0
    %v597 = vpack.c.bf16 %v528, %v528
    %v598 = vpack.c.bf16 %v529, %v529
    %v599 = vld [vmem:[#allocation16] sm:$0xf]
    %v600 = vld [vmem:[#allocation16 + $0x4] sm:$0xf]
    %v601 = vld [vmem:[#allocation16 + $0x8] sm:$0xf]
    %v602 = vld [vmem:[#allocation16 + $0xc] sm:$0xf]
    %v603 = vld [vmem:[#allocation16 + $0x10] sm:$0xf]
    %v604 = vld [vmem:[#allocation16 + $0x14] sm:$0xf]
    %v605 = vld [vmem:[#allocation16 + $0x18] sm:$0xf]
    %v606 = vld [vmem:[#allocation16 + $0x1c] sm:$0xf]
    %v609 = vunpack.c.l.b16 %v597
    %v610 = vunpack.c.l.b16 %v598
    %vm611 = vcmask 1041409
    %v612 = vsel %vm611, %v610, %v609
    %v613 = vpack.c.b16 %v612, %v612
    %v622 = vunpack.c.l.b16 %v599
    %v623 = vunpack.c.l.b16 %v600
    %v624 = vunpack.c.l.b16 %v601
    %v625 = vunpack.c.l.b16 %v602
    %v626 = vunpack.c.l.b16 %v603
    %v627 = vunpack.c.l.b16 %v604
    %v628 = vunpack.c.l.b16 %v605
    %v629 = vunpack.c.l.b16 %v606
    %v630 = vpack.c.b16 %v623, %v622
    %v631 = vpack.c.b16 %v625, %v624
    %v632 = vpack.c.b16 %v627, %v626
    %v633 = vpack.c.b16 %v629, %v628
    %v639 = vsel %vm341, %v613, 0
    %641 = vmatprep.subr.bf16.mxu0 0
    %642 = vmatpush1.bf16.msra.mxu0 %v630
    %643 = vmatprep.subr.bf16.mxu0 0
    %644 = vmatpush1.bf16.msra.mxu0 %v631
    %645 = vmatprep.subr.bf16.mxu0 0
    %646 = vmatpush1.bf16.msra.mxu0 %v632
    %647 = vmatprep.subr.bf16.mxu0 0
    %648 = vmatpush1.bf16.msra.mxu0 %v633
    %649 = vmatprep.subr.bf16.mxu0 0
    %650 = vmatpush1.bf16.msra.mxu0 0
    %651 = vmatprep.subr.bf16.mxu0 0
    %652 = vmatpush1.bf16.msra.mxu0 0
    %653 = vmatprep.subr.bf16.mxu0 0
    %654 = vmatpush1.bf16.msra.mxu0 0
    %655 = vmatprep.subr.bf16.mxu0 0
    %656 = vmatpush1.bf16.msra.mxu0 0
    %657 = vmatprep.subr.bf16.mxu0 0
    %658 = vmatpush1.bf16.msra.mxu0 0
    %659 = vmatprep.subr.bf16.mxu0 0
    %660 = vmatpush1.bf16.msra.mxu0 0
    %661 = vmatprep.subr.bf16.mxu0 0
    %662 = vmatpush1.bf16.msra.mxu0 0
    %663 = vmatprep.subr.bf16.mxu0 0
    %664 = vmatpush1.bf16.msra.mxu0 0
    %665 = vmatprep.subr.bf16.mxu0 0
    %666 = vmatpush1.bf16.msra.mxu0 0
    %667 = vmatprep.subr.bf16.mxu0 0
    %668 = vmatpush1.bf16.msra.mxu0 0
    %669 = vmatprep.subr.bf16.mxu0 0
    %670 = vmatpush1.bf16.msra.mxu0 0
    %671 = vmatprep.subr.bf16.mxu0 0
    %672 = vmatpush1.bf16.msra.mxu0 0
    %673 = vmatprep.mubr.bf16.mxu0 0
    %674 = vmatmul.mubr.bf16.gmra.mrb[0].mxu0 %v639
    %v675 = vpop.f32.mrb[0].mxu0
    %v676 = vadd.f32 0.0, %v675
    %v677 = vpop.f32.mrb[0].mxu0
    %v678 = vpop.f32.mrb[0].mxu0
    %v679 = vpop.f32.mrb[0].mxu0
    %680 = vdwg.mxu0
    %v683 = vunpack.c.l.s4 1966171168
    %v684 = vunpack.c.0.s8 %v683
    %v685 = vlaneseq
    %v686 = vshrl.u32 %v685, 7
    %v687 = vsub.s32 %v684, %v686
    %v688 = vrot.slane %v676, %v687
    %v689 = vcombine.high %v688, %v688
    %v691 = vunpack.c.l.s4 1966171168
    %v692 = vunpack.c.0.s8 %v691
    %v693 = vlaneseq
    %v694 = vshrl.u32 %v693, 7
    %v695 = vsub.s32 %v692, %v694
    %v696 = vrot.slane %v688, %v695
    %v698 = vunpack.c.l.s4 1966171168
    %v699 = vunpack.c.0.s8 %v698
    %v700 = vlaneseq
    %v701 = vshrl.u32 %v700, 7
    %v702 = vsub.s32 %v699, %v701
    %v703 = vrot.slane %v689, %v702
    %v704 = vlaneseq
    %v705 = vshrl.u32 %v704, 7
    %v706 = vsub.s32 0, %v705
    %v707 = vrot.slane %v696, %v706
    %v708 = vlaneseq
    %v709 = vshrl.u32 %v708, 7
    %v710 = vsub.s32 0, %v709
    %v711 = vrot.slane %v703, %v710
    %v714 = vadd.f32 %v591, %v707
    %v715 = vadd.f32 %v594, %v707
    %v716 = vadd.f32 %v591, %v711
    %v717 = vadd.f32 %v594, %v711
    %v718 = vpack.c.bf16 %v498, %v497
    %v719 = vpack.c.bf16 %v500, %v499
    %v720 = vld [vmem:[#allocation17] sm:$0xf]
    %v721 = vld [vmem:[#allocation17 + $0x4] sm:$0xf]
    %v722 = vld [vmem:[#allocation17 + $0x8] sm:$0xf]
    %v723 = vld [vmem:[#allocation17 + $0xc] sm:$0xf]
    %v724 = vld [vmem:[#allocation19] sm:$0x1]
    %v726 = vlaneseq
    %v727 = vshrl.u32 %v726, 7
    %v728 = vsub.s32 0, %v727
    %v729 = vrot.slane %v724, %v728
    %v735 = vunpack.c.l.b16 %v720
    %v736 = vunpack.c.l.b16 %v721
    %v737 = vunpack.c.l.b16 %v722
    %v738 = vunpack.c.l.b16 %v723
    %v739 = vpack.c.b16 %v736, %v735
    %v740 = vpack.c.b16 %v738, %v737
    %v744 = vsel %vm414, %v718, 0
    %v747 = vsel %vm414, %v719, 0
    %749 = vmatprep.subr.bf16.mxu0 0
    %750 = vmatpush1.bf16.msra.mxu0 %v739
    %751 = vmatprep.subr.bf16.mxu0 0
    %752 = vmatpush1.bf16.msra.mxu0 %v740
    %753 = vmatprep.subr.bf16.mxu0 0
    %754 = vmatpush1.bf16.msra.mxu0 0
    %755 = vmatprep.subr.bf16.mxu0 0
    %756 = vmatpush1.bf16.msra.mxu0 0
    %757 = vmatprep.subr.bf16.mxu0 0
    %758 = vmatpush1.bf16.msra.mxu0 0
    %759 = vmatprep.subr.bf16.mxu0 0
    %760 = vmatpush1.bf16.msra.mxu0 0
    %761 = vmatprep.subr.bf16.mxu0 0
    %762 = vmatpush1.bf16.msra.mxu0 0
    %763 = vmatprep.subr.bf16.mxu0 0
    %764 = vmatpush1.bf16.msra.mxu0 0
    %765 = vmatprep.subr.bf16.mxu0 0
    %766 = vmatpush1.bf16.msra.mxu0 0
    %767 = vmatprep.subr.bf16.mxu0 0
    %768 = vmatpush1.bf16.msra.mxu0 0
    %769 = vmatprep.subr.bf16.mxu0 0
    %770 = vmatpush1.bf16.msra.mxu0 0
    %771 = vmatprep.subr.bf16.mxu0 0
    %772 = vmatpush1.bf16.msra.mxu0 0
    %773 = vmatprep.subr.bf16.mxu0 0
    %774 = vmatpush1.bf16.msra.mxu0 0
    %775 = vmatprep.subr.bf16.mxu0 0
    %776 = vmatpush1.bf16.msra.mxu0 0
    %777 = vmatprep.subr.bf16.mxu0 0
    %778 = vmatpush1.bf16.msra.mxu0 0
    %779 = vmatprep.subr.bf16.mxu0 0
    %780 = vmatpush1.bf16.msra.mxu0 0
    %781 = vmatprep.mubr.bf16.mxu0 0
    %782 = vmatmul.mubr.bf16.gmra.mrb[0].mxu0 %v744
    %v783 = vpop.f32.mrb[0].mxu0
    %v784 = vadd.f32 %v729, %v783
    %v785 = vpop.f32.mrb[0].mxu0
    %v786 = vpop.f32.mrb[0].mxu0
    %v787 = vadd.f32 %v729, %v786
    %v788 = vpop.f32.mrb[0].mxu0
    %789 = vmatprep.mubr.bf16.mxu0 0
    %790 = vmatmul.mubr.bf16.gmra.mrb[0].mxu0 %v747
    %v791 = vpop.f32.mrb[0].mxu0
    %v792 = vadd.f32 %v729, %v791
    %v793 = vpop.f32.mrb[0].mxu0
    %v794 = vpop.f32.mrb[0].mxu0
    %v795 = vadd.f32 %v729, %v794
    %v796 = vpop.f32.mrb[0].mxu0
    %797 = vdwg.mxu0
    %v802 = vcombine.high %v714, %v714
    %v804 = vunpack.c.l.s4 1983009808
    %v805 = vunpack.c.0.s8 %v804
    %v806 = vlaneseq
    %v807 = vshrl.u32 %v806, 7
    %v808 = vsub.s32 %v805, %v807
    %v809 = vrot.slane %v714, %v808
    %v811 = vunpack.c.l.s4 1983009808
    %v812 = vunpack.c.0.s8 %v811
    %v813 = vlaneseq
    %v814 = vshrl.u32 %v813, 7
    %v815 = vsub.s32 %v812, %v814
    %v816 = vrot.slane %v802, %v815
    %v817 = vcombine.high %v809, %v809
    %v818 = vcombine.high %v816, %v816
    %v820 = vunpack.c.l.s4 1983009808
    %v821 = vunpack.c.0.s8 %v820
    %v822 = vlaneseq
    %v823 = vshrl.u32 %v822, 7
    %v824 = vsub.s32 %v821, %v823
    %v825 = vrot.slane %v715, %v824
    %v826 = vcombine.high %v716, %v716
    %v828 = vunpack.c.l.s4 1983009808
    %v829 = vunpack.c.0.s8 %v828
    %v830 = vlaneseq
    %v831 = vshrl.u32 %v830, 7
    %v832 = vsub.s32 %v829, %v831
    %v833 = vrot.slane %v716, %v832
    %v835 = vunpack.c.l.s4 1983009808
    %v836 = vunpack.c.0.s8 %v835
    %v837 = vlaneseq
    %v838 = vshrl.u32 %v837, 7
    %v839 = vsub.s32 %v836, %v838
    %v840 = vrot.slane %v826, %v839
    %v841 = vcombine.high %v833, %v833
    %v842 = vcombine.high %v840, %v840
    %v844 = vunpack.c.l.s4 1983009808
    %v845 = vunpack.c.0.s8 %v844
    %v846 = vlaneseq
    %v847 = vshrl.u32 %v846, 7
    %v848 = vsub.s32 %v845, %v847
    %v849 = vrot.slane %v717, %v848
    %v850 = vcombine.low %v809, %v817
    %v851 = vcombine.low %v816, %v818
    %v853 = vunpack.c.l.s4 1983009808
    %v854 = vunpack.c.0.s8 %v853
    %v855 = vlaneseq
    %v856 = vshrl.u32 %v855, 7
    %v857 = vsub.s32 %v854, %v856
    %v858 = vrot.slane %v850, %v857
    %v860 = vunpack.c.l.s4 1983009808
    %v861 = vunpack.c.0.s8 %v860
    %v862 = vlaneseq
    %v863 = vshrl.u32 %v862, 7
    %v864 = vsub.s32 %v861, %v863
    %v865 = vrot.slane %v851, %v864
    %v866 = vcombine.low %v858, %v865
    %v867 = vcombine.low %v825, %v833
    %v868 = vcombine.low %v841, %v840
    %v870 = vunpack.c.l.s4 1983009808
    %v871 = vunpack.c.0.s8 %v870
    %v872 = vlaneseq
    %v873 = vshrl.u32 %v872, 7
    %v874 = vsub.s32 %v871, %v873
    %v875 = vrot.slane %v867, %v874
    %v877 = vunpack.c.l.s4 1983009808
    %v878 = vunpack.c.0.s8 %v877
    %v879 = vlaneseq
    %v880 = vshrl.u32 %v879, 7
    %v881 = vsub.s32 %v878, %v880
    %v882 = vrot.slane %v868, %v881
    %v883 = vcombine.low %v875, %v882
    %v884 = vcombine.low %v842, %v849
    %v886 = vunpack.c.l.s4 1983009808
    %v887 = vunpack.c.0.s8 %v886
    %v888 = vlaneseq
    %v889 = vshrl.u32 %v888, 7
    %v890 = vsub.s32 %v887, %v889
    %v891 = vrot.slane %v884, %v890
    %v895 = vpack.c.bf16 %v883, %v866
    %v896 = vpack.c.bf16 %v891, %v891
    %v897 = vld [vmem:[#allocation20] sm:$0xf]
    %v898 = vld [vmem:[#allocation20 + $0x4] sm:$0xf]
    %v899 = vld [vmem:[#allocation20 + $0x8] sm:$0xf]
    %v900 = vld [vmem:[#allocation20 + $0xc] sm:$0xf]
    %v901 = vld [vmem:[#allocation22] sm:$0x1]
    %v903 = vlaneseq
    %v904 = vshrl.u32 %v903, 7
    %v905 = vsub.s32 0, %v904
    %v906 = vrot.slane %v901, %v905
    %v912 = vunpack.c.l.b16 %v897
    %v913 = vunpack.c.l.b16 %v898
    %v914 = vunpack.c.l.b16 %v899
    %v915 = vunpack.c.l.b16 %v900
    %v916 = vpack.c.b16 %v913, %v912
    %v917 = vpack.c.b16 %v915, %v914
    %v921 = vsel %vm414, %v895, 0
    %v924 = vsel %vm414, %v896, 0
    %926 = vmatprep.subr.bf16.mxu0 0
    %927 = vmatpush1.bf16.msra.mxu0 %v916
    %928 = vmatprep.subr.bf16.mxu0 0
    %929 = vmatpush1.bf16.msra.mxu0 %v917
    %930 = vmatprep.subr.bf16.mxu0 0
    %931 = vmatpush1.bf16.msra.mxu0 0
    %932 = vmatprep.subr.bf16.mxu0 0
    %933 = vmatpush1.bf16.msra.mxu0 0
    %934 = vmatprep.subr.bf16.mxu0 0
    %935 = vmatpush1.bf16.msra.mxu0 0
    %936 = vmatprep.subr.bf16.mxu0 0
    %937 = vmatpush1.bf16.msra.mxu0 0
    %938 = vmatprep.subr.bf16.mxu0 0
    %939 = vmatpush1.bf16.msra.mxu0 0
    %940 = vmatprep.subr.bf16.mxu0 0
    %941 = vmatpush1.bf16.msra.mxu0 0
    %942 = vmatprep.subr.bf16.mxu0 0
    %943 = vmatpush1.bf16.msra.mxu0 0
    %944 = vmatprep.subr.bf16.mxu0 0
    %945 = vmatpush1.bf16.msra.mxu0 0
    %946 = vmatprep.subr.bf16.mxu0 0
    %947 = vmatpush1.bf16.msra.mxu0 0
    %948 = vmatprep.subr.bf16.mxu0 0
    %949 = vmatpush1.bf16.msra.mxu0 0
    %950 = vmatprep.subr.bf16.mxu0 0
    %951 = vmatpush1.bf16.msra.mxu0 0
    %952 = vmatprep.subr.bf16.mxu0 0
    %953 = vmatpush1.bf16.msra.mxu0 0
    %954 = vmatprep.subr.bf16.mxu0 0
    %955 = vmatpush1.bf16.msra.mxu0 0
    %956 = vmatprep.subr.bf16.mxu0 0
    %957 = vmatpush1.bf16.msra.mxu0 0
    %958 = vmatprep.mubr.bf16.mxu0 0
    %959 = vmatmul.mubr.bf16.gmra.mrb[0].mxu0 %v921
    %v960 = vpop.f32.mrb[0].mxu0
    %v961 = vadd.f32 %v906, %v960
    %v962 = vpop.f32.mrb[0].mxu0
    %v963 = vpop.f32.mrb[0].mxu0
    %v964 = vadd.f32 %v906, %v963
    %v965 = vpop.f32.mrb[0].mxu0
    %966 = vmatprep.mubr.bf16.mxu0 0
    %967 = vmatmul.mubr.bf16.gmra.mrb[0].mxu0 %v924
    %v968 = vpop.f32.mrb[0].mxu0
    %v969 = vadd.f32 %v906, %v968
    %v970 = vpop.f32.mrb[0].mxu0
    %v971 = vpop.f32.mrb[0].mxu0
    %v972 = vpop.f32.mrb[0].mxu0
    %973 = vdwg.mxu0
    %v977 = vcombine.high %v961, %v961
    %v979 = vunpack.c.l.s4 1983009808
    %v980 = vunpack.c.0.s8 %v979
    %v981 = vlaneseq
    %v982 = vshrl.u32 %v981, 7
    %v983 = vsub.s32 %v980, %v982
    %v984 = vrot.slane %v961, %v983
    %v986 = vunpack.c.l.s4 1983009808
    %v987 = vunpack.c.0.s8 %v986
    %v988 = vlaneseq
    %v989 = vshrl.u32 %v988, 7
    %v990 = vsub.s32 %v987, %v989
    %v991 = vrot.slane %v977, %v990
    %v992 = vcombine.high %v984, %v984
    %v993 = vcombine.high %v991, %v991
    %v994 = vcombine.high %v964, %v964
    %v996 = vunpack.c.l.s4 1983009808
    %v997 = vunpack.c.0.s8 %v996
    %v998 = vlaneseq
    %v999 = vshrl.u32 %v998, 7
    %v1000 = vsub.s32 %v997, %v999
    %v1001 = vrot.slane %v964, %v1000
    %v1003 = vunpack.c.l.s4 1983009808
    %v1004 = vunpack.c.0.s8 %v1003
    %v1005 = vlaneseq
    %v1006 = vshrl.u32 %v1005, 7
    %v1007 = vsub.s32 %v1004, %v1006
    %v1008 = vrot.slane %v994, %v1007
    %v1009 = vcombine.high %v1001, %v1001
    %v1010 = vcombine.high %v1008, %v1008
    %v1012 = vunpack.c.l.s4 1983009808
    %v1013 = vunpack.c.0.s8 %v1012
    %v1014 = vlaneseq
    %v1015 = vshrl.u32 %v1014, 7
    %v1016 = vsub.s32 %v1013, %v1015
    %v1017 = vrot.slane %v969, %v1016
    %v1018 = vcombine.high %v1017, %v1017
    %v1019 = vpack.c.bf16 %v787, %v784
    %v1020 = vpack.c.bf16 %v795, %v792
    %v1021 = vcombine.low %v984, %v992
    %v1022 = vcombine.low %v991, %v993
    %v1024 = vunpack.c.l.s4 1983009808
    %v1025 = vunpack.c.0.s8 %v1024
    %v1026 = vlaneseq
    %v1027 = vshrl.u32 %v1026, 7
    %v1028 = vsub.s32 %v1025, %v1027
    %v1029 = vrot.slane %v1021, %v1028
    %v1031 = vunpack.c.l.s4 1983009808
    %v1032 = vunpack.c.0.s8 %v1031
    %v1033 = vlaneseq
    %v1034 = vshrl.u32 %v1033, 7
    %v1035 = vsub.s32 %v1032, %v1034
    %v1036 = vrot.slane %v1022, %v1035
    %v1037 = vcombine.low %v1029, %v1036
    %v1039 = vunpack.c.l.s4 1983009808
    %v1040 = vunpack.c.0.s8 %v1039
    %v1041 = vlaneseq
    %v1042 = vshrl.u32 %v1041, 7
    %v1043 = vsub.s32 %v1040, %v1042
    %v1044 = vrot.slane %v1001, %v1043
    %v1045 = vcombine.low %v1009, %v1008
    %v1046 = vcombine.low %v1010, %v1017
    %v1048 = vunpack.c.l.s4 1983009808
    %v1049 = vunpack.c.0.s8 %v1048
    %v1050 = vlaneseq
    %v1051 = vshrl.u32 %v1050, 7
    %v1052 = vsub.s32 %v1049, %v1051
    %v1053 = vrot.slane %v1045, %v1052
    %v1055 = vunpack.c.l.s4 1983009808
    %v1056 = vunpack.c.0.s8 %v1055
    %v1057 = vlaneseq
    %v1058 = vshrl.u32 %v1057, 7
    %v1059 = vsub.s32 %v1056, %v1058
    %v1060 = vrot.slane %v1046, %v1059
    %v1061 = vcombine.low %v1053, %v1060
    %v1063 = vunpack.c.l.s4 1983009808
    %v1064 = vunpack.c.0.s8 %v1063
    %v1065 = vlaneseq
    %v1066 = vshrl.u32 %v1065, 7
    %v1067 = vsub.s32 %v1064, %v1066
    %v1068 = vrot.slane %v1018, %v1067
    %v1073 = vpack.c.bf16 %v1044, %v1037
    %v1074 = vpack.c.bf16 %v1068, %v1061
    %vm1075 = vcmask 31744
    %v1077 = vsel %vm1075, %v1019, 0
    %v1080 = vsel %vm1075, %v1073, 0
    %1082 = vmatprep.subr.bf16.mxu0 0
    %1083 = vmatpush1.bf16.xpose.msra.mxu0 %v1080
    %1084 = vmatprep.subr.bf16.mxu0 0
    %1085 = vmatpush1.bf16.xpose.msra.mxu0 0
    %1086 = vmatprep.subr.bf16.mxu0 0
    %1087 = vmatpush1.bf16.xpose.msra.mxu0 0
    %1088 = vmatprep.subr.bf16.mxu0 0
    %1089 = vmatpush1.bf16.xpose.msra.mxu0 0
    %1090 = vmatprep.subr.bf16.mxu0 0
    %1091 = vmatpush1.bf16.xpose.msra.mxu0 0
    %1092 = vmatprep.subr.bf16.mxu0 0
    %1093 = vmatpush1.bf16.xpose.msra.mxu0 0
    %1094 = vmatprep.subr.bf16.mxu0 0
    %1095 = vmatpush1.bf16.xpose.msra.mxu0 0
    %1096 = vmatprep.subr.bf16.mxu0 0
    %1097 = vmatpush1.bf16.xpose.msra.mxu0 0
    %1098 = vmatprep.subr.bf16.mxu0 0
    %1099 = vmatpush1.bf16.xpose.msra.mxu0 0
    %1100 = vmatprep.subr.bf16.mxu0 0
    %1101 = vmatpush1.bf16.xpose.msra.mxu0 0
    %1102 = vmatprep.subr.bf16.mxu0 0
    %1103 = vmatpush1.bf16.xpose.msra.mxu0 0
    %1104 = vmatprep.subr.bf16.mxu0 0
    %1105 = vmatpush1.bf16.xpose.msra.mxu0 0
    %1106 = vmatprep.subr.bf16.mxu0 0
    %1107 = vmatpush1.bf16.xpose.msra.mxu0 0
    %1108 = vmatprep.subr.bf16.mxu0 0
    %1109 = vmatpush1.bf16.xpose.msra.mxu0 0
    %1110 = vmatprep.subr.bf16.mxu0 0
    %1111 = vmatpush1.bf16.xpose.msra.mxu0 0
    %1112 = vmatprep.subr.bf16.mxu0 0
    %1113 = vmatpush1.bf16.xpose.msra.mxu0 0
    %1114 = vmatprep.mubr.bf16.mxu0 0
    %1115 = vmatmul.mubr.bf16.gmra.mrb[0].mxu0 %v1077
    %v1116 = vpop.f32.mrb[0].mxu0
    %v1117 = vadd.f32 0.0, %v1116
    %v1118 = vpop.f32.mrb[0].mxu0
    %v1119 = vpop.f32.mrb[0].mxu0
    %v1120 = vadd.f32 0.0, %v1119
    %v1121 = vpop.f32.mrb[0].mxu0
    %1122 = vdwg.mxu0
    %v1124 = vsel %vm1075, %v1020, 0
    %v1127 = vsel %vm1075, %v1074, 0
    %1129 = vmatprep.subr.bf16.mxu0 0
    %1130 = vmatpush1.bf16.xpose.msra.mxu0 %v1127
    %1131 = vmatprep.subr.bf16.mxu0 0
    %1132 = vmatpush1.bf16.xpose.msra.mxu0 0
    %1133 = vmatprep.subr.bf16.mxu0 0
    %1134 = vmatpush1.bf16.xpose.msra.mxu0 0
    %1135 = vmatprep.subr.bf16.mxu0 0
    %1136 = vmatpush1.bf16.xpose.msra.mxu0 0
    %1137 = vmatprep.subr.bf16.mxu0 0
    %1138 = vmatpush1.bf16.xpose.msra.mxu0 0
    %1139 = vmatprep.subr.bf16.mxu0 0
    %1140 = vmatpush1.bf16.xpose.msra.mxu0 0
    %1141 = vmatprep.subr.bf16.mxu0 0
    %1142 = vmatpush1.bf16.xpose.msra.mxu0 0
    %1143 = vmatprep.subr.bf16.mxu0 0
    %1144 = vmatpush1.bf16.xpose.msra.mxu0 0
    %1145 = vmatprep.subr.bf16.mxu0 0
    %1146 = vmatpush1.bf16.xpose.msra.mxu0 0
    %1147 = vmatprep.subr.bf16.mxu0 0
    %1148 = vmatpush1.bf16.xpose.msra.mxu0 0
    %1149 = vmatprep.subr.bf16.mxu0 0
    %1150 = vmatpush1.bf16.xpose.msra.mxu0 0
    %1151 = vmatprep.subr.bf16.mxu0 0
    %1152 = vmatpush1.bf16.xpose.msra.mxu0 0
    %1153 = vmatprep.subr.bf16.mxu0 0
    %1154 = vmatpush1.bf16.xpose.msra.mxu0 0
    %1155 = vmatprep.subr.bf16.mxu0 0
    %1156 = vmatpush1.bf16.xpose.msra.mxu0 0
    %1157 = vmatprep.subr.bf16.mxu0 0
    %1158 = vmatpush1.bf16.xpose.msra.mxu0 0
    %1159 = vmatprep.subr.bf16.mxu0 0
    %1160 = vmatpush1.bf16.xpose.msra.mxu0 0
    %1161 = vmatprep.mubr.bf16.mxu0 0
    %1162 = vmatmul.mubr.bf16.gmra.mrb[0].mxu0 %v1124
    %v1163 = vpop.f32.mrb[0].mxu0
    %v1164 = vadd.f32 0.0, %v1163
    %v1165 = vpop.f32.mrb[0].mxu0
    %v1166 = vpop.f32.mrb[0].mxu0
    %v1167 = vadd.f32 0.0, %v1166
    %v1168 = vpop.f32.mrb[0].mxu0
    %1169 = vdwg.mxu0
    %v1170 = vmul.f32 %v1117, 0.5
    %v1171 = vmul.f32 %v1120, 0.5
    %v1172 = vmul.f32 %v1164, 0.5
    %v1173 = vmul.f32 %v1167, 0.5
    %vm1174 = vcmask 80896
    %v1175 = vsel %vm1174, %v1170, -inf
    %1176 = vmax.xlane.f32.xlu0 %v1175
    %v1177 = vpop.xlane.xlu0 %1176
    %v1178 = vsel %vm1174, %v1171, -inf
    %1179 = vmax.xlane.f32.xlu0 %v1178
    %v1180 = vpop.xlane.xlu0 %1179
    %v1181 = vsel %vm1174, %v1172, -inf
    %1182 = vmax.xlane.f32.xlu0 %v1181
    %v1183 = vpop.xlane.xlu0 %1182
    %v1184 = vsel %vm1174, %v1173, -inf
    %1185 = vmax.xlane.f32.xlu0 %v1184
    %v1186 = vpop.xlane.xlu0 %1185
    %v1187 = vsub.f32 %v1170, %v1177
    %v1188 = vsub.f32 %v1171, %v1180
    %v1189 = vsub.f32 %v1172, %v1183
    %v1190 = vsub.f32 %v1173, %v1186
    %v1191 = vmul.f32 %v1187, 1.442695
    %v1192 = vpow.pop %v1191
    %v1193 = vmul.f32 %v1188, 1.442695
    %v1194 = vpow.pop %v1193
    %v1195 = vmul.f32 %v1189, 1.442695
    %v1196 = vpow.pop %v1195
    %v1197 = vmul.f32 %v1190, 1.442695
    %v1198 = vpow.pop %v1197
    %v1199 = vsel %vm1174, %v1192, 0.0
    %1200 = vadd.xlane.f32.xlu0 %v1199
    %v1201 = vpop.xlane.xlu0 %1200
    %v1202 = vsel %vm1174, %v1194, 0.0
    %1203 = vadd.xlane.f32.xlu0 %v1202
    %v1204 = vpop.xlane.xlu0 %1203
    %v1205 = vsel %vm1174, %v1196, 0.0
    %1206 = vadd.xlane.f32.xlu0 %v1205
    %v1207 = vpop.xlane.xlu0 %1206
    %v1208 = vsel %vm1174, %v1198, 0.0
    %1209 = vadd.xlane.f32.xlu0 %v1208
    %v1210 = vpop.xlane.xlu0 %1209
    %v1211 = vrcp.pop %v1201
    %v1212 = vrcp.pop %v1204
    %v1213 = vrcp.pop %v1207
    %v1214 = vrcp.pop %v1210
    %v1215 = vmul.f32 %v1192, %v1211
    %v1216 = vmul.f32 %v1194, %v1212
    %v1217 = vmul.f32 %v1196, %v1213
    %v1218 = vmul.f32 %v1198, %v1214
    %v1219 = vpack.c.bf16 %v1216, %v1215
    %v1220 = vpack.c.bf16 %v1218, %v1217
    %1222 = vrot.lane.b32.xlu0 %v1073, 96
    %v1223 = vpop.permute.xlu0 %1222
    %v1225 = vsel %vm1174, %v1219, 0
    %vm1227 = vcmask 1044480
    %v1229 = vsel %vm1227, %v1223, 0
    %1231 = vmatprep.subr.bf16.mxu0 0
    %1232 = vmatpush1.bf16.msra.mxu0 %v1229
    %1233 = vmatprep.subr.bf16.mxu0 0
    %1234 = vmatpush1.bf16.msra.mxu0 0
    %1235 = vmatprep.subr.bf16.mxu0 0
    %1236 = vmatpush1.bf16.msra.mxu0 0
    %1237 = vmatprep.subr.bf16.mxu0 0
    %1238 = vmatpush1.bf16.msra.mxu0 0
    %1239 = vmatprep.subr.bf16.mxu0 0
    %1240 = vmatpush1.bf16.msra.mxu0 0
    %1241 = vmatprep.subr.bf16.mxu0 0
    %1242 = vmatpush1.bf16.msra.mxu0 0
    %1243 = vmatprep.subr.bf16.mxu0 0
    %1244 = vmatpush1.bf16.msra.mxu0 0
    %1245 = vmatprep.subr.bf16.mxu0 0
    %1246 = vmatpush1.bf16.msra.mxu0 0
    %1247 = vmatprep.subr.bf16.mxu0 0
    %1248 = vmatpush1.bf16.msra.mxu0 0
    %1249 = vmatprep.subr.bf16.mxu0 0
    %1250 = vmatpush1.bf16.msra.mxu0 0
    %1251 = vmatprep.subr.bf16.mxu0 0
    %1252 = vmatpush1.bf16.msra.mxu0 0
    %1253 = vmatprep.subr.bf16.mxu0 0
    %1254 = vmatpush1.bf16.msra.mxu0 0
    %1255 = vmatprep.subr.bf16.mxu0 0
    %1256 = vmatpush1.bf16.msra.mxu0 0
    %1257 = vmatprep.subr.bf16.mxu0 0
    %1258 = vmatpush1.bf16.msra.mxu0 0
    %1259 = vmatprep.subr.bf16.mxu0 0
    %1260 = vmatpush1.bf16.msra.mxu0 0
    %1261 = vmatprep.subr.bf16.mxu0 0
    %1262 = vmatpush1.bf16.msra.mxu0 0
    %1263 = vmatprep.mubr.bf16.mxu0 0
    %1264 = vmatmul.mubr.bf16.gmra.mrb[0].mxu0 %v1225
    %v1265 = vpop.f32.mrb[0].mxu0
    %v1266 = vadd.f32 0.0, %v1265
    %v1267 = vpop.f32.mrb[0].mxu0
    %v1268 = vpop.f32.mrb[0].mxu0
    %v1269 = vadd.f32 0.0, %v1268
    %v1270 = vpop.f32.mrb[0].mxu0
    %1271 = vdwg.mxu0
    %1273 = vrot.lane.b32.xlu0 %v1074, 96
    %v1274 = vpop.permute.xlu0 %1273
    %v1276 = vsel %vm1174, %v1220, 0
    %v1279 = vsel %vm1227, %v1274, 0
    %1281 = vmatprep.subr.bf16.mxu0 0
    %1282 = vmatpush1.bf16.msra.mxu0 %v1279
    %1283 = vmatprep.subr.bf16.mxu0 0
    %1284 = vmatpush1.bf16.msra.mxu0 0
    %1285 = vmatprep.subr.bf16.mxu0 0
    %1286 = vmatpush1.bf16.msra.mxu0 0
    %1287 = vmatprep.subr.bf16.mxu0 0
    %1288 = vmatpush1.bf16.msra.mxu0 0
    %1289 = vmatprep.subr.bf16.mxu0 0
    %1290 = vmatpush1.bf16.msra.mxu0 0
    %1291 = vmatprep.subr.bf16.mxu0 0
    %1292 = vmatpush1.bf16.msra.mxu0 0
    %1293 = vmatprep.subr.bf16.mxu0 0
    %1294 = vmatpush1.bf16.msra.mxu0 0
    %1295 = vmatprep.subr.bf16.mxu0 0
    %1296 = vmatpush1.bf16.msra.mxu0 0
    %1297 = vmatprep.subr.bf16.mxu0 0
    %1298 = vmatpush1.bf16.msra.mxu0 0
    %1299 = vmatprep.subr.bf16.mxu0 0
    %1300 = vmatpush1.bf16.msra.mxu0 0
    %1301 = vmatprep.subr.bf16.mxu0 0
    %1302 = vmatpush1.bf16.msra.mxu0 0
    %1303 = vmatprep.subr.bf16.mxu0 0
    %1304 = vmatpush1.bf16.msra.mxu0 0
    %1305 = vmatprep.subr.bf16.mxu0 0
    %1306 = vmatpush1.bf16.msra.mxu0 0
    %1307 = vmatprep.subr.bf16.mxu0 0
    %1308 = vmatpush1.bf16.msra.mxu0 0
    %1309 = vmatprep.subr.bf16.mxu0 0
    %1310 = vmatpush1.bf16.msra.mxu0 0
    %1311 = vmatprep.subr.bf16.mxu0 0
    %1312 = vmatpush1.bf16.msra.mxu0 0
    %1313 = vmatprep.mubr.bf16.mxu0 0
    %1314 = vmatmul.mubr.bf16.gmra.mrb[0].mxu0 %v1276
    %v1315 = vpop.f32.mrb[0].mxu0
    %v1316 = vadd.f32 0.0, %v1315
    %v1317 = vpop.f32.mrb[0].mxu0
    %v1318 = vpop.f32.mrb[0].mxu0
    %v1319 = vadd.f32 0.0, %v1318
    %v1320 = vpop.f32.mrb[0].mxu0
    %1321 = vdwg.mxu0
    %1323 = vrot.lane.b32.xlu0 %v1019, 124
    %v1324 = vpop.permute.xlu0 %1323
    %1325 = vrot.lane.b32.xlu0 %v1073, 124
    %v1326 = vpop.permute.xlu0 %1325
    %v1328 = vsel %vm1075, %v1324, 0
    %v1331 = vsel %vm1075, %v1326, 0
    %1333 = vmatprep.subr.bf16.mxu0 0
    %1334 = vmatpush1.bf16.xpose.msra.mxu0 %v1331
    %1335 = vmatprep.subr.bf16.mxu0 0
    %1336 = vmatpush1.bf16.xpose.msra.mxu0 0
    %1337 = vmatprep.subr.bf16.mxu0 0
    %1338 = vmatpush1.bf16.xpose.msra.mxu0 0
    %1339 = vmatprep.subr.bf16.mxu0 0
    %1340 = vmatpush1.bf16.xpose.msra.mxu0 0
    %1341 = vmatprep.subr.bf16.mxu0 0
    %1342 = vmatpush1.bf16.xpose.msra.mxu0 0
    %1343 = vmatprep.subr.bf16.mxu0 0
    %1344 = vmatpush1.bf16.xpose.msra.mxu0 0
    %1345 = vmatprep.subr.bf16.mxu0 0
    %1346 = vmatpush1.bf16.xpose.msra.mxu0 0
    %1347 = vmatprep.subr.bf16.mxu0 0
    %1348 = vmatpush1.bf16.xpose.msra.mxu0 0
    %1349 = vmatprep.subr.bf16.mxu0 0
    %1350 = vmatpush1.bf16.xpose.msra.mxu0 0
    %1351 = vmatprep.subr.bf16.mxu0 0
    %1352 = vmatpush1.bf16.xpose.msra.mxu0 0
    %1353 = vmatprep.subr.bf16.mxu0 0
    %1354 = vmatpush1.bf16.xpose.msra.mxu0 0
    %1355 = vmatprep.subr.bf16.mxu0 0
    %1356 = vmatpush1.bf16.xpose.msra.mxu0 0
    %1357 = vmatprep.subr.bf16.mxu0 0
    %1358 = vmatpush1.bf16.xpose.msra.mxu0 0
    %1359 = vmatprep.subr.bf16.mxu0 0
    %1360 = vmatpush1.bf16.xpose.msra.mxu0 0
    %1361 = vmatprep.subr.bf16.mxu0 0
    %1362 = vmatpush1.bf16.xpose.msra.mxu0 0
    %1363 = vmatprep.subr.bf16.mxu0 0
    %1364 = vmatpush1.bf16.xpose.msra.mxu0 0
    %1365 = vmatprep.mubr.bf16.mxu0 0
    %1366 = vmatmul.mubr.bf16.gmra.mrb[0].mxu0 %v1328
    %v1367 = vpop.f32.mrb[0].mxu0
    %v1368 = vadd.f32 0.0, %v1367
    %v1369 = vpop.f32.mrb[0].mxu0
    %v1370 = vpop.f32.mrb[0].mxu0
    %v1371 = vadd.f32 0.0, %v1370
    %v1372 = vpop.f32.mrb[0].mxu0
    %1373 = vdwg.mxu0
    %1375 = vrot.lane.b32.xlu0 %v1020, 124
    %v1376 = vpop.permute.xlu0 %1375
    %1377 = vrot.lane.b32.xlu0 %v1074, 124
    %v1378 = vpop.permute.xlu0 %1377
    %v1380 = vsel %vm1075, %v1376, 0
    %v1383 = vsel %vm1075, %v1378, 0
    %1385 = vmatprep.subr.bf16.mxu0 0
    %1386 = vmatpush1.bf16.xpose.msra.mxu0 %v1383
    %1387 = vmatprep.subr.bf16.mxu0 0
    %1388 = vmatpush1.bf16.xpose.msra.mxu0 0
    %1389 = vmatprep.subr.bf16.mxu0 0
    %1390 = vmatpush1.bf16.xpose.msra.mxu0 0
    %1391 = vmatprep.subr.bf16.mxu0 0
    %1392 = vmatpush1.bf16.xpose.msra.mxu0 0
    %1393 = vmatprep.subr.bf16.mxu0 0
    %1394 = vmatpush1.bf16.xpose.msra.mxu0 0
    %1395 = vmatprep.subr.bf16.mxu0 0
    %1396 = vmatpush1.bf16.xpose.msra.mxu0 0
    %1397 = vmatprep.subr.bf16.mxu0 0
    %1398 = vmatpush1.bf16.xpose.msra.mxu0 0
    %1399 = vmatprep.subr.bf16.mxu0 0
    %1400 = vmatpush1.bf16.xpose.msra.mxu0 0
    %1401 = vmatprep.subr.bf16.mxu0 0
    %1402 = vmatpush1.bf16.xpose.msra.mxu0 0
    %1403 = vmatprep.subr.bf16.mxu0 0
    %1404 = vmatpush1.bf16.xpose.msra.mxu0 0
    %1405 = vmatprep.subr.bf16.mxu0 0
    %1406 = vmatpush1.bf16.xpose.msra.mxu0 0
    %1407 = vmatprep.subr.bf16.mxu0 0
    %1408 = vmatpush1.bf16.xpose.msra.mxu0 0
    %1409 = vmatprep.subr.bf16.mxu0 0
    %1410 = vmatpush1.bf16.xpose.msra.mxu0 0
    %1411 = vmatprep.subr.bf16.mxu0 0
    %1412 = vmatpush1.bf16.xpose.msra.mxu0 0
    %1413 = vmatprep.subr.bf16.mxu0 0
    %1414 = vmatpush1.bf16.xpose.msra.mxu0 0
    %1415 = vmatprep.subr.bf16.mxu0 0
    %1416 = vmatpush1.bf16.xpose.msra.mxu0 0
    %1417 = vmatprep.mubr.bf16.mxu0 0
    %1418 = vmatmul.mubr.bf16.gmra.mrb[0].mxu0 %v1380
    %v1419 = vpop.f32.mrb[0].mxu0
    %v1420 = vadd.f32 0.0, %v1419
    %v1421 = vpop.f32.mrb[0].mxu0
    %v1422 = vpop.f32.mrb[0].mxu0
    %v1423 = vadd.f32 0.0, %v1422
    %v1424 = vpop.f32.mrb[0].mxu0
    %1425 = vdwg.mxu0
    %v1426 = vmul.f32 %v1368, 0.5
    %v1427 = vmul.f32 %v1371, 0.5
    %v1428 = vmul.f32 %v1420, 0.5
    %v1429 = vmul.f32 %v1423, 0.5
    %v1430 = vsel %vm1174, %v1426, -inf
    %1431 = vmax.xlane.f32.xlu0 %v1430
    %v1432 = vpop.xlane.xlu0 %1431
    %v1433 = vsel %vm1174, %v1427, -inf
    %1434 = vmax.xlane.f32.xlu0 %v1433
    %v1435 = vpop.xlane.xlu0 %1434
    %v1436 = vsel %vm1174, %v1428, -inf
    %1437 = vmax.xlane.f32.xlu0 %v1436
    %v1438 = vpop.xlane.xlu0 %1437
    %v1439 = vsel %vm1174, %v1429, -inf
    %1440 = vmax.xlane.f32.xlu0 %v1439
    %v1441 = vpop.xlane.xlu0 %1440
    %v1442 = vsub.f32 %v1426, %v1432
    %v1443 = vsub.f32 %v1427, %v1435
    %v1444 = vsub.f32 %v1428, %v1438
    %v1445 = vsub.f32 %v1429, %v1441
    %v1446 = vmul.f32 %v1442, 1.442695
    %v1447 = vpow.pop %v1446
    %v1448 = vmul.f32 %v1443, 1.442695
    %v1449 = vpow.pop %v1448
    %v1450 = vmul.f32 %v1444, 1.442695
    %v1451 = vpow.pop %v1450
    %v1452 = vmul.f32 %v1445, 1.442695
    %v1453 = vpow.pop %v1452
    %v1454 = vsel %vm1174, %v1447, 0.0
    %1455 = vadd.xlane.f32.xlu0 %v1454
    %v1456 = vpop.xlane.xlu0 %1455
    %v1457 = vsel %vm1174, %v1449, 0.0
    %1458 = vadd.xlane.f32.xlu0 %v1457
    %v1459 = vpop.xlane.xlu0 %1458
    %v1460 = vsel %vm1174, %v1451, 0.0
    %1461 = vadd.xlane.f32.xlu0 %v1460
    %v1462 = vpop.xlane.xlu0 %1461
    %v1463 = vsel %vm1174, %v1453, 0.0
    %1464 = vadd.xlane.f32.xlu0 %v1463
    %v1465 = vpop.xlane.xlu0 %1464
    %v1466 = vrcp.pop %v1456
    %v1467 = vrcp.pop %v1459
    %v1468 = vrcp.pop %v1462
    %v1469 = vrcp.pop %v1465
    %v1470 = vmul.f32 %v1447, %v1466
    %v1471 = vmul.f32 %v1449, %v1467
    %v1472 = vmul.f32 %v1451, %v1468
    %v1473 = vmul.f32 %v1453, %v1469
    %v1474 = vpack.c.bf16 %v1471, %v1470
    %v1475 = vpack.c.bf16 %v1473, %v1472
    %1476 = vrot.lane.b32.xlu0 %v1073, 92
    %v1477 = vpop.permute.xlu0 %1476
    %v1479 = vsel %vm1174, %v1474, 0
    %v1482 = vsel %vm1227, %v1477, 0
    %1484 = vmatprep.subr.bf16.mxu0 0
    %1485 = vmatpush1.bf16.msra.mxu0 %v1482
    %1486 = vmatprep.subr.bf16.mxu0 0
    %1487 = vmatpush1.bf16.msra.mxu0 0
    %1488 = vmatprep.subr.bf16.mxu0 0
    %1489 = vmatpush1.bf16.msra.mxu0 0
    %1490 = vmatprep.subr.bf16.mxu0 0
    %1491 = vmatpush1.bf16.msra.mxu0 0
    %1492 = vmatprep.subr.bf16.mxu0 0
    %1493 = vmatpush1.bf16.msra.mxu0 0
    %1494 = vmatprep.subr.bf16.mxu0 0
    %1495 = vmatpush1.bf16.msra.mxu0 0
    %1496 = vmatprep.subr.bf16.mxu0 0
    %1497 = vmatpush1.bf16.msra.mxu0 0
    %1498 = vmatprep.subr.bf16.mxu0 0
    %1499 = vmatpush1.bf16.msra.mxu0 0
    %1500 = vmatprep.subr.bf16.mxu0 0
    %1501 = vmatpush1.bf16.msra.mxu0 0
    %1502 = vmatprep.subr.bf16.mxu0 0
    %1503 = vmatpush1.bf16.msra.mxu0 0
    %1504 = vmatprep.subr.bf16.mxu0 0
    %1505 = vmatpush1.bf16.msra.mxu0 0
    %1506 = vmatprep.subr.bf16.mxu0 0
    %1507 = vmatpush1.bf16.msra.mxu0 0
    %1508 = vmatprep.subr.bf16.mxu0 0
    %1509 = vmatpush1.bf16.msra.mxu0 0
    %1510 = vmatprep.subr.bf16.mxu0 0
    %1511 = vmatpush1.bf16.msra.mxu0 0
    %1512 = vmatprep.subr.bf16.mxu0 0
    %1513 = vmatpush1.bf16.msra.mxu0 0
    %1514 = vmatprep.subr.bf16.mxu0 0
    %1515 = vmatpush1.bf16.msra.mxu0 0
    %1516 = vmatprep.mubr.bf16.mxu0 0
    %1517 = vmatmul.mubr.bf16.gmra.mrb[0].mxu0 %v1479
    %v1518 = vpop.f32.mrb[0].mxu0
    %v1519 = vadd.f32 0.0, %v1518
    %v1520 = vpop.f32.mrb[0].mxu0
    %v1521 = vpop.f32.mrb[0].mxu0
    %v1522 = vadd.f32 0.0, %v1521
    %v1523 = vpop.f32.mrb[0].mxu0
    %1524 = vdwg.mxu0
    %1525 = vrot.lane.b32.xlu0 %v1074, 92
    %v1526 = vpop.permute.xlu0 %1525
    %v1528 = vsel %vm1174, %v1475, 0
    %v1531 = vsel %vm1227, %v1526, 0
    %1533 = vmatprep.subr.bf16.mxu0 0
    %1534 = vmatpush1.bf16.msra.mxu0 %v1531
    %1535 = vmatprep.subr.bf16.mxu0 0
    %1536 = vmatpush1.bf16.msra.mxu0 0
    %1537 = vmatprep.subr.bf16.mxu0 0
    %1538 = vmatpush1.bf16.msra.mxu0 0
    %1539 = vmatprep.subr.bf16.mxu0 0
    %1540 = vmatpush1.bf16.msra.mxu0 0
    %1541 = vmatprep.subr.bf16.mxu0 0
    %1542 = vmatpush1.bf16.msra.mxu0 0
    %1543 = vmatprep.subr.bf16.mxu0 0
    %1544 = vmatpush1.bf16.msra.mxu0 0
    %1545 = vmatprep.subr.bf16.mxu0 0
    %1546 = vmatpush1.bf16.msra.mxu0 0
    %1547 = vmatprep.subr.bf16.mxu0 0
    %1548 = vmatpush1.bf16.msra.mxu0 0
    %1549 = vmatprep.subr.bf16.mxu0 0
    %1550 = vmatpush1.bf16.msra.mxu0 0
    %1551 = vmatprep.subr.bf16.mxu0 0
    %1552 = vmatpush1.bf16.msra.mxu0 0
    %1553 = vmatprep.subr.bf16.mxu0 0
    %1554 = vmatpush1.bf16.msra.mxu0 0
    %1555 = vmatprep.subr.bf16.mxu0 0
    %1556 = vmatpush1.bf16.msra.mxu0 0
    %1557 = vmatprep.subr.bf16.mxu0 0
    %1558 = vmatpush1.bf16.msra.mxu0 0
    %1559 = vmatprep.subr.bf16.mxu0 0
    %1560 = vmatpush1.bf16.msra.mxu0 0
    %1561 = vmatprep.subr.bf16.mxu0 0
    %1562 = vmatpush1.bf16.msra.mxu0 0
    %1563 = vmatprep.subr.bf16.mxu0 0
    %1564 = vmatpush1.bf16.msra.mxu0 0
    %1565 = vmatprep.mubr.bf16.mxu0 0
    %1566 = vmatmul.mubr.bf16.gmra.mrb[0].mxu0 %v1528
    %v1567 = vpop.f32.mrb[0].mxu0
    %v1568 = vadd.f32 0.0, %v1567
    %v1569 = vpop.f32.mrb[0].mxu0
    %v1570 = vpop.f32.mrb[0].mxu0
    %v1571 = vadd.f32 0.0, %v1570
    %v1572 = vpop.f32.mrb[0].mxu0
    %1573 = vdwg.mxu0
    %1574 = vrot.lane.b32.xlu0 %v1019, 120
    %v1575 = vpop.permute.xlu0 %1574
    %1576 = vrot.lane.b32.xlu0 %v1073, 120
    %v1577 = vpop.permute.xlu0 %1576
    %v1579 = vsel %vm1075, %v1575, 0
    %v1582 = vsel %vm1075, %v1577, 0
    %1584 = vmatprep.subr.bf16.mxu0 0
    %1585 = vmatpush1.bf16.xpose.msra.mxu0 %v1582
    %1586 = vmatprep.subr.bf16.mxu0 0
    %1587 = vmatpush1.bf16.xpose.msra.mxu0 0
    %1588 = vmatprep.subr.bf16.mxu0 0
    %1589 = vmatpush1.bf16.xpose.msra.mxu0 0
    %1590 = vmatprep.subr.bf16.mxu0 0
    %1591 = vmatpush1.bf16.xpose.msra.mxu0 0
    %1592 = vmatprep.subr.bf16.mxu0 0
    %1593 = vmatpush1.bf16.xpose.msra.mxu0 0
    %1594 = vmatprep.subr.bf16.mxu0 0
    %1595 = vmatpush1.bf16.xpose.msra.mxu0 0
    %1596 = vmatprep.subr.bf16.mxu0 0
    %1597 = vmatpush1.bf16.xpose.msra.mxu0 0
    %1598 = vmatprep.subr.bf16.mxu0 0
    %1599 = vmatpush1.bf16.xpose.msra.mxu0 0
    %1600 = vmatprep.subr.bf16.mxu0 0
    %1601 = vmatpush1.bf16.xpose.msra.mxu0 0
    %1602 = vmatprep.subr.bf16.mxu0 0
    %1603 = vmatpush1.bf16.xpose.msra.mxu0 0
    %1604 = vmatprep.subr.bf16.mxu0 0
    %1605 = vmatpush1.bf16.xpose.msra.mxu0 0
    %1606 = vmatprep.subr.bf16.mxu0 0
    %1607 = vmatpush1.bf16.xpose.msra.mxu0 0
    %1608 = vmatprep.subr.bf16.mxu0 0
    %1609 = vmatpush1.bf16.xpose.msra.mxu0 0
    %1610 = vmatprep.subr.bf16.mxu0 0
    %1611 = vmatpush1.bf16.xpose.msra.mxu0 0
    %1612 = vmatprep.subr.bf16.mxu0 0
    %1613 = vmatpush1.bf16.xpose.msra.mxu0 0
    %1614 = vmatprep.subr.bf16.mxu0 0
    %1615 = vmatpush1.bf16.xpose.msra.mxu0 0
    %1616 = vmatprep.mubr.bf16.mxu0 0
    %1617 = vmatmul.mubr.bf16.gmra.mrb[0].mxu0 %v1579
    %v1618 = vpop.f32.mrb[0].mxu0
    %v1619 = vadd.f32 0.0, %v1618
    %v1620 = vpop.f32.mrb[0].mxu0
    %v1621 = vpop.f32.mrb[0].mxu0
    %v1622 = vadd.f32 0.0, %v1621
    %v1623 = vpop.f32.mrb[0].mxu0
    %1624 = vdwg.mxu0
    %1625 = vrot.lane.b32.xlu0 %v1020, 120
    %v1626 = vpop.permute.xlu0 %1625
    %1627 = vrot.lane.b32.xlu0 %v1074, 120
    %v1628 = vpop.permute.xlu0 %1627
    %v1630 = vsel %vm1075, %v1626, 0
    %v1633 = vsel %vm1075, %v1628, 0
    %1635 = vmatprep.subr.bf16.mxu0 0
    %1636 = vmatpush1.bf16.xpose.msra.mxu0 %v1633
    %1637 = vmatprep.subr.bf16.mxu0 0
    %1638 = vmatpush1.bf16.xpose.msra.mxu0 0
    %1639 = vmatprep.subr.bf16.mxu0 0
    %1640 = vmatpush1.bf16.xpose.msra.mxu0 0
    %1641 = vmatprep.subr.bf16.mxu0 0
    %1642 = vmatpush1.bf16.xpose.msra.mxu0 0
    %1643 = vmatprep.subr.bf16.mxu0 0
    %1644 = vmatpush1.bf16.xpose.msra.mxu0 0
    %1645 = vmatprep.subr.bf16.mxu0 0
    %1646 = vmatpush1.bf16.xpose.msra.mxu0 0
    %1647 = vmatprep.subr.bf16.mxu0 0
    %1648 = vmatpush1.bf16.xpose.msra.mxu0 0
    %1649 = vmatprep.subr.bf16.mxu0 0
    %1650 = vmatpush1.bf16.xpose.msra.mxu0 0
    %1651 = vmatprep.subr.bf16.mxu0 0
    %1652 = vmatpush1.bf16.xpose.msra.mxu0 0
    %1653 = vmatprep.subr.bf16.mxu0 0
    %1654 = vmatpush1.bf16.xpose.msra.mxu0 0
    %1655 = vmatprep.subr.bf16.mxu0 0
    %1656 = vmatpush1.bf16.xpose.msra.mxu0 0
    %1657 = vmatprep.subr.bf16.mxu0 0
    %1658 = vmatpush1.bf16.xpose.msra.mxu0 0
    %1659 = vmatprep.subr.bf16.mxu0 0
    %1660 = vmatpush1.bf16.xpose.msra.mxu0 0
    %1661 = vmatprep.subr.bf16.mxu0 0
    %1662 = vmatpush1.bf16.xpose.msra.mxu0 0
    %1663 = vmatprep.subr.bf16.mxu0 0
    %1664 = vmatpush1.bf16.xpose.msra.mxu0 0
    %1665 = vmatprep.subr.bf16.mxu0 0
    %1666 = vmatpush1.bf16.xpose.msra.mxu0 0
    %1667 = vmatprep.mubr.bf16.mxu0 0
    %1668 = vmatmul.mubr.bf16.gmra.mrb[0].mxu0 %v1630
    %v1669 = vpop.f32.mrb[0].mxu0
    %v1670 = vadd.f32 0.0, %v1669
    %v1671 = vpop.f32.mrb[0].mxu0
    %v1672 = vpop.f32.mrb[0].mxu0
    %v1673 = vadd.f32 0.0, %v1672
    %v1674 = vpop.f32.mrb[0].mxu0
    %1675 = vdwg.mxu0
    %v1676 = vmul.f32 %v1619, 0.5
    %v1677 = vmul.f32 %v1622, 0.5
    %v1678 = vmul.f32 %v1670, 0.5
    %v1679 = vmul.f32 %v1673, 0.5
    %v1680 = vsel %vm1174, %v1676, -inf
    %1681 = vmax.xlane.f32.xlu0 %v1680
    %v1682 = vpop.xlane.xlu0 %1681
    %v1683 = vsel %vm1174, %v1677, -inf
    %1684 = vmax.xlane.f32.xlu0 %v1683
    %v1685 = vpop.xlane.xlu0 %1684
    %v1686 = vsel %vm1174, %v1678, -inf
    %1687 = vmax.xlane.f32.xlu0 %v1686
    %v1688 = vpop.xlane.xlu0 %1687
    %v1689 = vsel %vm1174, %v1679, -inf
    %1690 = vmax.xlane.f32.xlu0 %v1689
    %v1691 = vpop.xlane.xlu0 %1690
    %v1692 = vsub.f32 %v1676, %v1682
    %v1693 = vsub.f32 %v1677, %v1685
    %v1694 = vsub.f32 %v1678, %v1688
    %v1695 = vsub.f32 %v1679, %v1691
    %v1696 = vmul.f32 %v1692, 1.442695
    %v1697 = vpow.pop %v1696
    %v1698 = vmul.f32 %v1693, 1.442695
    %v1699 = vpow.pop %v1698
    %v1700 = vmul.f32 %v1694, 1.442695
    %v1701 = vpow.pop %v1700
    %v1702 = vmul.f32 %v1695, 1.442695
    %v1703 = vpow.pop %v1702
    %v1704 = vsel %vm1174, %v1697, 0.0
    %1705 = vadd.xlane.f32.xlu0 %v1704
    %v1706 = vpop.xlane.xlu0 %1705
    %v1707 = vsel %vm1174, %v1699, 0.0
    %1708 = vadd.xlane.f32.xlu0 %v1707
    %v1709 = vpop.xlane.xlu0 %1708
    %v1710 = vsel %vm1174, %v1701, 0.0
    %1711 = vadd.xlane.f32.xlu0 %v1710
    %v1712 = vpop.xlane.xlu0 %1711
    %v1713 = vsel %vm1174, %v1703, 0.0
    %1714 = vadd.xlane.f32.xlu0 %v1713
    %v1715 = vpop.xlane.xlu0 %1714
    %v1716 = vrcp.pop %v1706
    %v1717 = vrcp.pop %v1709
    %v1718 = vrcp.pop %v1712
    %v1719 = vrcp.pop %v1715
    %v1720 = vmul.f32 %v1697, %v1716
    %v1721 = vmul.f32 %v1699, %v1717
    %v1722 = vmul.f32 %v1701, %v1718
    %v1723 = vmul.f32 %v1703, %v1719
    %v1724 = vpack.c.bf16 %v1721, %v1720
    %v1725 = vpack.c.bf16 %v1723, %v1722
    %1726 = vrot.lane.b32.xlu0 %v1073, 88
    %v1727 = vpop.permute.xlu0 %1726
    %v1729 = vsel %vm1174, %v1724, 0
    %v1732 = vsel %vm1227, %v1727, 0
    %1734 = vmatprep.subr.bf16.mxu0 0
    %1735 = vmatpush1.bf16.msra.mxu0 %v1732
    %1736 = vmatprep.subr.bf16.mxu0 0
    %1737 = vmatpush1.bf16.msra.mxu0 0
    %1738 = vmatprep.subr.bf16.mxu0 0
    %1739 = vmatpush1.bf16.msra.mxu0 0
    %1740 = vmatprep.subr.bf16.mxu0 0
    %1741 = vmatpush1.bf16.msra.mxu0 0
    %1742 = vmatprep.subr.bf16.mxu0 0
    %1743 = vmatpush1.bf16.msra.mxu0 0
    %1744 = vmatprep.subr.bf16.mxu0 0
    %1745 = vmatpush1.bf16.msra.mxu0 0
    %1746 = vmatprep.subr.bf16.mxu0 0
    %1747 = vmatpush1.bf16.msra.mxu0 0
    %1748 = vmatprep.subr.bf16.mxu0 0
    %1749 = vmatpush1.bf16.msra.mxu0 0
    %1750 = vmatprep.subr.bf16.mxu0 0
    %1751 = vmatpush1.bf16.msra.mxu0 0
    %1752 = vmatprep.subr.bf16.mxu0 0
    %1753 = vmatpush1.bf16.msra.mxu0 0
    %1754 = vmatprep.subr.bf16.mxu0 0
    %1755 = vmatpush1.bf16.msra.mxu0 0
    %1756 = vmatprep.subr.bf16.mxu0 0
    %1757 = vmatpush1.bf16.msra.mxu0 0
    %1758 = vmatprep.subr.bf16.mxu0 0
    %1759 = vmatpush1.bf16.msra.mxu0 0
    %1760 = vmatprep.subr.bf16.mxu0 0
    %1761 = vmatpush1.bf16.msra.mxu0 0
    %1762 = vmatprep.subr.bf16.mxu0 0
    %1763 = vmatpush1.bf16.msra.mxu0 0
    %1764 = vmatprep.subr.bf16.mxu0 0
    %1765 = vmatpush1.bf16.msra.mxu0 0
    %1766 = vmatprep.mubr.bf16.mxu0 0
    %1767 = vmatmul.mubr.bf16.gmra.mrb[0].mxu0 %v1729
    %v1768 = vpop.f32.mrb[0].mxu0
    %v1769 = vadd.f32 0.0, %v1768
    %v1770 = vpop.f32.mrb[0].mxu0
    %v1771 = vpop.f32.mrb[0].mxu0
    %v1772 = vadd.f32 0.0, %v1771
    %v1773 = vpop.f32.mrb[0].mxu0
    %1774 = vdwg.mxu0
    %1775 = vrot.lane.b32.xlu0 %v1074, 88
    %v1776 = vpop.permute.xlu0 %1775
    %v1778 = vsel %vm1174, %v1725, 0
    %v1781 = vsel %vm1227, %v1776, 0
    %1783 = vmatprep.subr.bf16.mxu0 0
    %1784 = vmatpush1.bf16.msra.mxu0 %v1781
    %1785 = vmatprep.subr.bf16.mxu0 0
    %1786 = vmatpush1.bf16.msra.mxu0 0
    %1787 = vmatprep.subr.bf16.mxu0 0
    %1788 = vmatpush1.bf16.msra.mxu0 0
    %1789 = vmatprep.subr.bf16.mxu0 0
    %1790 = vmatpush1.bf16.msra.mxu0 0
    %1791 = vmatprep.subr.bf16.mxu0 0
    %1792 = vmatpush1.bf16.msra.mxu0 0
    %1793 = vmatprep.subr.bf16.mxu0 0
    %1794 = vmatpush1.bf16.msra.mxu0 0
    %1795 = vmatprep.subr.bf16.mxu0 0
    %1796 = vmatpush1.bf16.msra.mxu0 0
    %1797 = vmatprep.subr.bf16.mxu0 0
    %1798 = vmatpush1.bf16.msra.mxu0 0
    %1799 = vmatprep.subr.bf16.mxu0 0
    %1800 = vmatpush1.bf16.msra.mxu0 0
    %1801 = vmatprep.subr.bf16.mxu0 0
    %1802 = vmatpush1.bf16.msra.mxu0 0
    %1803 = vmatprep.subr.bf16.mxu0 0
    %1804 = vmatpush1.bf16.msra.mxu0 0
    %1805 = vmatprep.subr.bf16.mxu0 0
    %1806 = vmatpush1.bf16.msra.mxu0 0
    %1807 = vmatprep.subr.bf16.mxu0 0
    %1808 = vmatpush1.bf16.msra.mxu0 0
    %1809 = vmatprep.subr.bf16.mxu0 0
    %1810 = vmatpush1.bf16.msra.mxu0 0
    %1811 = vmatprep.subr.bf16.mxu0 0
    %1812 = vmatpush1.bf16.msra.mxu0 0
    %1813 = vmatprep.subr.bf16.mxu0 0
    %1814 = vmatpush1.bf16.msra.mxu0 0
    %1815 = vmatprep.mubr.bf16.mxu0 0
    %1816 = vmatmul.mubr.bf16.gmra.mrb[0].mxu0 %v1778
    %v1817 = vpop.f32.mrb[0].mxu0
    %v1818 = vadd.f32 0.0, %v1817
    %v1819 = vpop.f32.mrb[0].mxu0
    %v1820 = vpop.f32.mrb[0].mxu0
    %v1821 = vadd.f32 0.0, %v1820
    %v1822 = vpop.f32.mrb[0].mxu0
    %1823 = vdwg.mxu0
    %1824 = vrot.lane.b32.xlu0 %v1019, 116
    %v1825 = vpop.permute.xlu0 %1824
    %1826 = vrot.lane.b32.xlu0 %v1073, 116
    %v1827 = vpop.permute.xlu0 %1826
    %v1829 = vsel %vm1075, %v1825, 0
    %v1832 = vsel %vm1075, %v1827, 0
    %1834 = vmatprep.subr.bf16.mxu0 0
    %1835 = vmatpush1.bf16.xpose.msra.mxu0 %v1832
    %1836 = vmatprep.subr.bf16.mxu0 0
    %1837 = vmatpush1.bf16.xpose.msra.mxu0 0
    %1838 = vmatprep.subr.bf16.mxu0 0
    %1839 = vmatpush1.bf16.xpose.msra.mxu0 0
    %1840 = vmatprep.subr.bf16.mxu0 0
    %1841 = vmatpush1.bf16.xpose.msra.mxu0 0
    %1842 = vmatprep.subr.bf16.mxu0 0
    %1843 = vmatpush1.bf16.xpose.msra.mxu0 0
    %1844 = vmatprep.subr.bf16.mxu0 0
    %1845 = vmatpush1.bf16.xpose.msra.mxu0 0
    %1846 = vmatprep.subr.bf16.mxu0 0
    %1847 = vmatpush1.bf16.xpose.msra.mxu0 0
    %1848 = vmatprep.subr.bf16.mxu0 0
    %1849 = vmatpush1.bf16.xpose.msra.mxu0 0
    %1850 = vmatprep.subr.bf16.mxu0 0
    %1851 = vmatpush1.bf16.xpose.msra.mxu0 0
    %1852 = vmatprep.subr.bf16.mxu0 0
    %1853 = vmatpush1.bf16.xpose.msra.mxu0 0
    %1854 = vmatprep.subr.bf16.mxu0 0
    %1855 = vmatpush1.bf16.xpose.msra.mxu0 0
    %1856 = vmatprep.subr.bf16.mxu0 0
    %1857 = vmatpush1.bf16.xpose.msra.mxu0 0
    %1858 = vmatprep.subr.bf16.mxu0 0
    %1859 = vmatpush1.bf16.xpose.msra.mxu0 0
    %1860 = vmatprep.subr.bf16.mxu0 0
    %1861 = vmatpush1.bf16.xpose.msra.mxu0 0
    %1862 = vmatprep.subr.bf16.mxu0 0
    %1863 = vmatpush1.bf16.xpose.msra.mxu0 0
    %1864 = vmatprep.subr.bf16.mxu0 0
    %1865 = vmatpush1.bf16.xpose.msra.mxu0 0
    %1866 = vmatprep.mubr.bf16.mxu0 0
    %1867 = vmatmul.mubr.bf16.gmra.mrb[0].mxu0 %v1829
    %v1868 = vpop.f32.mrb[0].mxu0
    %v1869 = vadd.f32 0.0, %v1868
    %v1870 = vpop.f32.mrb[0].mxu0
    %v1871 = vpop.f32.mrb[0].mxu0
    %v1872 = vadd.f32 0.0, %v1871
    %v1873 = vpop.f32.mrb[0].mxu0
    %1874 = vdwg.mxu0
    %1875 = vrot.lane.b32.xlu0 %v1020, 116
    %v1876 = vpop.permute.xlu0 %1875
    %1877 = vrot.lane.b32.xlu0 %v1074, 116
    %v1878 = vpop.permute.xlu0 %1877
    %v1880 = vsel %vm1075, %v1876, 0
    %v1883 = vsel %vm1075, %v1878, 0
    %1885 = vmatprep.subr.bf16.mxu0 0
    %1886 = vmatpush1.bf16.xpose.msra.mxu0 %v1883
    %1887 = vmatprep.subr.bf16.mxu0 0
    %1888 = vmatpush1.bf16.xpose.msra.mxu0 0
    %1889 = vmatprep.subr.bf16.mxu0 0
    %1890 = vmatpush1.bf16.xpose.msra.mxu0 0
    %1891 = vmatprep.subr.bf16.mxu0 0
    %1892 = vmatpush1.bf16.xpose.msra.mxu0 0
    %1893 = vmatprep.subr.bf16.mxu0 0
    %1894 = vmatpush1.bf16.xpose.msra.mxu0 0
    %1895 = vmatprep.subr.bf16.mxu0 0
    %1896 = vmatpush1.bf16.xpose.msra.mxu0 0
    %1897 = vmatprep.subr.bf16.mxu0 0
    %1898 = vmatpush1.bf16.xpose.msra.mxu0 0
    %1899 = vmatprep.subr.bf16.mxu0 0
    %1900 = vmatpush1.bf16.xpose.msra.mxu0 0
    %1901 = vmatprep.subr.bf16.mxu0 0
    %1902 = vmatpush1.bf16.xpose.msra.mxu0 0
    %1903 = vmatprep.subr.bf16.mxu0 0
    %1904 = vmatpush1.bf16.xpose.msra.mxu0 0
    %1905 = vmatprep.subr.bf16.mxu0 0
    %1906 = vmatpush1.bf16.xpose.msra.mxu0 0
    %1907 = vmatprep.subr.bf16.mxu0 0
    %1908 = vmatpush1.bf16.xpose.msra.mxu0 0
    %1909 = vmatprep.subr.bf16.mxu0 0
    %1910 = vmatpush1.bf16.xpose.msra.mxu0 0
    %1911 = vmatprep.subr.bf16.mxu0 0
    %1912 = vmatpush1.bf16.xpose.msra.mxu0 0
    %1913 = vmatprep.subr.bf16.mxu0 0
    %1914 = vmatpush1.bf16.xpose.msra.mxu0 0
    %1915 = vmatprep.subr.bf16.mxu0 0
    %1916 = vmatpush1.bf16.xpose.msra.mxu0 0
    %1917 = vmatprep.mubr.bf16.mxu0 0
    %1918 = vmatmul.mubr.bf16.gmra.mrb[0].mxu0 %v1880
    %v1919 = vpop.f32.mrb[0].mxu0
    %v1920 = vadd.f32 0.0, %v1919
    %v1921 = vpop.f32.mrb[0].mxu0
    %v1922 = vpop.f32.mrb[0].mxu0
    %v1923 = vadd.f32 0.0, %v1922
    %v1924 = vpop.f32.mrb[0].mxu0
    %1925 = vdwg.mxu0
    %v1926 = vmul.f32 %v1869, 0.5
    %v1927 = vmul.f32 %v1872, 0.5
    %v1928 = vmul.f32 %v1920, 0.5
    %v1929 = vmul.f32 %v1923, 0.5
    %v1930 = vsel %vm1174, %v1926, -inf
    %1931 = vmax.xlane.f32.xlu0 %v1930
    %v1932 = vpop.xlane.xlu0 %1931
    %v1933 = vsel %vm1174, %v1927, -inf
    %1934 = vmax.xlane.f32.xlu0 %v1933
    %v1935 = vpop.xlane.xlu0 %1934
    %v1936 = vsel %vm1174, %v1928, -inf
    %1937 = vmax.xlane.f32.xlu0 %v1936
    %v1938 = vpop.xlane.xlu0 %1937
    %v1939 = vsel %vm1174, %v1929, -inf
    %1940 = vmax.xlane.f32.xlu0 %v1939
    %v1941 = vpop.xlane.xlu0 %1940
    %v1942 = vsub.f32 %v1926, %v1932
    %v1943 = vsub.f32 %v1927, %v1935
    %v1944 = vsub.f32 %v1928, %v1938
    %v1945 = vsub.f32 %v1929, %v1941
    %v1946 = vmul.f32 %v1942, 1.442695
    %v1947 = vpow.pop %v1946
    %v1948 = vmul.f32 %v1943, 1.442695
    %v1949 = vpow.pop %v1948
    %v1950 = vmul.f32 %v1944, 1.442695
    %v1951 = vpow.pop %v1950
    %v1952 = vmul.f32 %v1945, 1.442695
    %v1953 = vpow.pop %v1952
    %v1954 = vsel %vm1174, %v1947, 0.0
    %1955 = vadd.xlane.f32.xlu0 %v1954
    %v1956 = vpop.xlane.xlu0 %1955
    %v1957 = vsel %vm1174, %v1949, 0.0
    %1958 = vadd.xlane.f32.xlu0 %v1957
    %v1959 = vpop.xlane.xlu0 %1958
    %v1960 = vsel %vm1174, %v1951, 0.0
    %1961 = vadd.xlane.f32.xlu0 %v1960
    %v1962 = vpop.xlane.xlu0 %1961
    %v1963 = vsel %vm1174, %v1953, 0.0
    %1964 = vadd.xlane.f32.xlu0 %v1963
    %v1965 = vpop.xlane.xlu0 %1964
    %v1966 = vrcp.pop %v1956
    %v1967 = vrcp.pop %v1959
    %v1968 = vrcp.pop %v1962
    %v1969 = vrcp.pop %v1965
    %v1970 = vmul.f32 %v1947, %v1966
    %v1971 = vmul.f32 %v1949, %v1967
    %v1972 = vmul.f32 %v1951, %v1968
    %v1973 = vmul.f32 %v1953, %v1969
    %v1974 = vpack.c.bf16 %v1971, %v1970
    %v1975 = vpack.c.bf16 %v1973, %v1972
    %1976 = vrot.lane.b32.xlu0 %v1073, 84
    %v1977 = vpop.permute.xlu0 %1976
    %v1979 = vsel %vm1174, %v1974, 0
    %v1982 = vsel %vm1227, %v1977, 0
    %1984 = vmatprep.subr.bf16.mxu0 0
    %1985 = vmatpush1.bf16.msra.mxu0 %v1982
    %1986 = vmatprep.subr.bf16.mxu0 0
    %1987 = vmatpush1.bf16.msra.mxu0 0
    %1988 = vmatprep.subr.bf16.mxu0 0
    %1989 = vmatpush1.bf16.msra.mxu0 0
    %1990 = vmatprep.subr.bf16.mxu0 0
    %1991 = vmatpush1.bf16.msra.mxu0 0
    %1992 = vmatprep.subr.bf16.mxu0 0
    %1993 = vmatpush1.bf16.msra.mxu0 0
    %1994 = vmatprep.subr.bf16.mxu0 0
    %1995 = vmatpush1.bf16.msra.mxu0 0
    %1996 = vmatprep.subr.bf16.mxu0 0
    %1997 = vmatpush1.bf16.msra.mxu0 0
    %1998 = vmatprep.subr.bf16.mxu0 0
    %1999 = vmatpush1.bf16.msra.mxu0 0
    %2000 = vmatprep.subr.bf16.mxu0 0
    %2001 = vmatpush1.bf16.msra.mxu0 0
    %2002 = vmatprep.subr.bf16.mxu0 0
    %2003 = vmatpush1.bf16.msra.mxu0 0
    %2004 = vmatprep.subr.bf16.mxu0 0
    %2005 = vmatpush1.bf16.msra.mxu0 0
    %2006 = vmatprep.subr.bf16.mxu0 0
    %2007 = vmatpush1.bf16.msra.mxu0 0
    %2008 = vmatprep.subr.bf16.mxu0 0
    %2009 = vmatpush1.bf16.msra.mxu0 0
    %2010 = vmatprep.subr.bf16.mxu0 0
    %2011 = vmatpush1.bf16.msra.mxu0 0
    %2012 = vmatprep.subr.bf16.mxu0 0
    %2013 = vmatpush1.bf16.msra.mxu0 0
    %2014 = vmatprep.subr.bf16.mxu0 0
    %2015 = vmatpush1.bf16.msra.mxu0 0
    %2016 = vmatprep.mubr.bf16.mxu0 0
    %2017 = vmatmul.mubr.bf16.gmra.mrb[0].mxu0 %v1979
    %v2018 = vpop.f32.mrb[0].mxu0
    %v2019 = vadd.f32 0.0, %v2018
    %v2020 = vpop.f32.mrb[0].mxu0
    %v2021 = vpop.f32.mrb[0].mxu0
    %v2022 = vadd.f32 0.0, %v2021
    %v2023 = vpop.f32.mrb[0].mxu0
    %2024 = vdwg.mxu0
    %2025 = vrot.lane.b32.xlu0 %v1074, 84
    %v2026 = vpop.permute.xlu0 %2025
    %v2028 = vsel %vm1174, %v1975, 0
    %v2031 = vsel %vm1227, %v2026, 0
    %2033 = vmatprep.subr.bf16.mxu0 0
    %2034 = vmatpush1.bf16.msra.mxu0 %v2031
    %2035 = vmatprep.subr.bf16.mxu0 0
    %2036 = vmatpush1.bf16.msra.mxu0 0
    %2037 = vmatprep.subr.bf16.mxu0 0
    %2038 = vmatpush1.bf16.msra.mxu0 0
    %2039 = vmatprep.subr.bf16.mxu0 0
    %2040 = vmatpush1.bf16.msra.mxu0 0
    %2041 = vmatprep.subr.bf16.mxu0 0
    %2042 = vmatpush1.bf16.msra.mxu0 0
    %2043 = vmatprep.subr.bf16.mxu0 0
    %2044 = vmatpush1.bf16.msra.mxu0 0
    %2045 = vmatprep.subr.bf16.mxu0 0
    %2046 = vmatpush1.bf16.msra.mxu0 0
    %2047 = vmatprep.subr.bf16.mxu0 0
    %2048 = vmatpush1.bf16.msra.mxu0 0
    %2049 = vmatprep.subr.bf16.mxu0 0
    %2050 = vmatpush1.bf16.msra.mxu0 0
    %2051 = vmatprep.subr.bf16.mxu0 0
    %2052 = vmatpush1.bf16.msra.mxu0 0
    %2053 = vmatprep.subr.bf16.mxu0 0
    %2054 = vmatpush1.bf16.msra.mxu0 0
    %2055 = vmatprep.subr.bf16.mxu0 0
    %2056 = vmatpush1.bf16.msra.mxu0 0
    %2057 = vmatprep.subr.bf16.mxu0 0
    %2058 = vmatpush1.bf16.msra.mxu0 0
    %2059 = vmatprep.subr.bf16.mxu0 0
    %2060 = vmatpush1.bf16.msra.mxu0 0
    %2061 = vmatprep.subr.bf16.mxu0 0
    %2062 = vmatpush1.bf16.msra.mxu0 0
    %2063 = vmatprep.subr.bf16.mxu0 0
    %2064 = vmatpush1.bf16.msra.mxu0 0
    %2065 = vmatprep.mubr.bf16.mxu0 0
    %2066 = vmatmul.mubr.bf16.gmra.mrb[0].mxu0 %v2028
    %v2067 = vpop.f32.mrb[0].mxu0
    %v2068 = vadd.f32 0.0, %v2067
    %v2069 = vpop.f32.mrb[0].mxu0
    %v2070 = vpop.f32.mrb[0].mxu0
    %v2071 = vadd.f32 0.0, %v2070
    %v2072 = vpop.f32.mrb[0].mxu0
    %2073 = vdwg.mxu0
    %2074 = vrot.lane.b32.xlu0 %v1019, 112
    %v2075 = vpop.permute.xlu0 %2074
    %2076 = vrot.lane.b32.xlu0 %v1073, 112
    %v2077 = vpop.permute.xlu0 %2076
    %v2079 = vsel %vm1075, %v2075, 0
    %v2082 = vsel %vm1075, %v2077, 0
    %2084 = vmatprep.subr.bf16.mxu0 0
    %2085 = vmatpush1.bf16.xpose.msra.mxu0 %v2082
    %2086 = vmatprep.subr.bf16.mxu0 0
    %2087 = vmatpush1.bf16.xpose.msra.mxu0 0
    %2088 = vmatprep.subr.bf16.mxu0 0
    %2089 = vmatpush1.bf16.xpose.msra.mxu0 0
    %2090 = vmatprep.subr.bf16.mxu0 0
    %2091 = vmatpush1.bf16.xpose.msra.mxu0 0
    %2092 = vmatprep.subr.bf16.mxu0 0
    %2093 = vmatpush1.bf16.xpose.msra.mxu0 0
    %2094 = vmatprep.subr.bf16.mxu0 0
    %2095 = vmatpush1.bf16.xpose.msra.mxu0 0
    %2096 = vmatprep.subr.bf16.mxu0 0
    %2097 = vmatpush1.bf16.xpose.msra.mxu0 0
    %2098 = vmatprep.subr.bf16.mxu0 0
    %2099 = vmatpush1.bf16.xpose.msra.mxu0 0
    %2100 = vmatprep.subr.bf16.mxu0 0
    %2101 = vmatpush1.bf16.xpose.msra.mxu0 0
    %2102 = vmatprep.subr.bf16.mxu0 0
    %2103 = vmatpush1.bf16.xpose.msra.mxu0 0
    %2104 = vmatprep.subr.bf16.mxu0 0
    %2105 = vmatpush1.bf16.xpose.msra.mxu0 0
    %2106 = vmatprep.subr.bf16.mxu0 0
    %2107 = vmatpush1.bf16.xpose.msra.mxu0 0
    %2108 = vmatprep.subr.bf16.mxu0 0
    %2109 = vmatpush1.bf16.xpose.msra.mxu0 0
    %2110 = vmatprep.subr.bf16.mxu0 0
    %2111 = vmatpush1.bf16.xpose.msra.mxu0 0
    %2112 = vmatprep.subr.bf16.mxu0 0
    %2113 = vmatpush1.bf16.xpose.msra.mxu0 0
    %2114 = vmatprep.subr.bf16.mxu0 0
    %2115 = vmatpush1.bf16.xpose.msra.mxu0 0
    %2116 = vmatprep.mubr.bf16.mxu0 0
    %2117 = vmatmul.mubr.bf16.gmra.mrb[0].mxu0 %v2079
    %v2118 = vpop.f32.mrb[0].mxu0
    %v2119 = vadd.f32 0.0, %v2118
    %v2120 = vpop.f32.mrb[0].mxu0
    %v2121 = vpop.f32.mrb[0].mxu0
    %v2122 = vadd.f32 0.0, %v2121
    %v2123 = vpop.f32.mrb[0].mxu0
    %2124 = vdwg.mxu0
    %2125 = vrot.lane.b32.xlu0 %v1020, 112
    %v2126 = vpop.permute.xlu0 %2125
    %2127 = vrot.lane.b32.xlu0 %v1074, 112
    %v2128 = vpop.permute.xlu0 %2127
    %v2130 = vsel %vm1075, %v2126, 0
    %v2133 = vsel %vm1075, %v2128, 0
    %2135 = vmatprep.subr.bf16.mxu0 0
    %2136 = vmatpush1.bf16.xpose.msra.mxu0 %v2133
    %2137 = vmatprep.subr.bf16.mxu0 0
    %2138 = vmatpush1.bf16.xpose.msra.mxu0 0
    %2139 = vmatprep.subr.bf16.mxu0 0
    %2140 = vmatpush1.bf16.xpose.msra.mxu0 0
    %2141 = vmatprep.subr.bf16.mxu0 0
    %2142 = vmatpush1.bf16.xpose.msra.mxu0 0
    %2143 = vmatprep.subr.bf16.mxu0 0
    %2144 = vmatpush1.bf16.xpose.msra.mxu0 0
    %2145 = vmatprep.subr.bf16.mxu0 0
    %2146 = vmatpush1.bf16.xpose.msra.mxu0 0
    %2147 = vmatprep.subr.bf16.mxu0 0
    %2148 = vmatpush1.bf16.xpose.msra.mxu0 0
    %2149 = vmatprep.subr.bf16.mxu0 0
    %2150 = vmatpush1.bf16.xpose.msra.mxu0 0
    %2151 = vmatprep.subr.bf16.mxu0 0
    %2152 = vmatpush1.bf16.xpose.msra.mxu0 0
    %2153 = vmatprep.subr.bf16.mxu0 0
    %2154 = vmatpush1.bf16.xpose.msra.mxu0 0
    %2155 = vmatprep.subr.bf16.mxu0 0
    %2156 = vmatpush1.bf16.xpose.msra.mxu0 0
    %2157 = vmatprep.subr.bf16.mxu0 0
    %2158 = vmatpush1.bf16.xpose.msra.mxu0 0
    %2159 = vmatprep.subr.bf16.mxu0 0
    %2160 = vmatpush1.bf16.xpose.msra.mxu0 0
    %2161 = vmatprep.subr.bf16.mxu0 0
    %2162 = vmatpush1.bf16.xpose.msra.mxu0 0
    %2163 = vmatprep.subr.bf16.mxu0 0
    %2164 = vmatpush1.bf16.xpose.msra.mxu0 0
    %2165 = vmatprep.subr.bf16.mxu0 0
    %2166 = vmatpush1.bf16.xpose.msra.mxu0 0
    %2167 = vmatprep.mubr.bf16.mxu0 0
    %2168 = vmatmul.mubr.bf16.gmra.mrb[0].mxu0 %v2130
    %v2169 = vpop.f32.mrb[0].mxu0
    %v2170 = vadd.f32 0.0, %v2169
    %v2171 = vpop.f32.mrb[0].mxu0
    %v2172 = vpop.f32.mrb[0].mxu0
    %v2173 = vadd.f32 0.0, %v2172
    %v2174 = vpop.f32.mrb[0].mxu0
    %2175 = vdwg.mxu0
    %v2176 = vmul.f32 %v2119, 0.5
    %v2177 = vmul.f32 %v2122, 0.5
    %v2178 = vmul.f32 %v2170, 0.5
    %v2179 = vmul.f32 %v2173, 0.5
    %v2180 = vsel %vm1174, %v2176, -inf
    %2181 = vmax.xlane.f32.xlu0 %v2180
    %v2182 = vpop.xlane.xlu0 %2181
    %v2183 = vsel %vm1174, %v2177, -inf
    %2184 = vmax.xlane.f32.xlu0 %v2183
    %v2185 = vpop.xlane.xlu0 %2184
    %v2186 = vsel %vm1174, %v2178, -inf
    %2187 = vmax.xlane.f32.xlu0 %v2186
    %v2188 = vpop.xlane.xlu0 %2187
    %v2189 = vsel %vm1174, %v2179, -inf
    %2190 = vmax.xlane.f32.xlu0 %v2189
    %v2191 = vpop.xlane.xlu0 %2190
    %v2192 = vsub.f32 %v2176, %v2182
    %v2193 = vsub.f32 %v2177, %v2185
    %v2194 = vsub.f32 %v2178, %v2188
    %v2195 = vsub.f32 %v2179, %v2191
    %v2196 = vmul.f32 %v2192, 1.442695
    %v2197 = vpow.pop %v2196
    %v2198 = vmul.f32 %v2193, 1.442695
    %v2199 = vpow.pop %v2198
    %v2200 = vmul.f32 %v2194, 1.442695
    %v2201 = vpow.pop %v2200
    %v2202 = vmul.f32 %v2195, 1.442695
    %v2203 = vpow.pop %v2202
    %v2204 = vsel %vm1174, %v2197, 0.0
    %2205 = vadd.xlane.f32.xlu0 %v2204
    %v2206 = vpop.xlane.xlu0 %2205
    %v2207 = vsel %vm1174, %v2199, 0.0
    %2208 = vadd.xlane.f32.xlu0 %v2207
    %v2209 = vpop.xlane.xlu0 %2208
    %v2210 = vsel %vm1174, %v2201, 0.0
    %2211 = vadd.xlane.f32.xlu0 %v2210
    %v2212 = vpop.xlane.xlu0 %2211
    %v2213 = vsel %vm1174, %v2203, 0.0
    %2214 = vadd.xlane.f32.xlu0 %v2213
    %v2215 = vpop.xlane.xlu0 %2214
    %v2216 = vrcp.pop %v2206
    %v2217 = vrcp.pop %v2209
    %v2218 = vrcp.pop %v2212
    %v2219 = vrcp.pop %v2215
    %v2220 = vmul.f32 %v2197, %v2216
    %v2221 = vmul.f32 %v2199, %v2217
    %v2222 = vmul.f32 %v2201, %v2218
    %v2223 = vmul.f32 %v2203, %v2219
    %v2224 = vpack.c.bf16 %v2221, %v2220
    %v2225 = vpack.c.bf16 %v2223, %v2222
    %2226 = vrot.lane.b32.xlu0 %v1073, 80
    %v2227 = vpop.permute.xlu0 %2226
    %v2229 = vsel %vm1174, %v2224, 0
    %v2232 = vsel %vm1227, %v2227, 0
    %2234 = vmatprep.subr.bf16.mxu0 0
    %2235 = vmatpush1.bf16.msra.mxu0 %v2232
    %2236 = vmatprep.subr.bf16.mxu0 0
    %2237 = vmatpush1.bf16.msra.mxu0 0
    %2238 = vmatprep.subr.bf16.mxu0 0
    %2239 = vmatpush1.bf16.msra.mxu0 0
    %2240 = vmatprep.subr.bf16.mxu0 0
    %2241 = vmatpush1.bf16.msra.mxu0 0
    %2242 = vmatprep.subr.bf16.mxu0 0
    %2243 = vmatpush1.bf16.msra.mxu0 0
    %2244 = vmatprep.subr.bf16.mxu0 0
    %2245 = vmatpush1.bf16.msra.mxu0 0
    %2246 = vmatprep.subr.bf16.mxu0 0
    %2247 = vmatpush1.bf16.msra.mxu0 0
    %2248 = vmatprep.subr.bf16.mxu0 0
    %2249 = vmatpush1.bf16.msra.mxu0 0
    %2250 = vmatprep.subr.bf16.mxu0 0
    %2251 = vmatpush1.bf16.msra.mxu0 0
    %2252 = vmatprep.subr.bf16.mxu0 0
    %2253 = vmatpush1.bf16.msra.mxu0 0
    %2254 = vmatprep.subr.bf16.mxu0 0
    %2255 = vmatpush1.bf16.msra.mxu0 0
    %2256 = vmatprep.subr.bf16.mxu0 0
    %2257 = vmatpush1.bf16.msra.mxu0 0
    %2258 = vmatprep.subr.bf16.mxu0 0
    %2259 = vmatpush1.bf16.msra.mxu0 0
    %2260 = vmatprep.subr.bf16.mxu0 0
    %2261 = vmatpush1.bf16.msra.mxu0 0
    %2262 = vmatprep.subr.bf16.mxu0 0
    %2263 = vmatpush1.bf16.msra.mxu0 0
    %2264 = vmatprep.subr.bf16.mxu0 0
    %2265 = vmatpush1.bf16.msra.mxu0 0
    %2266 = vmatprep.mubr.bf16.mxu0 0
    %2267 = vmatmul.mubr.bf16.gmra.mrb[0].mxu0 %v2229
    %v2268 = vpop.f32.mrb[0].mxu0
    %v2269 = vadd.f32 0.0, %v2268
    %v2270 = vpop.f32.mrb[0].mxu0
    %v2271 = vpop.f32.mrb[0].mxu0
    %v2272 = vadd.f32 0.0, %v2271
    %v2273 = vpop.f32.mrb[0].mxu0
    %2274 = vdwg.mxu0
    %2275 = vrot.lane.b32.xlu0 %v1074, 80
    %v2276 = vpop.permute.xlu0 %2275
    %v2278 = vsel %vm1174, %v2225, 0
    %v2281 = vsel %vm1227, %v2276, 0
    %2283 = vmatprep.subr.bf16.mxu0 0
    %2284 = vmatpush1.bf16.msra.mxu0 %v2281
    %2285 = vmatprep.subr.bf16.mxu0 0
    %2286 = vmatpush1.bf16.msra.mxu0 0
    %2287 = vmatprep.subr.bf16.mxu0 0
    %2288 = vmatpush1.bf16.msra.mxu0 0
    %2289 = vmatprep.subr.bf16.mxu0 0
    %2290 = vmatpush1.bf16.msra.mxu0 0
    %2291 = vmatprep.subr.bf16.mxu0 0
    %2292 = vmatpush1.bf16.msra.mxu0 0
    %2293 = vmatprep.subr.bf16.mxu0 0
    %2294 = vmatpush1.bf16.msra.mxu0 0
    %2295 = vmatprep.subr.bf16.mxu0 0
    %2296 = vmatpush1.bf16.msra.mxu0 0
    %2297 = vmatprep.subr.bf16.mxu0 0
    %2298 = vmatpush1.bf16.msra.mxu0 0
    %2299 = vmatprep.subr.bf16.mxu0 0
    %2300 = vmatpush1.bf16.msra.mxu0 0
    %2301 = vmatprep.subr.bf16.mxu0 0
    %2302 = vmatpush1.bf16.msra.mxu0 0
    %2303 = vmatprep.subr.bf16.mxu0 0
    %2304 = vmatpush1.bf16.msra.mxu0 0
    %2305 = vmatprep.subr.bf16.mxu0 0
    %2306 = vmatpush1.bf16.msra.mxu0 0
    %2307 = vmatprep.subr.bf16.mxu0 0
    %2308 = vmatpush1.bf16.msra.mxu0 0
    %2309 = vmatprep.subr.bf16.mxu0 0
    %2310 = vmatpush1.bf16.msra.mxu0 0
    %2311 = vmatprep.subr.bf16.mxu0 0
    %2312 = vmatpush1.bf16.msra.mxu0 0
    %2313 = vmatprep.subr.bf16.mxu0 0
    %2314 = vmatpush1.bf16.msra.mxu0 0
    %2315 = vmatprep.mubr.bf16.mxu0 0
    %2316 = vmatmul.mubr.bf16.gmra.mrb[0].mxu0 %v2278
    %v2317 = vpop.f32.mrb[0].mxu0
    %v2318 = vadd.f32 0.0, %v2317
    %v2319 = vpop.f32.mrb[0].mxu0
    %v2320 = vpop.f32.mrb[0].mxu0
    %v2321 = vadd.f32 0.0, %v2320
    %v2322 = vpop.f32.mrb[0].mxu0
    %2323 = vdwg.mxu0
    %2324 = vrot.lane.b32.xlu0 %v1019, 108
    %v2325 = vpop.permute.xlu0 %2324
    %2326 = vrot.lane.b32.xlu0 %v1073, 108
    %v2327 = vpop.permute.xlu0 %2326
    %v2329 = vsel %vm1075, %v2325, 0
    %v2332 = vsel %vm1075, %v2327, 0
    %2334 = vmatprep.subr.bf16.mxu0 0
    %2335 = vmatpush1.bf16.xpose.msra.mxu0 %v2332
    %2336 = vmatprep.subr.bf16.mxu0 0
    %2337 = vmatpush1.bf16.xpose.msra.mxu0 0
    %2338 = vmatprep.subr.bf16.mxu0 0
    %2339 = vmatpush1.bf16.xpose.msra.mxu0 0
    %2340 = vmatprep.subr.bf16.mxu0 0
    %2341 = vmatpush1.bf16.xpose.msra.mxu0 0
    %2342 = vmatprep.subr.bf16.mxu0 0
    %2343 = vmatpush1.bf16.xpose.msra.mxu0 0
    %2344 = vmatprep.subr.bf16.mxu0 0
    %2345 = vmatpush1.bf16.xpose.msra.mxu0 0
    %2346 = vmatprep.subr.bf16.mxu0 0
    %2347 = vmatpush1.bf16.xpose.msra.mxu0 0
    %2348 = vmatprep.subr.bf16.mxu0 0
    %2349 = vmatpush1.bf16.xpose.msra.mxu0 0
    %2350 = vmatprep.subr.bf16.mxu0 0
    %2351 = vmatpush1.bf16.xpose.msra.mxu0 0
    %2352 = vmatprep.subr.bf16.mxu0 0
    %2353 = vmatpush1.bf16.xpose.msra.mxu0 0
    %2354 = vmatprep.subr.bf16.mxu0 0
    %2355 = vmatpush1.bf16.xpose.msra.mxu0 0
    %2356 = vmatprep.subr.bf16.mxu0 0
    %2357 = vmatpush1.bf16.xpose.msra.mxu0 0
    %2358 = vmatprep.subr.bf16.mxu0 0
    %2359 = vmatpush1.bf16.xpose.msra.mxu0 0
    %2360 = vmatprep.subr.bf16.mxu0 0
    %2361 = vmatpush1.bf16.xpose.msra.mxu0 0
    %2362 = vmatprep.subr.bf16.mxu0 0
    %2363 = vmatpush1.bf16.xpose.msra.mxu0 0
    %2364 = vmatprep.subr.bf16.mxu0 0
    %2365 = vmatpush1.bf16.xpose.msra.mxu0 0
    %2366 = vmatprep.mubr.bf16.mxu0 0
    %2367 = vmatmul.mubr.bf16.gmra.mrb[0].mxu0 %v2329
    %v2368 = vpop.f32.mrb[0].mxu0
    %v2369 = vadd.f32 0.0, %v2368
    %v2370 = vpop.f32.mrb[0].mxu0
    %v2371 = vpop.f32.mrb[0].mxu0
    %v2372 = vadd.f32 0.0, %v2371
    %v2373 = vpop.f32.mrb[0].mxu0
    %2374 = vdwg.mxu0
    %2375 = vrot.lane.b32.xlu0 %v1020, 108
    %v2376 = vpop.permute.xlu0 %2375
    %2377 = vrot.lane.b32.xlu0 %v1074, 108
    %v2378 = vpop.permute.xlu0 %2377
    %v2380 = vsel %vm1075, %v2376, 0
    %v2383 = vsel %vm1075, %v2378, 0
    %2385 = vmatprep.subr.bf16.mxu0 0
    %2386 = vmatpush1.bf16.xpose.msra.mxu0 %v2383
    %2387 = vmatprep.subr.bf16.mxu0 0
    %2388 = vmatpush1.bf16.xpose.msra.mxu0 0
    %2389 = vmatprep.subr.bf16.mxu0 0
    %2390 = vmatpush1.bf16.xpose.msra.mxu0 0
    %2391 = vmatprep.subr.bf16.mxu0 0
    %2392 = vmatpush1.bf16.xpose.msra.mxu0 0
    %2393 = vmatprep.subr.bf16.mxu0 0
    %2394 = vmatpush1.bf16.xpose.msra.mxu0 0
    %2395 = vmatprep.subr.bf16.mxu0 0
    %2396 = vmatpush1.bf16.xpose.msra.mxu0 0
    %2397 = vmatprep.subr.bf16.mxu0 0
    %2398 = vmatpush1.bf16.xpose.msra.mxu0 0
    %2399 = vmatprep.subr.bf16.mxu0 0
    %2400 = vmatpush1.bf16.xpose.msra.mxu0 0
    %2401 = vmatprep.subr.bf16.mxu0 0
    %2402 = vmatpush1.bf16.xpose.msra.mxu0 0
    %2403 = vmatprep.subr.bf16.mxu0 0
    %2404 = vmatpush1.bf16.xpose.msra.mxu0 0
    %2405 = vmatprep.subr.bf16.mxu0 0
    %2406 = vmatpush1.bf16.xpose.msra.mxu0 0
    %2407 = vmatprep.subr.bf16.mxu0 0
    %2408 = vmatpush1.bf16.xpose.msra.mxu0 0
    %2409 = vmatprep.subr.bf16.mxu0 0
    %2410 = vmatpush1.bf16.xpose.msra.mxu0 0
    %2411 = vmatprep.subr.bf16.mxu0 0
    %2412 = vmatpush1.bf16.xpose.msra.mxu0 0
    %2413 = vmatprep.subr.bf16.mxu0 0
    %2414 = vmatpush1.bf16.xpose.msra.mxu0 0
    %2415 = vmatprep.subr.bf16.mxu0 0
    %2416 = vmatpush1.bf16.xpose.msra.mxu0 0
    %2417 = vmatprep.mubr.bf16.mxu0 0
    %2418 = vmatmul.mubr.bf16.gmra.mrb[0].mxu0 %v2380
    %v2419 = vpop.f32.mrb[0].mxu0
    %v2420 = vadd.f32 0.0, %v2419
    %v2421 = vpop.f32.mrb[0].mxu0
    %v2422 = vpop.f32.mrb[0].mxu0
    %v2423 = vadd.f32 0.0, %v2422
    %v2424 = vpop.f32.mrb[0].mxu0
    %2425 = vdwg.mxu0
    %v2426 = vmul.f32 %v2369, 0.5
    %v2427 = vmul.f32 %v2372, 0.5
    %v2428 = vmul.f32 %v2420, 0.5
    %v2429 = vmul.f32 %v2423, 0.5
    %v2430 = vsel %vm1174, %v2426, -inf
    %2431 = vmax.xlane.f32.xlu0 %v2430
    %v2432 = vpop.xlane.xlu0 %2431
    %v2433 = vsel %vm1174, %v2427, -inf
    %2434 = vmax.xlane.f32.xlu0 %v2433
    %v2435 = vpop.xlane.xlu0 %2434
    %v2436 = vsel %vm1174, %v2428, -inf
    %2437 = vmax.xlane.f32.xlu0 %v2436
    %v2438 = vpop.xlane.xlu0 %2437
    %v2439 = vsel %vm1174, %v2429, -inf
    %2440 = vmax.xlane.f32.xlu0 %v2439
    %v2441 = vpop.xlane.xlu0 %2440
    %v2442 = vsub.f32 %v2426, %v2432
    %v2443 = vsub.f32 %v2427, %v2435
    %v2444 = vsub.f32 %v2428, %v2438
    %v2445 = vsub.f32 %v2429, %v2441
    %v2446 = vmul.f32 %v2442, 1.442695
    %v2447 = vpow.pop %v2446
    %v2448 = vmul.f32 %v2443, 1.442695
    %v2449 = vpow.pop %v2448
    %v2450 = vmul.f32 %v2444, 1.442695
    %v2451 = vpow.pop %v2450
    %v2452 = vmul.f32 %v2445, 1.442695
    %v2453 = vpow.pop %v2452
    %v2454 = vsel %vm1174, %v2447, 0.0
    %2455 = vadd.xlane.f32.xlu0 %v2454
    %v2456 = vpop.xlane.xlu0 %2455
    %v2457 = vsel %vm1174, %v2449, 0.0
    %2458 = vadd.xlane.f32.xlu0 %v2457
    %v2459 = vpop.xlane.xlu0 %2458
    %v2460 = vsel %vm1174, %v2451, 0.0
    %2461 = vadd.xlane.f32.xlu0 %v2460
    %v2462 = vpop.xlane.xlu0 %2461
    %v2463 = vsel %vm1174, %v2453, 0.0
    %2464 = vadd.xlane.f32.xlu0 %v2463
    %v2465 = vpop.xlane.xlu0 %2464
    %v2466 = vrcp.pop %v2456
    %v2467 = vrcp.pop %v2459
    %v2468 = vrcp.pop %v2462
    %v2469 = vrcp.pop %v2465
    %v2470 = vmul.f32 %v2447, %v2466
    %v2471 = vmul.f32 %v2449, %v2467
    %v2472 = vmul.f32 %v2451, %v2468
    %v2473 = vmul.f32 %v2453, %v2469
    %v2474 = vpack.c.bf16 %v2471, %v2470
    %v2475 = vpack.c.bf16 %v2473, %v2472
    %2476 = vrot.lane.b32.xlu0 %v1073, 76
    %v2477 = vpop.permute.xlu0 %2476
    %v2479 = vsel %vm1174, %v2474, 0
    %v2482 = vsel %vm1227, %v2477, 0
    %2484 = vmatprep.subr.bf16.mxu0 0
    %2485 = vmatpush1.bf16.msra.mxu0 %v2482
    %2486 = vmatprep.subr.bf16.mxu0 0
    %2487 = vmatpush1.bf16.msra.mxu0 0
    %2488 = vmatprep.subr.bf16.mxu0 0
    %2489 = vmatpush1.bf16.msra.mxu0 0
    %2490 = vmatprep.subr.bf16.mxu0 0
    %2491 = vmatpush1.bf16.msra.mxu0 0
    %2492 = vmatprep.subr.bf16.mxu0 0
    %2493 = vmatpush1.bf16.msra.mxu0 0
    %2494 = vmatprep.subr.bf16.mxu0 0
    %2495 = vmatpush1.bf16.msra.mxu0 0
    %2496 = vmatprep.subr.bf16.mxu0 0
    %2497 = vmatpush1.bf16.msra.mxu0 0
    %2498 = vmatprep.subr.bf16.mxu0 0
    %2499 = vmatpush1.bf16.msra.mxu0 0
    %2500 = vmatprep.subr.bf16.mxu0 0
    %2501 = vmatpush1.bf16.msra.mxu0 0
    %2502 = vmatprep.subr.bf16.mxu0 0
    %2503 = vmatpush1.bf16.msra.mxu0 0
    %2504 = vmatprep.subr.bf16.mxu0 0
    %2505 = vmatpush1.bf16.msra.mxu0 0
    %2506 = vmatprep.subr.bf16.mxu0 0
    %2507 = vmatpush1.bf16.msra.mxu0 0
    %2508 = vmatprep.subr.bf16.mxu0 0
    %2509 = vmatpush1.bf16.msra.mxu0 0
    %2510 = vmatprep.subr.bf16.mxu0 0
    %2511 = vmatpush1.bf16.msra.mxu0 0
    %2512 = vmatprep.subr.bf16.mxu0 0
    %2513 = vmatpush1.bf16.msra.mxu0 0
    %2514 = vmatprep.subr.bf16.mxu0 0
    %2515 = vmatpush1.bf16.msra.mxu0 0
    %2516 = vmatprep.mubr.bf16.mxu0 0
    %2517 = vmatmul.mubr.bf16.gmra.mrb[0].mxu0 %v2479
    %v2518 = vpop.f32.mrb[0].mxu0
    %v2519 = vadd.f32 0.0, %v2518
    %v2520 = vpop.f32.mrb[0].mxu0
    %v2521 = vpop.f32.mrb[0].mxu0
    %v2522 = vadd.f32 0.0, %v2521
    %v2523 = vpop.f32.mrb[0].mxu0
    %2524 = vdwg.mxu0
    %2525 = vrot.lane.b32.xlu0 %v1074, 76
    %v2526 = vpop.permute.xlu0 %2525
    %v2528 = vsel %vm1174, %v2475, 0
    %v2531 = vsel %vm1227, %v2526, 0
    %2533 = vmatprep.subr.bf16.mxu0 0
    %2534 = vmatpush1.bf16.msra.mxu0 %v2531
    %2535 = vmatprep.subr.bf16.mxu0 0
    %2536 = vmatpush1.bf16.msra.mxu0 0
    %2537 = vmatprep.subr.bf16.mxu0 0
    %2538 = vmatpush1.bf16.msra.mxu0 0
    %2539 = vmatprep.subr.bf16.mxu0 0
    %2540 = vmatpush1.bf16.msra.mxu0 0
    %2541 = vmatprep.subr.bf16.mxu0 0
    %2542 = vmatpush1.bf16.msra.mxu0 0
    %2543 = vmatprep.subr.bf16.mxu0 0
    %2544 = vmatpush1.bf16.msra.mxu0 0
    %2545 = vmatprep.subr.bf16.mxu0 0
    %2546 = vmatpush1.bf16.msra.mxu0 0
    %2547 = vmatprep.subr.bf16.mxu0 0
    %2548 = vmatpush1.bf16.msra.mxu0 0
    %2549 = vmatprep.subr.bf16.mxu0 0
    %2550 = vmatpush1.bf16.msra.mxu0 0
    %2551 = vmatprep.subr.bf16.mxu0 0
    %2552 = vmatpush1.bf16.msra.mxu0 0
    %2553 = vmatprep.subr.bf16.mxu0 0
    %2554 = vmatpush1.bf16.msra.mxu0 0
    %2555 = vmatprep.subr.bf16.mxu0 0
    %2556 = vmatpush1.bf16.msra.mxu0 0
    %2557 = vmatprep.subr.bf16.mxu0 0
    %2558 = vmatpush1.bf16.msra.mxu0 0
    %2559 = vmatprep.subr.bf16.mxu0 0
    %2560 = vmatpush1.bf16.msra.mxu0 0
    %2561 = vmatprep.subr.bf16.mxu0 0
    %2562 = vmatpush1.bf16.msra.mxu0 0
    %2563 = vmatprep.subr.bf16.mxu0 0
    %2564 = vmatpush1.bf16.msra.mxu0 0
    %2565 = vmatprep.mubr.bf16.mxu0 0
    %2566 = vmatmul.mubr.bf16.gmra.mrb[0].mxu0 %v2528
    %v2567 = vpop.f32.mrb[0].mxu0
    %v2568 = vadd.f32 0.0, %v2567
    %v2569 = vpop.f32.mrb[0].mxu0
    %v2570 = vpop.f32.mrb[0].mxu0
    %v2571 = vadd.f32 0.0, %v2570
    %v2572 = vpop.f32.mrb[0].mxu0
    %2573 = vdwg.mxu0
    %2574 = vrot.lane.b32.xlu0 %v1019, 104
    %v2575 = vpop.permute.xlu0 %2574
    %2576 = vrot.lane.b32.xlu0 %v1073, 104
    %v2577 = vpop.permute.xlu0 %2576
    %v2579 = vsel %vm1075, %v2575, 0
    %v2582 = vsel %vm1075, %v2577, 0
    %2584 = vmatprep.subr.bf16.mxu0 0
    %2585 = vmatpush1.bf16.xpose.msra.mxu0 %v2582
    %2586 = vmatprep.subr.bf16.mxu0 0
    %2587 = vmatpush1.bf16.xpose.msra.mxu0 0
    %2588 = vmatprep.subr.bf16.mxu0 0
    %2589 = vmatpush1.bf16.xpose.msra.mxu0 0
    %2590 = vmatprep.subr.bf16.mxu0 0
    %2591 = vmatpush1.bf16.xpose.msra.mxu0 0
    %2592 = vmatprep.subr.bf16.mxu0 0
    %2593 = vmatpush1.bf16.xpose.msra.mxu0 0
    %2594 = vmatprep.subr.bf16.mxu0 0
    %2595 = vmatpush1.bf16.xpose.msra.mxu0 0
    %2596 = vmatprep.subr.bf16.mxu0 0
    %2597 = vmatpush1.bf16.xpose.msra.mxu0 0
    %2598 = vmatprep.subr.bf16.mxu0 0
    %2599 = vmatpush1.bf16.xpose.msra.mxu0 0
    %2600 = vmatprep.subr.bf16.mxu0 0
    %2601 = vmatpush1.bf16.xpose.msra.mxu0 0
    %2602 = vmatprep.subr.bf16.mxu0 0
    %2603 = vmatpush1.bf16.xpose.msra.mxu0 0
    %2604 = vmatprep.subr.bf16.mxu0 0
    %2605 = vmatpush1.bf16.xpose.msra.mxu0 0
    %2606 = vmatprep.subr.bf16.mxu0 0
    %2607 = vmatpush1.bf16.xpose.msra.mxu0 0
    %2608 = vmatprep.subr.bf16.mxu0 0
    %2609 = vmatpush1.bf16.xpose.msra.mxu0 0
    %2610 = vmatprep.subr.bf16.mxu0 0
    %2611 = vmatpush1.bf16.xpose.msra.mxu0 0
    %2612 = vmatprep.subr.bf16.mxu0 0
    %2613 = vmatpush1.bf16.xpose.msra.mxu0 0
    %2614 = vmatprep.subr.bf16.mxu0 0
    %2615 = vmatpush1.bf16.xpose.msra.mxu0 0
    %2616 = vmatprep.mubr.bf16.mxu0 0
    %2617 = vmatmul.mubr.bf16.gmra.mrb[0].mxu0 %v2579
    %v2618 = vpop.f32.mrb[0].mxu0
    %v2619 = vadd.f32 0.0, %v2618
    %v2620 = vpop.f32.mrb[0].mxu0
    %v2621 = vpop.f32.mrb[0].mxu0
    %v2622 = vadd.f32 0.0, %v2621
    %v2623 = vpop.f32.mrb[0].mxu0
    %2624 = vdwg.mxu0
    %2625 = vrot.lane.b32.xlu0 %v1020, 104
    %v2626 = vpop.permute.xlu0 %2625
    %2627 = vrot.lane.b32.xlu0 %v1074, 104
    %v2628 = vpop.permute.xlu0 %2627
    %v2630 = vsel %vm1075, %v2626, 0
    %v2633 = vsel %vm1075, %v2628, 0
    %2635 = vmatprep.subr.bf16.mxu0 0
    %2636 = vmatpush1.bf16.xpose.msra.mxu0 %v2633
    %2637 = vmatprep.subr.bf16.mxu0 0
    %2638 = vmatpush1.bf16.xpose.msra.mxu0 0
    %2639 = vmatprep.subr.bf16.mxu0 0
    %2640 = vmatpush1.bf16.xpose.msra.mxu0 0
    %2641 = vmatprep.subr.bf16.mxu0 0
    %2642 = vmatpush1.bf16.xpose.msra.mxu0 0
    %2643 = vmatprep.subr.bf16.mxu0 0
    %2644 = vmatpush1.bf16.xpose.msra.mxu0 0
    %2645 = vmatprep.subr.bf16.mxu0 0
    %2646 = vmatpush1.bf16.xpose.msra.mxu0 0
    %2647 = vmatprep.subr.bf16.mxu0 0
    %2648 = vmatpush1.bf16.xpose.msra.mxu0 0
    %2649 = vmatprep.subr.bf16.mxu0 0
    %2650 = vmatpush1.bf16.xpose.msra.mxu0 0
    %2651 = vmatprep.subr.bf16.mxu0 0
    %2652 = vmatpush1.bf16.xpose.msra.mxu0 0
    %2653 = vmatprep.subr.bf16.mxu0 0
    %2654 = vmatpush1.bf16.xpose.msra.mxu0 0
    %2655 = vmatprep.subr.bf16.mxu0 0
    %2656 = vmatpush1.bf16.xpose.msra.mxu0 0
    %2657 = vmatprep.subr.bf16.mxu0 0
    %2658 = vmatpush1.bf16.xpose.msra.mxu0 0
    %2659 = vmatprep.subr.bf16.mxu0 0
    %2660 = vmatpush1.bf16.xpose.msra.mxu0 0
    %2661 = vmatprep.subr.bf16.mxu0 0
    %2662 = vmatpush1.bf16.xpose.msra.mxu0 0
    %2663 = vmatprep.subr.bf16.mxu0 0
    %2664 = vmatpush1.bf16.xpose.msra.mxu0 0
    %2665 = vmatprep.subr.bf16.mxu0 0
    %2666 = vmatpush1.bf16.xpose.msra.mxu0 0
    %2667 = vmatprep.mubr.bf16.mxu0 0
    %2668 = vmatmul.mubr.bf16.gmra.mrb[0].mxu0 %v2630
    %v2669 = vpop.f32.mrb[0].mxu0
    %v2670 = vadd.f32 0.0, %v2669
    %v2671 = vpop.f32.mrb[0].mxu0
    %v2672 = vpop.f32.mrb[0].mxu0
    %v2673 = vadd.f32 0.0, %v2672
    %v2674 = vpop.f32.mrb[0].mxu0
    %2675 = vdwg.mxu0
    %v2676 = vmul.f32 %v2619, 0.5
    %v2677 = vmul.f32 %v2622, 0.5
    %v2678 = vmul.f32 %v2670, 0.5
    %v2679 = vmul.f32 %v2673, 0.5
    %v2680 = vsel %vm1174, %v2676, -inf
    %2681 = vmax.xlane.f32.xlu0 %v2680
    %v2682 = vpop.xlane.xlu0 %2681
    %v2683 = vsel %vm1174, %v2677, -inf
    %2684 = vmax.xlane.f32.xlu0 %v2683
    %v2685 = vpop.xlane.xlu0 %2684
    %v2686 = vsel %vm1174, %v2678, -inf
    %2687 = vmax.xlane.f32.xlu0 %v2686
    %v2688 = vpop.xlane.xlu0 %2687
    %v2689 = vsel %vm1174, %v2679, -inf
    %2690 = vmax.xlane.f32.xlu0 %v2689
    %v2691 = vpop.xlane.xlu0 %2690
    %v2692 = vsub.f32 %v2676, %v2682
    %v2693 = vsub.f32 %v2677, %v2685
    %v2694 = vsub.f32 %v2678, %v2688
    %v2695 = vsub.f32 %v2679, %v2691
    %v2696 = vmul.f32 %v2692, 1.442695
    %v2697 = vpow.pop %v2696
    %v2698 = vmul.f32 %v2693, 1.442695
    %v2699 = vpow.pop %v2698
    %v2700 = vmul.f32 %v2694, 1.442695
    %v2701 = vpow.pop %v2700
    %v2702 = vmul.f32 %v2695, 1.442695
    %v2703 = vpow.pop %v2702
    %v2704 = vsel %vm1174, %v2697, 0.0
    %2705 = vadd.xlane.f32.xlu0 %v2704
    %v2706 = vpop.xlane.xlu0 %2705
    %v2707 = vsel %vm1174, %v2699, 0.0
    %2708 = vadd.xlane.f32.xlu0 %v2707
    %v2709 = vpop.xlane.xlu0 %2708
    %v2710 = vsel %vm1174, %v2701, 0.0
    %2711 = vadd.xlane.f32.xlu0 %v2710
    %v2712 = vpop.xlane.xlu0 %2711
    %v2713 = vsel %vm1174, %v2703, 0.0
    %2714 = vadd.xlane.f32.xlu0 %v2713
    %v2715 = vpop.xlane.xlu0 %2714
    %v2716 = vrcp.pop %v2706
    %v2717 = vrcp.pop %v2709
    %v2718 = vrcp.pop %v2712
    %v2719 = vrcp.pop %v2715
    %v2720 = vmul.f32 %v2697, %v2716
    %v2721 = vmul.f32 %v2699, %v2717
    %v2722 = vmul.f32 %v2701, %v2718
    %v2723 = vmul.f32 %v2703, %v2719
    %v2724 = vpack.c.bf16 %v2721, %v2720
    %v2725 = vpack.c.bf16 %v2723, %v2722
    %2726 = vrot.lane.b32.xlu0 %v1073, 72
    %v2727 = vpop.permute.xlu0 %2726
    %v2729 = vsel %vm1174, %v2724, 0
    %v2732 = vsel %vm1227, %v2727, 0
    %2734 = vmatprep.subr.bf16.mxu0 0
    %2735 = vmatpush1.bf16.msra.mxu0 %v2732
    %2736 = vmatprep.subr.bf16.mxu0 0
    %2737 = vmatpush1.bf16.msra.mxu0 0
    %2738 = vmatprep.subr.bf16.mxu0 0
    %2739 = vmatpush1.bf16.msra.mxu0 0
    %2740 = vmatprep.subr.bf16.mxu0 0
    %2741 = vmatpush1.bf16.msra.mxu0 0
    %2742 = vmatprep.subr.bf16.mxu0 0
    %2743 = vmatpush1.bf16.msra.mxu0 0
    %2744 = vmatprep.subr.bf16.mxu0 0
    %2745 = vmatpush1.bf16.msra.mxu0 0
    %2746 = vmatprep.subr.bf16.mxu0 0
    %2747 = vmatpush1.bf16.msra.mxu0 0
    %2748 = vmatprep.subr.bf16.mxu0 0
    %2749 = vmatpush1.bf16.msra.mxu0 0
    %2750 = vmatprep.subr.bf16.mxu0 0
    %2751 = vmatpush1.bf16.msra.mxu0 0
    %2752 = vmatprep.subr.bf16.mxu0 0
    %2753 = vmatpush1.bf16.msra.mxu0 0
    %2754 = vmatprep.subr.bf16.mxu0 0
    %2755 = vmatpush1.bf16.msra.mxu0 0
    %2756 = vmatprep.subr.bf16.mxu0 0
    %2757 = vmatpush1.bf16.msra.mxu0 0
    %2758 = vmatprep.subr.bf16.mxu0 0
    %2759 = vmatpush1.bf16.msra.mxu0 0
    %2760 = vmatprep.subr.bf16.mxu0 0
    %2761 = vmatpush1.bf16.msra.mxu0 0
    %2762 = vmatprep.subr.bf16.mxu0 0
    %2763 = vmatpush1.bf16.msra.mxu0 0
    %2764 = vmatprep.subr.bf16.mxu0 0
    %2765 = vmatpush1.bf16.msra.mxu0 0
    %2766 = vmatprep.mubr.bf16.mxu0 0
    %2767 = vmatmul.mubr.bf16.gmra.mrb[0].mxu0 %v2729
    %v2768 = vpop.f32.mrb[0].mxu0
    %v2769 = vadd.f32 0.0, %v2768
    %v2770 = vpop.f32.mrb[0].mxu0
    %v2771 = vpop.f32.mrb[0].mxu0
    %v2772 = vadd.f32 0.0, %v2771
    %v2773 = vpop.f32.mrb[0].mxu0
    %2774 = vdwg.mxu0
    %2775 = vrot.lane.b32.xlu0 %v1074, 72
    %v2776 = vpop.permute.xlu0 %2775
    %v2778 = vsel %vm1174, %v2725, 0
    %v2781 = vsel %vm1227, %v2776, 0
    %2783 = vmatprep.subr.bf16.mxu0 0
    %2784 = vmatpush1.bf16.msra.mxu0 %v2781
    %2785 = vmatprep.subr.bf16.mxu0 0
    %2786 = vmatpush1.bf16.msra.mxu0 0
    %2787 = vmatprep.subr.bf16.mxu0 0
    %2788 = vmatpush1.bf16.msra.mxu0 0
    %2789 = vmatprep.subr.bf16.mxu0 0
    %2790 = vmatpush1.bf16.msra.mxu0 0
    %2791 = vmatprep.subr.bf16.mxu0 0
    %2792 = vmatpush1.bf16.msra.mxu0 0
    %2793 = vmatprep.subr.bf16.mxu0 0
    %2794 = vmatpush1.bf16.msra.mxu0 0
    %2795 = vmatprep.subr.bf16.mxu0 0
    %2796 = vmatpush1.bf16.msra.mxu0 0
    %2797 = vmatprep.subr.bf16.mxu0 0
    %2798 = vmatpush1.bf16.msra.mxu0 0
    %2799 = vmatprep.subr.bf16.mxu0 0
    %2800 = vmatpush1.bf16.msra.mxu0 0
    %2801 = vmatprep.subr.bf16.mxu0 0
    %2802 = vmatpush1.bf16.msra.mxu0 0
    %2803 = vmatprep.subr.bf16.mxu0 0
    %2804 = vmatpush1.bf16.msra.mxu0 0
    %2805 = vmatprep.subr.bf16.mxu0 0
    %2806 = vmatpush1.bf16.msra.mxu0 0
    %2807 = vmatprep.subr.bf16.mxu0 0
    %2808 = vmatpush1.bf16.msra.mxu0 0
    %2809 = vmatprep.subr.bf16.mxu0 0
    %2810 = vmatpush1.bf16.msra.mxu0 0
    %2811 = vmatprep.subr.bf16.mxu0 0
    %2812 = vmatpush1.bf16.msra.mxu0 0
    %2813 = vmatprep.subr.bf16.mxu0 0
    %2814 = vmatpush1.bf16.msra.mxu0 0
    %2815 = vmatprep.mubr.bf16.mxu0 0
    %2816 = vmatmul.mubr.bf16.gmra.mrb[0].mxu0 %v2778
    %v2817 = vpop.f32.mrb[0].mxu0
    %v2818 = vadd.f32 0.0, %v2817
    %v2819 = vpop.f32.mrb[0].mxu0
    %v2820 = vpop.f32.mrb[0].mxu0
    %v2821 = vadd.f32 0.0, %v2820
    %v2822 = vpop.f32.mrb[0].mxu0
    %2823 = vdwg.mxu0
    %2824 = vrot.lane.b32.xlu0 %v1019, 100
    %v2825 = vpop.permute.xlu0 %2824
    %2826 = vrot.lane.b32.xlu0 %v1073, 100
    %v2827 = vpop.permute.xlu0 %2826
    %v2829 = vsel %vm1075, %v2825, 0
    %v2832 = vsel %vm1075, %v2827, 0
    %2834 = vmatprep.subr.bf16.mxu0 0
    %2835 = vmatpush1.bf16.xpose.msra.mxu0 %v2832
    %2836 = vmatprep.subr.bf16.mxu0 0
    %2837 = vmatpush1.bf16.xpose.msra.mxu0 0
    %2838 = vmatprep.subr.bf16.mxu0 0
    %2839 = vmatpush1.bf16.xpose.msra.mxu0 0
    %2840 = vmatprep.subr.bf16.mxu0 0
    %2841 = vmatpush1.bf16.xpose.msra.mxu0 0
    %2842 = vmatprep.subr.bf16.mxu0 0
    %2843 = vmatpush1.bf16.xpose.msra.mxu0 0
    %2844 = vmatprep.subr.bf16.mxu0 0
    %2845 = vmatpush1.bf16.xpose.msra.mxu0 0
    %2846 = vmatprep.subr.bf16.mxu0 0
    %2847 = vmatpush1.bf16.xpose.msra.mxu0 0
    %2848 = vmatprep.subr.bf16.mxu0 0
    %2849 = vmatpush1.bf16.xpose.msra.mxu0 0
    %2850 = vmatprep.subr.bf16.mxu0 0
    %2851 = vmatpush1.bf16.xpose.msra.mxu0 0
    %2852 = vmatprep.subr.bf16.mxu0 0
    %2853 = vmatpush1.bf16.xpose.msra.mxu0 0
    %2854 = vmatprep.subr.bf16.mxu0 0
    %2855 = vmatpush1.bf16.xpose.msra.mxu0 0
    %2856 = vmatprep.subr.bf16.mxu0 0
    %2857 = vmatpush1.bf16.xpose.msra.mxu0 0
    %2858 = vmatprep.subr.bf16.mxu0 0
    %2859 = vmatpush1.bf16.xpose.msra.mxu0 0
    %2860 = vmatprep.subr.bf16.mxu0 0
    %2861 = vmatpush1.bf16.xpose.msra.mxu0 0
    %2862 = vmatprep.subr.bf16.mxu0 0
    %2863 = vmatpush1.bf16.xpose.msra.mxu0 0
    %2864 = vmatprep.subr.bf16.mxu0 0
    %2865 = vmatpush1.bf16.xpose.msra.mxu0 0
    %2866 = vmatprep.mubr.bf16.mxu0 0
    %2867 = vmatmul.mubr.bf16.gmra.mrb[0].mxu0 %v2829
    %v2868 = vpop.f32.mrb[0].mxu0
    %v2869 = vadd.f32 0.0, %v2868
    %v2870 = vpop.f32.mrb[0].mxu0
    %v2871 = vpop.f32.mrb[0].mxu0
    %v2872 = vadd.f32 0.0, %v2871
    %v2873 = vpop.f32.mrb[0].mxu0
    %2874 = vdwg.mxu0
    %2875 = vrot.lane.b32.xlu0 %v1020, 100
    %v2876 = vpop.permute.xlu0 %2875
    %2877 = vrot.lane.b32.xlu0 %v1074, 100
    %v2878 = vpop.permute.xlu0 %2877
    %v2880 = vsel %vm1075, %v2876, 0
    %v2883 = vsel %vm1075, %v2878, 0
    %2885 = vmatprep.subr.bf16.mxu0 0
    %2886 = vmatpush1.bf16.xpose.msra.mxu0 %v2883
    %2887 = vmatprep.subr.bf16.mxu0 0
    %2888 = vmatpush1.bf16.xpose.msra.mxu0 0
    %2889 = vmatprep.subr.bf16.mxu0 0
    %2890 = vmatpush1.bf16.xpose.msra.mxu0 0
    %2891 = vmatprep.subr.bf16.mxu0 0
    %2892 = vmatpush1.bf16.xpose.msra.mxu0 0
    %2893 = vmatprep.subr.bf16.mxu0 0
    %2894 = vmatpush1.bf16.xpose.msra.mxu0 0
    %2895 = vmatprep.subr.bf16.mxu0 0
    %2896 = vmatpush1.bf16.xpose.msra.mxu0 0
    %2897 = vmatprep.subr.bf16.mxu0 0
    %2898 = vmatpush1.bf16.xpose.msra.mxu0 0
    %2899 = vmatprep.subr.bf16.mxu0 0
    %2900 = vmatpush1.bf16.xpose.msra.mxu0 0
    %2901 = vmatprep.subr.bf16.mxu0 0
    %2902 = vmatpush1.bf16.xpose.msra.mxu0 0
    %2903 = vmatprep.subr.bf16.mxu0 0
    %2904 = vmatpush1.bf16.xpose.msra.mxu0 0
    %2905 = vmatprep.subr.bf16.mxu0 0
    %2906 = vmatpush1.bf16.xpose.msra.mxu0 0
    %2907 = vmatprep.subr.bf16.mxu0 0
    %2908 = vmatpush1.bf16.xpose.msra.mxu0 0
    %2909 = vmatprep.subr.bf16.mxu0 0
    %2910 = vmatpush1.bf16.xpose.msra.mxu0 0
    %2911 = vmatprep.subr.bf16.mxu0 0
    %2912 = vmatpush1.bf16.xpose.msra.mxu0 0
    %2913 = vmatprep.subr.bf16.mxu0 0
    %2914 = vmatpush1.bf16.xpose.msra.mxu0 0
    %2915 = vmatprep.subr.bf16.mxu0 0
    %2916 = vmatpush1.bf16.xpose.msra.mxu0 0
    %2917 = vmatprep.mubr.bf16.mxu0 0
    %2918 = vmatmul.mubr.bf16.gmra.mrb[0].mxu0 %v2880
    %v2919 = vpop.f32.mrb[0].mxu0
    %v2920 = vadd.f32 0.0, %v2919
    %v2921 = vpop.f32.mrb[0].mxu0
    %v2922 = vpop.f32.mrb[0].mxu0
    %v2923 = vadd.f32 0.0, %v2922
    %v2924 = vpop.f32.mrb[0].mxu0
    %2925 = vdwg.mxu0
    %v2926 = vmul.f32 %v2869, 0.5
    %v2927 = vmul.f32 %v2872, 0.5
    %v2928 = vmul.f32 %v2920, 0.5
    %v2929 = vmul.f32 %v2923, 0.5
    %v2930 = vsel %vm1174, %v2926, -inf
    %2931 = vmax.xlane.f32.xlu0 %v2930
    %v2932 = vpop.xlane.xlu0 %2931
    %v2933 = vsel %vm1174, %v2927, -inf
    %2934 = vmax.xlane.f32.xlu0 %v2933
    %v2935 = vpop.xlane.xlu0 %2934
    %v2936 = vsel %vm1174, %v2928, -inf
    %2937 = vmax.xlane.f32.xlu0 %v2936
    %v2938 = vpop.xlane.xlu0 %2937
    %v2939 = vsel %vm1174, %v2929, -inf
    %2940 = vmax.xlane.f32.xlu0 %v2939
    %v2941 = vpop.xlane.xlu0 %2940
    %v2942 = vsub.f32 %v2926, %v2932
    %v2943 = vsub.f32 %v2927, %v2935
    %v2944 = vsub.f32 %v2928, %v2938
    %v2945 = vsub.f32 %v2929, %v2941
    %v2946 = vmul.f32 %v2942, 1.442695
    %v2947 = vpow.pop %v2946
    %v2948 = vmul.f32 %v2943, 1.442695
    %v2949 = vpow.pop %v2948
    %v2950 = vmul.f32 %v2944, 1.442695
    %v2951 = vpow.pop %v2950
    %v2952 = vmul.f32 %v2945, 1.442695
    %v2953 = vpow.pop %v2952
    %v2954 = vsel %vm1174, %v2947, 0.0
    %2955 = vadd.xlane.f32.xlu0 %v2954
    %v2956 = vpop.xlane.xlu0 %2955
    %v2957 = vsel %vm1174, %v2949, 0.0
    %2958 = vadd.xlane.f32.xlu0 %v2957
    %v2959 = vpop.xlane.xlu0 %2958
    %v2960 = vsel %vm1174, %v2951, 0.0
    %2961 = vadd.xlane.f32.xlu0 %v2960
    %v2962 = vpop.xlane.xlu0 %2961
    %v2963 = vsel %vm1174, %v2953, 0.0
    %2964 = vadd.xlane.f32.xlu0 %v2963
    %v2965 = vpop.xlane.xlu0 %2964
    %v2966 = vrcp.pop %v2956
    %v2967 = vrcp.pop %v2959
    %v2968 = vrcp.pop %v2962
    %v2969 = vrcp.pop %v2965
    %v2970 = vmul.f32 %v2947, %v2966
    %v2971 = vmul.f32 %v2949, %v2967
    %v2972 = vmul.f32 %v2951, %v2968
    %v2973 = vmul.f32 %v2953, %v2969
    %v2974 = vpack.c.bf16 %v2971, %v2970
    %v2975 = vpack.c.bf16 %v2973, %v2972
    %2976 = vrot.lane.b32.xlu0 %v1073, 68
    %v2977 = vpop.permute.xlu0 %2976
    %v2979 = vsel %vm1174, %v2974, 0
    %v2982 = vsel %vm1227, %v2977, 0
    %2984 = vmatprep.subr.bf16.mxu0 0
    %2985 = vmatpush1.bf16.msra.mxu0 %v2982
    %2986 = vmatprep.subr.bf16.mxu0 0
    %2987 = vmatpush1.bf16.msra.mxu0 0
    %2988 = vmatprep.subr.bf16.mxu0 0
    %2989 = vmatpush1.bf16.msra.mxu0 0
    %2990 = vmatprep.subr.bf16.mxu0 0
    %2991 = vmatpush1.bf16.msra.mxu0 0
    %2992 = vmatprep.subr.bf16.mxu0 0
    %2993 = vmatpush1.bf16.msra.mxu0 0
    %2994 = vmatprep.subr.bf16.mxu0 0
    %2995 = vmatpush1.bf16.msra.mxu0 0
    %2996 = vmatprep.subr.bf16.mxu0 0
    %2997 = vmatpush1.bf16.msra.mxu0 0
    %2998 = vmatprep.subr.bf16.mxu0 0
    %2999 = vmatpush1.bf16.msra.mxu0 0
    %3000 = vmatprep.subr.bf16.mxu0 0
    %3001 = vmatpush1.bf16.msra.mxu0 0
    %3002 = vmatprep.subr.bf16.mxu0 0
    %3003 = vmatpush1.bf16.msra.mxu0 0
    %3004 = vmatprep.subr.bf16.mxu0 0
    %3005 = vmatpush1.bf16.msra.mxu0 0
    %3006 = vmatprep.subr.bf16.mxu0 0
    %3007 = vmatpush1.bf16.msra.mxu0 0
    %3008 = vmatprep.subr.bf16.mxu0 0
    %3009 = vmatpush1.bf16.msra.mxu0 0
    %3010 = vmatprep.subr.bf16.mxu0 0
    %3011 = vmatpush1.bf16.msra.mxu0 0
    %3012 = vmatprep.subr.bf16.mxu0 0
    %3013 = vmatpush1.bf16.msra.mxu0 0
    %3014 = vmatprep.subr.bf16.mxu0 0
    %3015 = vmatpush1.bf16.msra.mxu0 0
    %3016 = vmatprep.mubr.bf16.mxu0 0
    %3017 = vmatmul.mubr.bf16.gmra.mrb[0].mxu0 %v2979
    %v3018 = vpop.f32.mrb[0].mxu0
    %v3019 = vadd.f32 0.0, %v3018
    %v3020 = vpop.f32.mrb[0].mxu0
    %v3021 = vpop.f32.mrb[0].mxu0
    %v3022 = vadd.f32 0.0, %v3021
    %v3023 = vpop.f32.mrb[0].mxu0
    %3024 = vdwg.mxu0
    %3025 = vrot.lane.b32.xlu0 %v1074, 68
    %v3026 = vpop.permute.xlu0 %3025
    %v3028 = vsel %vm1174, %v2975, 0
    %v3031 = vsel %vm1227, %v3026, 0
    %3033 = vmatprep.subr.bf16.mxu0 0
    %3034 = vmatpush1.bf16.msra.mxu0 %v3031
    %3035 = vmatprep.subr.bf16.mxu0 0
    %3036 = vmatpush1.bf16.msra.mxu0 0
    %3037 = vmatprep.subr.bf16.mxu0 0
    %3038 = vmatpush1.bf16.msra.mxu0 0
    %3039 = vmatprep.subr.bf16.mxu0 0
    %3040 = vmatpush1.bf16.msra.mxu0 0
    %3041 = vmatprep.subr.bf16.mxu0 0
    %3042 = vmatpush1.bf16.msra.mxu0 0
    %3043 = vmatprep.subr.bf16.mxu0 0
    %3044 = vmatpush1.bf16.msra.mxu0 0
    %3045 = vmatprep.subr.bf16.mxu0 0
    %3046 = vmatpush1.bf16.msra.mxu0 0
    %3047 = vmatprep.subr.bf16.mxu0 0
    %3048 = vmatpush1.bf16.msra.mxu0 0
    %3049 = vmatprep.subr.bf16.mxu0 0
    %3050 = vmatpush1.bf16.msra.mxu0 0
    %3051 = vmatprep.subr.bf16.mxu0 0
    %3052 = vmatpush1.bf16.msra.mxu0 0
    %3053 = vmatprep.subr.bf16.mxu0 0
    %3054 = vmatpush1.bf16.msra.mxu0 0
    %3055 = vmatprep.subr.bf16.mxu0 0
    %3056 = vmatpush1.bf16.msra.mxu0 0
    %3057 = vmatprep.subr.bf16.mxu0 0
    %3058 = vmatpush1.bf16.msra.mxu0 0
    %3059 = vmatprep.subr.bf16.mxu0 0
    %3060 = vmatpush1.bf16.msra.mxu0 0
    %3061 = vmatprep.subr.bf16.mxu0 0
    %3062 = vmatpush1.bf16.msra.mxu0 0
    %3063 = vmatprep.subr.bf16.mxu0 0
    %3064 = vmatpush1.bf16.msra.mxu0 0
    %3065 = vmatprep.mubr.bf16.mxu0 0
    %3066 = vmatmul.mubr.bf16.gmra.mrb[0].mxu0 %v3028
    %v3067 = vpop.f32.mrb[0].mxu0
    %v3068 = vadd.f32 0.0, %v3067
    %v3069 = vpop.f32.mrb[0].mxu0
    %v3070 = vpop.f32.mrb[0].mxu0
    %v3071 = vadd.f32 0.0, %v3070
    %v3072 = vpop.f32.mrb[0].mxu0
    %3073 = vdwg.mxu0
    %3078 = vrot.lane.b32.xlu0 %v1519, 4
    %v3079 = vpop.permute.xlu0 %3078
    %3080 = vrot.lane.b32.xlu0 %v1522, 4
    %v3081 = vpop.permute.xlu0 %3080
    %3082 = vrot.lane.b32.xlu0 %v1568, 4
    %v3083 = vpop.permute.xlu0 %3082
    %3084 = vrot.lane.b32.xlu0 %v1571, 4
    %v3085 = vpop.permute.xlu0 %3084
    %3094 = vrot.lane.b32.xlu0 %v1769, 8
    %v3095 = vpop.permute.xlu0 %3094
    %3096 = vrot.lane.b32.xlu0 %v1772, 8
    %v3097 = vpop.permute.xlu0 %3096
    %3098 = vrot.lane.b32.xlu0 %v1818, 8
    %v3099 = vpop.permute.xlu0 %3098
    %3100 = vrot.lane.b32.xlu0 %v1821, 8
    %v3101 = vpop.permute.xlu0 %3100
    %3110 = vrot.lane.b32.xlu0 %v2019, 12
    %v3111 = vpop.permute.xlu0 %3110
    %3112 = vrot.lane.b32.xlu0 %v2022, 12
    %v3113 = vpop.permute.xlu0 %3112
    %3114 = vrot.lane.b32.xlu0 %v2068, 12
    %v3115 = vpop.permute.xlu0 %3114
    %3116 = vrot.lane.b32.xlu0 %v2071, 12
    %v3117 = vpop.permute.xlu0 %3116
    %3126 = vrot.lane.b32.xlu0 %v2269, 16
    %v3127 = vpop.permute.xlu0 %3126
    %3128 = vrot.lane.b32.xlu0 %v2272, 16
    %v3129 = vpop.permute.xlu0 %3128
    %3130 = vrot.lane.b32.xlu0 %v2318, 16
    %v3131 = vpop.permute.xlu0 %3130
    %3132 = vrot.lane.b32.xlu0 %v2321, 16
    %v3133 = vpop.permute.xlu0 %3132
    %3142 = vrot.lane.b32.xlu0 %v2519, 20
    %v3143 = vpop.permute.xlu0 %3142
    %3144 = vrot.lane.b32.xlu0 %v2522, 20
    %v3145 = vpop.permute.xlu0 %3144
    %3146 = vrot.lane.b32.xlu0 %v2568, 20
    %v3147 = vpop.permute.xlu0 %3146
    %3148 = vrot.lane.b32.xlu0 %v2571, 20
    %v3149 = vpop.permute.xlu0 %3148
    %3158 = vrot.lane.b32.xlu0 %v2769, 24
    %v3159 = vpop.permute.xlu0 %3158
    %3160 = vrot.lane.b32.xlu0 %v2772, 24
    %v3161 = vpop.permute.xlu0 %3160
    %3162 = vrot.lane.b32.xlu0 %v2818, 24
    %v3163 = vpop.permute.xlu0 %3162
    %3164 = vrot.lane.b32.xlu0 %v2821, 24
    %v3165 = vpop.permute.xlu0 %3164
    %3174 = vrot.lane.b32.xlu0 %v3019, 28
    %v3175 = vpop.permute.xlu0 %3174
    %3176 = vrot.lane.b32.xlu0 %v3022, 28
    %v3177 = vpop.permute.xlu0 %3176
    %3178 = vrot.lane.b32.xlu0 %v3068, 28
    %v3179 = vpop.permute.xlu0 %3178
    %3180 = vrot.lane.b32.xlu0 %v3071, 28
    %v3181 = vpop.permute.xlu0 %3180
    %v3186 = vsel %vm1075, %v1266, %v3079
    %v3187 = vsel %vm1075, %v1269, %v3081
    %v3188 = vsel %vm1075, %v1316, %v3083
    %v3189 = vsel %vm1075, %v1319, %v3085
    %vm3190 = vcmask 64512
    %v3191 = vsel %vm3190, %v3186, %v3095
    %v3192 = vsel %vm3190, %v3187, %v3097
    %v3193 = vsel %vm3190, %v3188, %v3099
    %v3194 = vsel %vm3190, %v3189, %v3101
    %vm3195 = vcmask 97280
    %v3196 = vsel %vm3195, %v3191, %v3111
    %v3197 = vsel %vm3195, %v3192, %v3113
    %v3198 = vsel %vm3195, %v3193, %v3115
    %v3199 = vsel %vm3195, %v3194, %v3117
    %vm3200 = vcmask 130048
    %v3201 = vsel %vm3200, %v3196, %v3127
    %v3202 = vsel %vm3200, %v3197, %v3129
    %v3203 = vsel %vm3200, %v3198, %v3131
    %v3204 = vsel %vm3200, %v3199, %v3133
    %vm3205 = vcmask 162816
    %v3206 = vsel %vm3205, %v3201, %v3143
    %v3207 = vsel %vm3205, %v3202, %v3145
    %v3208 = vsel %vm3205, %v3203, %v3147
    %v3209 = vsel %vm3205, %v3204, %v3149
    %vm3210 = vcmask 195584
    %v3211 = vsel %vm3210, %v3206, %v3159
    %v3212 = vsel %vm3210, %v3207, %v3161
    %v3213 = vsel %vm3210, %v3208, %v3163
    %v3214 = vsel %vm3210, %v3209, %v3165
    %vm3215 = vcmask 228352
    %v3216 = vsel %vm3215, %v3211, %v3175
    %v3217 = vsel %vm3215, %v3212, %v3177
    %v3218 = vsel %vm3215, %v3213, %v3179
    %v3219 = vsel %vm3215, %v3214, %v3181
    %v3220 = vpack.c.bf16 %v3217, %v3216
    %v3221 = vpack.c.bf16 %v3219, %v3218
    %v3222 = vld [vmem:[#allocation23] sm:$0xf]
    %v3223 = vld [vmem:[#allocation23 + $0x4] sm:$0xf]
    %v3224 = vld [vmem:[#allocation23 + $0x8] sm:$0xf]
    %v3225 = vld [vmem:[#allocation23 + $0xc] sm:$0xf]
    %v3226 = vld [vmem:[#allocation25] sm:$0x1]
    %v3228 = vlaneseq
    %v3229 = vshrl.u32 %v3228, 7
    %v3230 = vsub.s32 0, %v3229
    %v3231 = vrot.slane %v3226, %v3230
    %v3237 = vunpack.c.l.b16 %v3222
    %v3238 = vunpack.c.l.b16 %v3223
    %v3239 = vunpack.c.l.b16 %v3224
    %v3240 = vunpack.c.l.b16 %v3225
    %v3241 = vpack.c.b16 %v3238, %v3237
    %v3242 = vpack.c.b16 %v3240, %v3239
    %v3246 = vsel %vm414, %v3220, 0
    %v3249 = vsel %vm414, %v3221, 0
    %3251 = vmatprep.subr.bf16.mxu0 0
    %3252 = vmatpush1.bf16.msra.mxu0 %v3241
    %3253 = vmatprep.subr.bf16.mxu0 0
    %3254 = vmatpush1.bf16.msra.mxu0 %v3242
    %3255 = vmatprep.subr.bf16.mxu0 0
    %3256 = vmatpush1.bf16.msra.mxu0 0
    %3257 = vmatprep.subr.bf16.mxu0 0
    %3258 = vmatpush1.bf16.msra.mxu0 0
    %3259 = vmatprep.subr.bf16.mxu0 0
    %3260 = vmatpush1.bf16.msra.mxu0 0
    %3261 = vmatprep.subr.bf16.mxu0 0
    %3262 = vmatpush1.bf16.msra.mxu0 0
    %3263 = vmatprep.subr.bf16.mxu0 0
    %3264 = vmatpush1.bf16.msra.mxu0 0
    %3265 = vmatprep.subr.bf16.mxu0 0
    %3266 = vmatpush1.bf16.msra.mxu0 0
    %3267 = vmatprep.subr.bf16.mxu0 0
    %3268 = vmatpush1.bf16.msra.mxu0 0
    %3269 = vmatprep.subr.bf16.mxu0 0
    %3270 = vmatpush1.bf16.msra.mxu0 0
    %3271 = vmatprep.subr.bf16.mxu0 0
    %3272 = vmatpush1.bf16.msra.mxu0 0
    %3273 = vmatprep.subr.bf16.mxu0 0
    %3274 = vmatpush1.bf16.msra.mxu0 0
    %3275 = vmatprep.subr.bf16.mxu0 0
    %3276 = vmatpush1.bf16.msra.mxu0 0
    %3277 = vmatprep.subr.bf16.mxu0 0
    %3278 = vmatpush1.bf16.msra.mxu0 0
    %3279 = vmatprep.subr.bf16.mxu0 0
    %3280 = vmatpush1.bf16.msra.mxu0 0
    %3281 = vmatprep.subr.bf16.mxu0 0
    %3282 = vmatpush1.bf16.msra.mxu0 0
    %3283 = vmatprep.mubr.bf16.mxu0 0
    %3284 = vmatmul.mubr.bf16.gmra.mrb[0].mxu0 %v3246
    %v3285 = vpop.f32.mrb[0].mxu0
    %v3286 = vadd.f32 %v3231, %v3285
    %v3287 = vpop.f32.mrb[0].mxu0
    %v3288 = vpop.f32.mrb[0].mxu0
    %v3289 = vadd.f32 %v3231, %v3288
    %v3290 = vpop.f32.mrb[0].mxu0
    %3291 = vmatprep.mubr.bf16.mxu0 0
    %3292 = vmatmul.mubr.bf16.gmra.mrb[0].mxu0 %v3249
    %v3293 = vpop.f32.mrb[0].mxu0
    %v3294 = vadd.f32 %v3231, %v3293
    %v3295 = vpop.f32.mrb[0].mxu0
    %v3296 = vpop.f32.mrb[0].mxu0
    %v3297 = vadd.f32 %v3231, %v3296
    %v3298 = vpop.f32.mrb[0].mxu0
    %3299 = vdwg.mxu0
    %v3300 = vpack.c.bf16 %v3289, %v3286
    %v3301 = vpack.c.bf16 %v3297, %v3294
    %v3302 = vld [vmem:[#allocation26] sm:$0xf]
    %v3303 = vld [vmem:[#allocation26 + $0x4] sm:$0xf]
    %v3304 = vld [vmem:[#allocation26 + $0x8] sm:$0xf]
    %v3305 = vld [vmem:[#allocation26 + $0xc] sm:$0xf]
    %v3310 = vunpack.c.l.b16 %v3302
    %v3311 = vunpack.c.l.b16 %v3303
    %v3312 = vunpack.c.l.b16 %v3304
    %v3313 = vunpack.c.l.b16 %v3305
    %v3314 = vpack.c.b16 %v3311, %v3310
    %v3315 = vpack.c.b16 %v3313, %v3312
    %v3319 = vsel %vm414, %v3300, 0
    %v3322 = vsel %vm414, %v3301, 0
    %3324 = vmatprep.subr.bf16.mxu0 0
    %3325 = vmatpush1.bf16.msra.mxu0 %v3314
    %3326 = vmatprep.subr.bf16.mxu0 0
    %3327 = vmatpush1.bf16.msra.mxu0 %v3315
    %3328 = vmatprep.subr.bf16.mxu0 0
    %3329 = vmatpush1.bf16.msra.mxu0 0
    %3330 = vmatprep.subr.bf16.mxu0 0
    %3331 = vmatpush1.bf16.msra.mxu0 0
    %3332 = vmatprep.subr.bf16.mxu0 0
    %3333 = vmatpush1.bf16.msra.mxu0 0
    %3334 = vmatprep.subr.bf16.mxu0 0
    %3335 = vmatpush1.bf16.msra.mxu0 0
    %3336 = vmatprep.subr.bf16.mxu0 0
    %3337 = vmatpush1.bf16.msra.mxu0 0
    %3338 = vmatprep.subr.bf16.mxu0 0
    %3339 = vmatpush1.bf16.msra.mxu0 0
    %3340 = vmatprep.subr.bf16.mxu0 0
    %3341 = vmatpush1.bf16.msra.mxu0 0
    %3342 = vmatprep.subr.bf16.mxu0 0
    %3343 = vmatpush1.bf16.msra.mxu0 0
    %3344 = vmatprep.subr.bf16.mxu0 0
    %3345 = vmatpush1.bf16.msra.mxu0 0
    %3346 = vmatprep.subr.bf16.mxu0 0
    %3347 = vmatpush1.bf16.msra.mxu0 0
    %3348 = vmatprep.subr.bf16.mxu0 0
    %3349 = vmatpush1.bf16.msra.mxu0 0
    %3350 = vmatprep.subr.bf16.mxu0 0
    %3351 = vmatpush1.bf16.msra.mxu0 0
    %3352 = vmatprep.subr.bf16.mxu0 0
    %3353 = vmatpush1.bf16.msra.mxu0 0
    %3354 = vmatprep.subr.bf16.mxu0 0
    %3355 = vmatpush1.bf16.msra.mxu0 0
    %3356 = vmatprep.mubr.bf16.mxu0 0
    %3357 = vmatmul.mubr.bf16.gmra.mrb[0].mxu0 %v3319
    %v3358 = vpop.f32.mrb[0].mxu0
    %v3359 = vadd.f32 0.0, %v3358
    %v3360 = vpop.f32.mrb[0].mxu0
    %v3361 = vpop.f32.mrb[0].mxu0
    %v3362 = vadd.f32 0.0, %v3361
    %v3363 = vpop.f32.mrb[0].mxu0
    %3364 = vmatprep.mubr.bf16.mxu0 0
    %3365 = vmatmul.mubr.bf16.gmra.mrb[0].mxu0 %v3322
    %v3366 = vpop.f32.mrb[0].mxu0
    %v3367 = vadd.f32 0.0, %v3366
    %v3368 = vpop.f32.mrb[0].mxu0
    %v3369 = vpop.f32.mrb[0].mxu0
    %v3370 = vadd.f32 0.0, %v3369
    %v3371 = vpop.f32.mrb[0].mxu0
    %3372 = vdwg.mxu0
    %v3373 = vld [vmem:[#allocation28] sm:$0xff]
    %v3374 = vld [vmem:[#allocation28 + $0x8] sm:$0xff]
    %v3375 = vmul.f32 %v3373, %v3359
    %v3376 = vmul.f32 %v3374, %v3362
    %v3377 = vmul.f32 %v3373, %v3367
    %v3378 = vmul.f32 %v3374, %v3370
    %v3379 = vsel %vm1174, %v3375, 0.0
    %v3380 = vsel %vm1174, %v3376, 0.0
    %v3381 = vadd.f32 %v3379, %v3380
    %v3382 = vrot.slane %v3381, 4
    %v3383 = vadd.f32 %v3381, %v3382
    %v3384 = vrot.slane %v3383, 2
    %v3385 = vadd.f32 %v3383, %v3384
    %v3386 = vrot.slane %v3385, 1
    %v3387 = vadd.f32 %v3385, %v3386
    %v3388 = vsel %vm1174, %v3377, 0.0
    %v3389 = vsel %vm1174, %v3378, 0.0
    %v3390 = vadd.f32 %v3388, %v3389
    %v3391 = vrot.slane %v3390, 4
    %v3392 = vadd.f32 %v3390, %v3391
    %v3393 = vrot.slane %v3392, 2
    %v3394 = vadd.f32 %v3392, %v3393
    %v3395 = vrot.slane %v3394, 1
    %v3396 = vadd.f32 %v3394, %v3395
    %v3397 = vld [vmem:[#allocation29] sm:$0x1]
    %v3399 = vlaneseq
    %v3400 = vshrl.u32 %v3399, 7
    %v3401 = vsub.s32 0, %v3400
    %v3402 = vrot.slane %v3397, %v3401
    %v3404 = vadd.f32 %v3387, %v3402
    %v3405 = vadd.f32 %v3396, %v3402
    %v3408 = vrot.slane %v3405, 7
    %v3409 = vsel %vm611, %v3408, %v3404
    %vm3411 = vcmask 74752
    %3412 = vst.msk [vmem:[#allocation31] sm:$0x3] %vm3411, %v3409
    // Predicated region
    $region146: #{msqnet_forward.7} parent=1 // pred_check
      _
    $region147: #{msqnet_forward.7} parent=1 // pred_check_branch
      %3414 = sbr.rel (0) target = $region149
    $region148: #{msqnet_forward.7} parent=1 // pred_region
      %s3416 = ssub.s32 32, 32
      %3417 = vsyncadd [#allocation4], %s3416
      %s3419 = sshll.u32 [#allocation31], 4
      %s3420 = int_to_ptr.vmem [resolvable:$true] %s3419
      %3422 = dma.vmem_to_hbm [thread:$0]  %s3420, 32, %s18, [#allocation4]
    $region149: #{msqnet_forward.7} parent=1 // pred_fallthru
      _
    // Predicated region
    $region150: #{msqnet_forward.7} parent=1 // pred_check
      _
    $region151: #{msqnet_forward.7} parent=1 // pred_check_branch
      %3424 = sbr.rel (0) target = $region153
    $region152: #{msqnet_forward.7} parent=1 // pred_region
      %3425 = dma.done [#allocation4], 32
    $region153: #{msqnet_forward.7} parent=1 // pred_fallthru
      _
    %3426 = vsyncpa [#allocation3], 1
    %3427 = vsyncpa [#allocation6], 1
    %3428 = vsyncpa [#allocation9], 1
    %3429 = vsyncpa [#allocation12], 1
    %3430 = vsyncpa [#allocation15], 1
    %3431 = vsyncpa [#allocation18], 1
    %3432 = vsyncpa [#allocation21], 1
    %3433 = vsyncpa [#allocation24], 1
    %3434 = vsyncpa [#allocation27], 1
    %3435 = vsyncpa [#allocation30], 1
    %3436 = vsyncpa [#allocation4], 1

</llo_original>
